<compile_context>
chip_gen: v7x
topology: tpu7x:2x2x1
jax: 0.10.0
libtpu: 0.0.40
codegen_flags: <defaults>
</compile_context>

<pallas_src>
import numpy as np
import jax
import jax.numpy as jnp
from jax.experimental import pallas as pl
from jax.experimental.pallas import tpu as pltpu

# ----------------------------- fixed config ---------------------------------
ADDITIONAL_STATE = 2
BETA = 0.5
BIAS_INIT = 0.1
SIGMOID_EXPONENT = 2.0
RANDOM_NOISE = 0.01
CLIP_NEG = True
CLAMP_SCORE = True
CLAMP_HIDDEN = True
# additional_nonlinear == 'relu', farnn == 1, wfa_type == 'forward'


# --------------- fused bidirectional (lane-packed) FSA-RNN kernel ------------
def _fused_bidir_kernel(len_ref, emb_ref, reg_ref, erg_ref, beta_ref,
                        wgs_ref, wgr_ref, bg_ref, h1_ref, h0_ref,
                        wtrans_ref, tr2t_ref, mat_ref, bias_ref,
                        out_ref, lvec_ref, glin_ref):
    Bp = len_ref.shape[0]          # padded batch (multiple of 8)
    SP2 = h0_ref.shape[-1]         # 2 * (S + additional_state)
    R2 = beta_ref.shape[-1]        # 2 * R
    LBp = emb_ref.shape[0]         # L * Bp (time-major rows)
    L = LBp // Bp

    # --- prologue (off the recurrent critical path) --------------------------
    # L-vector for ALL steps / both directions: one (L*Bp, 2D) @ (2D, 2R) dot.
    l_gen = jnp.maximum(
        jnp.dot(emb_ref[...], erg_ref[...], preferred_element_type=jnp.float32),
        0.0)
    beta = beta_ref[...]                                   # (1, 2R)
    lvec_all = reg_ref[...] * beta + l_gen * (1.0 - beta)  # (L*Bp, 2R)
    lvec_ref[...] = lvec_all
    # gate contribution of the L-vector, also hoisted out of the recurrence:
    # one (L*Bp, 2R) @ (2R, 4SP) dot instead of L tiny per-step dots.
    glin_ref[...] = (jnp.dot(lvec_all, wgr_ref[...],
                             preferred_element_type=jnp.float32)
                     + bg_ref[...])                        # (L*Bp, 4SP)

    # --- loop invariants hoisted once (JAX does not CSE broadcast_in_dim) ----
    hidden0 = jnp.broadcast_to(h0_ref[...], (Bp, SP2))
    h1_b = jnp.broadcast_to(h1_ref[...], (Bp, SP2))
    wgs = wgs_ref[...]          # (2SP, 4SP)  [zt cols | rt cols], block-diag
    wtrans = wtrans_ref[...]    # (2SP, 2R+2SP) [trans_r_1 | wildcard], block-diag
    tr2t = tr2t_ref[...]        # (2R, 2SP)   blockdiag(trans_r_2_f^T, trans_r_2_b^T)
    lens = len_ref[...]         # (Bp, 1) int32

    def step(t, carry):
        hidden, last_h = carry
        row = pl.multiple_of(t * Bp, 8)                    # 8-aligned view
        l_vec = lvec_ref[pl.ds(row, Bp), :]                # (Bp, 2R)
        g_lin = glin_ref[pl.ds(row, Bp), :]                # (Bp, 4SP)
        # fused GRU gates for both directions: [zt_f|zt_b|rt_f|rt_b]
        gates = jax.nn.sigmoid(
            (jnp.dot(hidden, wgs, preferred_element_type=jnp.float32) + g_lin)
            * SIGMOID_EXPONENT)
        zt = gates[:, :SP2]
        rt = gates[:, SP2:]
        hidden_bar = (1.0 - rt) * h1_b + rt * hidden
        # fused transition: r_vec | hidden_wildcard in one (Bp, 2R+2SP) result
        tout = jnp.dot(hidden_bar, wtrans, preferred_element_type=jnp.float32)
        r_vec = tout[:, :R2]
        h_wild = tout[:, R2:]
        cand = jnp.dot(l_vec * r_vec, tr2t,
                       preferred_element_type=jnp.float32) + h_wild
        if CLIP_NEG:
            cand = jnp.maximum(cand, 0.0)
        hidden_new = (1.0 - zt) * hidden + zt * cand
        # capture hidden at t == lengths-1 (per example); padded rows never hit.
        last_h = jnp.where(lens == (t + 1), hidden_new, last_h)
        return hidden_new, last_h

    _, last_h = jax.lax.fori_loop(0, L, step, (hidden0, hidden0), unroll=True)

    # --- fused epilogue: clamp_hidden + both heads + average + clamp_score ---
    if CLAMP_HIDDEN:
        last_h = jnp.clip(last_h, 0.0, 1.0)
    scores = (jnp.dot(last_h, mat_ref[...], preferred_element_type=jnp.float32)
              + bias_ref[...])                 # mat pre-scaled by 0.5, bias pre-summed
    if CLAMP_SCORE:
        scores = jnp.clip(scores, 0.0, 1.0)
    out_ref[...] = scores


def fused_bidirection_pallas(lengths_p, emb, reg, fp):
    """lengths_p: (Bp,1) int32; emb: (L*Bp, 2D); reg: (L*Bp, 2R) (time-major,
    both directions lane-packed). Returns (Bp, C) final scores."""
    LBp, D2 = emb.shape
    R2 = reg.shape[-1]
    Bp = lengths_p.shape[0]
    SP2 = fp["h0"].shape[-1]
    C = fp["mat"].shape[-1]

    def full(shape):
        return pl.BlockSpec(shape, lambda i: (0, 0))

    grid_spec = pltpu.PrefetchScalarGridSpec(
        num_scalar_prefetch=0,
        grid=(1,),
        in_specs=[
            full((Bp, 1)),            # lengths (padded)
            full((LBp, D2)),          # word emb, time-major, [fwd | bwd]
            full((LBp, R2)),          # regex emb, time-major, [fwd | bwd]
            full((D2, R2)),           # blockdiag(embed_r_generalized)
            full((1, R2)),            # [beta_f | beta_b]
            full((SP2, 2 * SP2)),     # [bd(Wss1) | bd(Wss2)]
            full((R2, 2 * SP2)),      # [bd(Wrs1) | bd(Wrs2)]
            full((1, 2 * SP2)),       # [bs1_f|bs1_b|bs2_f|bs2_b]
            full((1, SP2)),           # [h1_f | h1_b]
            full((1, SP2)),           # [h0_f | h0_b]
            full((SP2, R2 + SP2)),    # [bd(trans_r_1) | bd(trans_wildcard)]
            full((R2, SP2)),          # bd(trans_r_2^T)
            full((SP2, C)),           # 0.5 * [mat_f ; mat_b]
            full((1, C)),             # 0.5 * (bias_f + bias_b)
        ],
        out_specs=pl.BlockSpec((Bp, C), lambda i: (0, 0)),
        scratch_shapes=[pltpu.VMEM((LBp, R2), jnp.float32),        # lvec
                        pltpu.VMEM((LBp, 2 * SP2), jnp.float32)],  # gate_lin
    )
    return pl.pallas_call(
        _fused_bidir_kernel,
        out_shape=jax.ShapeDtypeStruct((Bp, C), jnp.float32),
        grid_spec=grid_spec,
        compiler_params=pltpu.CompilerParams(
            dimension_semantics=("arbitrary",)),
    )(lengths_p, emb, reg, fp["erg"], fp["beta"], fp["wgs"], fp["wgr"],
      fp["bg"], fp["h1"], fp["h0"], fp["wtrans"], fp["tr2t"], fp["mat"],
      fp["bias"])


# ---------------------------- parameter setup --------------------------------
def make_direction_params(key, V, D, R, S, AS, C):
    SP = S + AS
    keys = jax.random.split(key, 12)
    pretrained_embed = jax.random.normal(keys[0], (V, D), jnp.float32)
    D1 = jax.random.normal(keys[1], (S, R), jnp.float32)
    D2 = jax.random.normal(keys[2], (S, R), jnp.float32)
    V_embed = jax.random.normal(keys[3], (V, R), jnp.float32)
    wildcard_mat = jax.random.normal(keys[4], (S, S), jnp.float32)
    mat = jax.random.normal(keys[5], (S, C), jnp.float32)
    bias = jax.random.normal(keys[6], (C,), jnp.float32)
    h1 = jax.random.normal(keys[7], (SP,), jnp.float32)

    trans_r_1 = jnp.concatenate(
        [D1, jax.random.normal(keys[8], (AS, R), jnp.float32) * RANDOM_NOISE], axis=0)
    trans_r_2 = jnp.concatenate(
        [D2, jax.random.normal(keys[9], (AS, R), jnp.float32) * RANDOM_NOISE], axis=0)
    wild = jax.random.normal(keys[10], (SP, SP), jnp.float32) * RANDOM_NOISE
    wild = wild.at[:S, :S].set(wildcard_mat)

    # embed_r_generalized = pinv(embedding) @ V_embed   (init-time glue)
    pinv = jnp.asarray(np.linalg.pinv(np.asarray(pretrained_embed)), jnp.float32)
    embed_r_generalized = pinv @ V_embed     # (D, R)

    gkeys = jax.random.split(keys[11], 5)
    Wss1 = jax.random.normal(gkeys[0], (SP, SP), jnp.float32)
    Wrs1 = jax.random.normal(gkeys[1], (R, SP), jnp.float32)
    Wss2 = jax.random.normal(gkeys[2], (SP, SP), jnp.float32)
    Wrs2 = jax.random.normal(gkeys[3], (R, SP), jnp.float32)
    bs1 = jnp.ones((1, SP), jnp.float32) * BIAS_INIT
    bs2 = jnp.ones((1, SP), jnp.float32) * BIAS_INIT
    h0 = jnp.zeros((SP,), jnp.float32).at[0].set(1.0)
    beta_vec = jnp.full((R,), BETA, jnp.float32)

    mat_full = jnp.concatenate(
        [mat, jax.random.normal(gkeys[4], (AS, C), jnp.float32) * RANDOM_NOISE], axis=0)

    return dict(
        pretrained_embed=pretrained_embed,
        embed_r=V_embed,
        embed_r_generalized=embed_r_generalized,
        beta_vec=beta_vec.reshape(1, R),
        Wss1=Wss1, Wrs1=Wrs1, bs1=bs1,
        Wss2=Wss2, Wrs2=Wrs2, bs2=bs2,
        h0=h0.reshape(1, SP), h1=h1.reshape(1, SP),
        trans_r_1=trans_r_1, trans_r_2=trans_r_2,
        trans_wildcard=wild,
        mat=mat_full, bias=bias.reshape(1, C),
    )


def _blockdiag(a, b):
    za = jnp.zeros((a.shape[0], b.shape[1]), jnp.float32)
    zb = jnp.zeros((b.shape[0], a.shape[1]), jnp.float32)
    top = jnp.concatenate([a, za], axis=1)
    bot = jnp.concatenate([zb, b], axis=1)
    return jnp.concatenate([top, bot], axis=0)


def prepare_fused_params(pf, pb):
    """Init-time fusion (done once, outside the hot path):
    lane-pack both directions with block-diagonal weights, concatenate the
    GRU-gate / transition weights, pre-scale the scoring head by 0.5."""
    return dict(
        erg=_blockdiag(pf["embed_r_generalized"], pb["embed_r_generalized"]),
        beta=jnp.concatenate([pf["beta_vec"], pb["beta_vec"]], axis=1),
        wgs=jnp.concatenate([_blockdiag(pf["Wss1"], pb["Wss1"]),
                             _blockdiag(pf["Wss2"], pb["Wss2"])], axis=1),
        wgr=jnp.concatenate([_blockdiag(pf["Wrs1"], pb["Wrs1"]),
                             _blockdiag(pf["Wrs2"], pb["Wrs2"])], axis=1),
        bg=jnp.concatenate([pf["bs1"], pb["bs1"], pf["bs2"], pb["bs2"]], axis=1),
        h1=jnp.concatenate([pf["h1"], pb["h1"]], axis=1),
        h0=jnp.concatenate([pf["h0"], pb["h0"]], axis=1),
        wtrans=jnp.concatenate(
            [_blockdiag(pf["trans_r_1"], pb["trans_r_1"]),
             _blockdiag(pf["trans_wildcard"], pb["trans_wildcard"])], axis=1),
        tr2t=_blockdiag(pf["trans_r_2"].T, pb["trans_r_2"].T),
        mat=0.5 * jnp.concatenate([pf["mat"], pb["mat"]], axis=0),
        bias=0.5 * (pf["bias"] + pb["bias"]),
    )


# ------------------------------ full forward ---------------------------------
def bidirection_forward_pallas(input_f, input_b, lengths, pf, pb, fp):
    B, L = input_f.shape
    Bp = ((B + 7) // 8) * 8            # pad batch to a full sublane tile

    # Embedding lookups (gather) are glue in plain JAX; pack both directions
    # along the lane axis and go time-major with the padded batch so every
    # per-step scratch slice inside the kernel is 8-aligned.
    def pack_tm(table_key):
        xf = pf[table_key][input_f]    # (B, L, X)
        xb = pb[table_key][input_b]    # (B, L, X)
        x = jnp.concatenate([xf, xb], axis=-1)            # (B, L, 2X)
        x = jnp.swapaxes(x, 0, 1)                         # (L, B, 2X)
        x = jnp.pad(x, ((0, 0), (0, Bp - B), (0, 0)))     # (L, Bp, 2X)
        return x.reshape(L * Bp, x.shape[-1])

    emb = pack_tm("pretrained_embed")                     # (L*Bp, 2D)
    reg = pack_tm("embed_r")                              # (L*Bp, 2R)
    lens_p = jnp.pad(lengths.astype(jnp.int32), (0, Bp - B)).reshape(Bp, 1)

    scores = fused_bidirection_pallas(lens_p, emb, reg, fp)   # (Bp, C)
    return scores[:B]


# ------------------------------ pure-JAX reference ---------------------------
def _fsa_rnn_ref(input_ids, p):
    all_emb = p["pretrained_embed"][input_ids]    # (B, L, D)
    all_regex = p["embed_r"][input_ids]           # (B, L, R)
    B = input_ids.shape[0]
    SP = p["trans_wildcard"].shape[0]
    hidden0 = jnp.broadcast_to(p["h0"], (B, SP))
    h1 = jnp.broadcast_to(p["h1"], (B, SP))
    beta = p["beta_vec"]

    def step(hidden, xs):
        emb, l_regex = xs
        l_gen = jax.nn.relu(emb @ p["embed_r_generalized"])
        l_vec = l_regex * beta + l_gen * (1 - beta)
        zt = jax.nn.sigmoid((hidden @ p["Wss1"] + l_vec @ p["Wrs1"] + p["bs1"]) * SIGMOID_EXPONENT)
        rt = jax.nn.sigmoid((hidden @ p["Wss2"] + l_vec @ p["Wrs2"] + p["bs2"]) * SIGMOID_EXPONENT)
        hidden_bar = (1.0 - rt) * h1 + rt * hidden
        r_vec = hidden_bar @ p["trans_r_1"]
        lr = l_vec * r_vec
        cand = lr @ p["trans_r_2"].T + hidden_bar @ p["trans_wildcard"]
        cand = jax.nn.relu(cand)
        hidden_new = (1.0 - zt) * hidden + zt * cand
        return hidden_new, hidden_new

    _, hs = jax.lax.scan(step, hidden0,
                         (jnp.swapaxes(all_emb, 0, 1), jnp.swapaxes(all_regex, 0, 1)))
    return hs   # (L, B, SP)


def bidirection_forward_ref(input_f, input_b, lengths, pf, pb):
    out_f = _fsa_rnn_ref(input_f, pf)
    out_b = _fsa_rnn_ref(input_b, pb)
    B = input_f.shape[0]
    bidx = jnp.arange(B)
    last_f = out_f[lengths - 1, bidx, :]
    last_b = out_b[lengths - 1, bidx, :]
    if CLAMP_HIDDEN:
        last_f = jnp.clip(last_f, 0.0, 1.0)
        last_b = jnp.clip(last_b, 0.0, 1.0)
    sf = last_f @ pf["mat"] + pf["bias"]
    sb = last_b @ pb["mat"] + pb["bias"]
    scores = (sb + sf) * 0.5
    if CLAMP_SCORE:
        scores = jnp.clip(scores, 0.0, 1.0)
    return scores


# ----------------------------------- main ------------------------------------
if __name__ == "__main__":
    key = jax.random.PRNGKey(0)
    V, D, R, S, AS, C = 50, 32, 16, 6, ADDITIONAL_STATE, 5
    B, L = 4, 8

    kf, kb, ki, kl = jax.random.split(key, 4)
    pf = make_direction_params(kf, V, D, R, S, AS, C)
    pb = make_direction_params(kb, V, D, R, S, AS, C)
    fp = prepare_fused_params(pf, pb)

    input_f = jax.random.randint(ki, (B, L), 0, V)
    input_b = input_f[:, ::-1]                     # reversed sequence for backward WFA
    lengths = jax.random.randint(kl, (B,), 1, L + 1)

    scores = jax.block_until_ready(
        bidirection_forward_pallas(input_f, input_b, lengths, pf, pb, fp))
    ref = np.asarray(bidirection_forward_ref(input_f, input_b, lengths, pf, pb))

    assert scores.shape == (B, C)
    np.testing.assert_allclose(np.asarray(scores), ref, rtol=1e-3, atol=1e-3)
    print("KERNEL_OK")
</pallas_src>

<mosaic_0001>
module attributes {stable_mosaic.version = 11 : i64} {
  func.func @_fused_bidir_kernel(%arg0: i32, %arg1: memref<8x1xi32, #tpu.memory_space<vmem>>, %arg2: memref<64x64xf32, #tpu.memory_space<vmem>>, %arg3: memref<64x32xf32, #tpu.memory_space<vmem>>, %arg4: memref<64x32xf32, #tpu.memory_space<vmem>>, %arg5: memref<1x32xf32, #tpu.memory_space<vmem>>, %arg6: memref<16x32xf32, #tpu.memory_space<vmem>>, %arg7: memref<32x32xf32, #tpu.memory_space<vmem>>, %arg8: memref<1x32xf32, #tpu.memory_space<vmem>>, %arg9: memref<1x16xf32, #tpu.memory_space<vmem>>, %arg10: memref<1x16xf32, #tpu.memory_space<vmem>>, %arg11: memref<16x48xf32, #tpu.memory_space<vmem>>, %arg12: memref<32x16xf32, #tpu.memory_space<vmem>>, %arg13: memref<16x5xf32, #tpu.memory_space<vmem>>, %arg14: memref<1x5xf32, #tpu.memory_space<vmem>>, %arg15: memref<8x5xf32, #tpu.memory_space<vmem>>, %arg16: memref<64x32xf32, #tpu.memory_space<vmem>>, %arg17: memref<64x32xf32, #tpu.memory_space<vmem>>) attributes {dimension_semantics = [#tpu.dimension_semantics<arbitrary>], iteration_bounds = array<i64: 1>, scalar_prefetch = 0 : i64, scratch_operands = 2 : i64, tpu.core_type = #tpu.core_type<tc>, window_params = [{pipeline_mode = #tpu.pipeline_mode<synchronous>, transform_indices = @transform_0, window_bounds = array<i64: 8, 1>}, {pipeline_mode = #tpu.pipeline_mode<synchronous>, transform_indices = @transform_1, window_bounds = array<i64: 64, 64>}, {pipeline_mode = #tpu.pipeline_mode<synchronous>, transform_indices = @transform_2, window_bounds = array<i64: 64, 32>}, {pipeline_mode = #tpu.pipeline_mode<synchronous>, transform_indices = @transform_3, window_bounds = array<i64: 64, 32>}, {pipeline_mode = #tpu.pipeline_mode<synchronous>, transform_indices = @transform_4, window_bounds = array<i64: 1, 32>}, {pipeline_mode = #tpu.pipeline_mode<synchronous>, transform_indices = @transform_5, window_bounds = array<i64: 16, 32>}, {pipeline_mode = #tpu.pipeline_mode<synchronous>, transform_indices = @transform_6, window_bounds = array<i64: 32, 32>}, {pipeline_mode = #tpu.pipeline_mode<synchronous>, transform_indices = @transform_7, window_bounds = array<i64: 1, 32>}, {pipeline_mode = #tpu.pipeline_mode<synchronous>, transform_indices = @transform_8, window_bounds = array<i64: 1, 16>}, {pipeline_mode = #tpu.pipeline_mode<synchronous>, transform_indices = @transform_9, window_bounds = array<i64: 1, 16>}, {pipeline_mode = #tpu.pipeline_mode<synchronous>, transform_indices = @transform_10, window_bounds = array<i64: 16, 48>}, {pipeline_mode = #tpu.pipeline_mode<synchronous>, transform_indices = @transform_11, window_bounds = array<i64: 32, 16>}, {pipeline_mode = #tpu.pipeline_mode<synchronous>, transform_indices = @transform_12, window_bounds = array<i64: 16, 5>}, {pipeline_mode = #tpu.pipeline_mode<synchronous>, transform_indices = @transform_13, window_bounds = array<i64: 1, 5>}, {pipeline_mode = #tpu.pipeline_mode<synchronous>, transform_indices = @transform_14, window_bounds = array<i64: 8, 5>}]} {
    %c0 = arith.constant 0 : index
    %c0_0 = arith.constant 0 : index
    %0 = vector.load %arg2[%c0, %c0_0] : memref<64x64xf32, #tpu.memory_space<vmem>>, vector<64x64xf32>
    %c0_1 = arith.constant 0 : index
    %c0_2 = arith.constant 0 : index
    %1 = vector.load %arg4[%c0_1, %c0_2] : memref<64x32xf32, #tpu.memory_space<vmem>>, vector<64x32xf32>
    %cst = arith.constant dense<0.000000e+00> : vector<64x32xf32>
    %2 = tpu.matmul %0, %1, %cst {dimension_numbers = #tpu.dot_dimension_numbers<[1], [0], [0], [1], [0, 0, 1, 1], [], []>} : vector<64x64xf32>, vector<64x32xf32>, vector<64x32xf32> -> vector<64x32xf32>
    %cst_3 = arith.constant 0.000000e+00 : f32
    %3 = vector.broadcast %cst_3 : f32 to vector<64x32xf32>
    %4 = arith.maximumf %2, %3 : vector<64x32xf32>
    %c0_4 = arith.constant 0 : index
    %c0_5 = arith.constant 0 : index
    %5 = vector.load %arg5[%c0_4, %c0_5] : memref<1x32xf32, #tpu.memory_space<vmem>>, vector<1x32xf32>
    %c0_6 = arith.constant 0 : index
    %c0_7 = arith.constant 0 : index
    %6 = vector.load %arg3[%c0_6, %c0_7] : memref<64x32xf32, #tpu.memory_space<vmem>>, vector<64x32xf32>
    %7 = vector.broadcast %5 : vector<1x32xf32> to vector<64x32xf32>
    %8 = arith.mulf %6, %7 : vector<64x32xf32>
    %cst_8 = arith.constant 1.000000e+00 : f32
    %9 = vector.broadcast %cst_8 : f32 to vector<1x32xf32>
    %10 = arith.subf %9, %5 : vector<1x32xf32>
    %11 = vector.broadcast %10 : vector<1x32xf32> to vector<64x32xf32>
    %12 = arith.mulf %4, %11 : vector<64x32xf32>
    %13 = arith.addf %8, %12 : vector<64x32xf32>
    %c0_9 = arith.constant 0 : index
    %c0_10 = arith.constant 0 : index
    %14 = vector.load %arg16[%c0_9, %c0_10] : memref<64x32xf32, #tpu.memory_space<vmem>>, vector<64x32xf32>
    tpu.vector_store %arg16[%c0_9, %c0_10], %13 {strides = array<i32>} : memref<64x32xf32, #tpu.memory_space<vmem>>, vector<64x32xf32>,
    %c0_11 = arith.constant 0 : index
    %c0_12 = arith.constant 0 : index
    %15 = vector.load %arg7[%c0_11, %c0_12] : memref<32x32xf32, #tpu.memory_space<vmem>>, vector<32x32xf32>
    %cst_13 = arith.constant dense<0.000000e+00> : vector<64x32xf32>
    %16 = tpu.matmul %13, %15, %cst_13 {dimension_numbers = #tpu.dot_dimension_numbers<[1], [0], [0], [1], [0, 0, 1, 1], [], []>} : vector<64x32xf32>, vector<32x32xf32>, vector<64x32xf32> -> vector<64x32xf32>
    %c0_14 = arith.constant 0 : index
    %c0_15 = arith.constant 0 : index
    %17 = vector.load %arg8[%c0_14, %c0_15] : memref<1x32xf32, #tpu.memory_space<vmem>>, vector<1x32xf32>
    %18 = vector.broadcast %17 : vector<1x32xf32> to vector<64x32xf32>
    %19 = arith.addf %16, %18 : vector<64x32xf32>
    %c0_16 = arith.constant 0 : index
    %c0_17 = arith.constant 0 : index
    %20 = vector.load %arg17[%c0_16, %c0_17] : memref<64x32xf32, #tpu.memory_space<vmem>>, vector<64x32xf32>
    tpu.vector_store %arg17[%c0_16, %c0_17], %19 {strides = array<i32>} : memref<64x32xf32, #tpu.memory_space<vmem>>, vector<64x32xf32>,
    %c0_18 = arith.constant 0 : index
    %c0_19 = arith.constant 0 : index
    %21 = vector.load %arg10[%c0_18, %c0_19] : memref<1x16xf32, #tpu.memory_space<vmem>>, vector<1x16xf32>
    %22 = vector.shape_cast %21 : vector<1x16xf32> to vector<1x16xf32>
    %23 = vector.broadcast %22 : vector<1x16xf32> to vector<8x16xf32>
    %c0_20 = arith.constant 0 : index
    %c0_21 = arith.constant 0 : index
    %24 = vector.load %arg9[%c0_20, %c0_21] : memref<1x16xf32, #tpu.memory_space<vmem>>, vector<1x16xf32>
    %25 = vector.shape_cast %24 : vector<1x16xf32> to vector<1x16xf32>
    %26 = vector.broadcast %25 : vector<1x16xf32> to vector<8x16xf32>
    %c0_22 = arith.constant 0 : index
    %c0_23 = arith.constant 0 : index
    %27 = vector.load %arg6[%c0_22, %c0_23] : memref<16x32xf32, #tpu.memory_space<vmem>>, vector<16x32xf32>
    %c0_24 = arith.constant 0 : index
    %c0_25 = arith.constant 0 : index
    %28 = vector.load %arg11[%c0_24, %c0_25] : memref<16x48xf32, #tpu.memory_space<vmem>>, vector<16x48xf32>
    %c0_26 = arith.constant 0 : index
    %c0_27 = arith.constant 0 : index
    %29 = vector.load %arg12[%c0_26, %c0_27] : memref<32x16xf32, #tpu.memory_space<vmem>>, vector<32x16xf32>
    %c0_28 = arith.constant 0 : index
    %c0_29 = arith.constant 0 : index
    %30 = vector.load %arg1[%c0_28, %c0_29] : memref<8x1xi32, #tpu.memory_space<vmem>>, vector<8x1xi32>
    %c0_i32 = arith.constant 0 : i32
    %c8_i32 = arith.constant 8 : i32
    %31 = arith.muli %c0_i32, %c8_i32 : i32
    %32 = tpu.assume_multiple %31, 8 : i32
    %33 = arith.index_cast %32 : i32 to index
    %c0_30 = arith.constant 0 : index
    %34 = vector.load %arg16[%33, %c0_30] : memref<64x32xf32, #tpu.memory_space<vmem>>, vector<8x32xf32>
    %35 = arith.index_cast %32 : i32 to index
    %c0_31 = arith.constant 0 : index
    %36 = vector.load %arg17[%35, %c0_31] : memref<64x32xf32, #tpu.memory_space<vmem>>, vector<8x32xf32>
    %cst_32 = arith.constant dense<0.000000e+00> : vector<8x32xf32>
    %37 = tpu.matmul %23, %27, %cst_32 {dimension_numbers = #tpu.dot_dimension_numbers<[1], [0], [0], [1], [0, 0, 1, 1], [], []>} : vector<8x16xf32>, vector<16x32xf32>, vector<8x32xf32> -> vector<8x32xf32>
    %38 = arith.addf %37, %36 : vector<8x32xf32>
    %cst_33 = arith.constant 2.000000e+00 : f32
    %39 = vector.broadcast %cst_33 : f32 to vector<8x32xf32>
    %40 = arith.mulf %38, %39 : vector<8x32xf32>
    %41 = arith.negf %40 : vector<8x32xf32>
    %42 = math.exp %41 : vector<8x32xf32>
    %cst_34 = arith.constant 1.000000e+00 : f32
    %43 = vector.broadcast %cst_34 : f32 to vector<8x32xf32>
    %44 = arith.addf %43, %42 : vector<8x32xf32>
    %45 = arith.divf %43, %44 : vector<8x32xf32>
    %46 = vector.extract_strided_slice %45 {offsets = [0, 0], sizes = [8, 16], strides = [1, 1]} : vector<8x32xf32> to vector<8x16xf32>
    %47 = vector.extract_strided_slice %45 {offsets = [0, 16], sizes = [8, 16], strides = [1, 1]} : vector<8x32xf32> to vector<8x16xf32>
    %cst_35 = arith.constant 1.000000e+00 : f32
    %48 = vector.broadcast %cst_35 : f32 to vector<8x16xf32>
    %49 = arith.subf %48, %47 : vector<8x16xf32>
    %50 = arith.mulf %49, %26 : vector<8x16xf32>
    %51 = arith.mulf %47, %23 : vector<8x16xf32>
    %52 = arith.addf %50, %51 : vector<8x16xf32>
    %cst_36 = arith.constant dense<0.000000e+00> : vector<8x48xf32>
    %53 = tpu.matmul %52, %28, %cst_36 {dimension_numbers = #tpu.dot_dimension_numbers<[1], [0], [0], [1], [0, 0, 1, 1], [], []>} : vector<8x16xf32>, vector<16x48xf32>, vector<8x48xf32> -> vector<8x48xf32>
    %54 = vector.extract_strided_slice %53 {offsets = [0, 0], sizes = [8, 32], strides = [1, 1]} : vector<8x48xf32> to vector<8x32xf32>
    %55 = vector.extract_strided_slice %53 {offsets = [0, 32], sizes = [8, 16], strides = [1, 1]} : vector<8x48xf32> to vector<8x16xf32>
    %56 = arith.mulf %34, %54 : vector<8x32xf32>
    %cst_37 = arith.constant dense<0.000000e+00> : vector<8x16xf32>
    %57 = tpu.matmul %56, %29, %cst_37 {dimension_numbers = #tpu.dot_dimension_numbers<[1], [0], [0], [1], [0, 0, 1, 1], [], []>} : vector<8x32xf32>, vector<32x16xf32>, vector<8x16xf32> -> vector<8x16xf32>
    %58 = arith.addf %57, %55 : vector<8x16xf32>
    %cst_38 = arith.constant 0.000000e+00 : f32
    %59 = vector.broadcast %cst_38 : f32 to vector<8x16xf32>
    %60 = arith.maximumf %58, %59 : vector<8x16xf32>
    %cst_39 = arith.constant 1.000000e+00 : f32
    %61 = vector.broadcast %cst_39 : f32 to vector<8x16xf32>
    %62 = arith.subf %61, %46 : vector<8x16xf32>
    %63 = arith.mulf %62, %23 : vector<8x16xf32>
    %64 = arith.mulf %46, %60 : vector<8x16xf32>
    %65 = arith.addf %63, %64 : vector<8x16xf32>
    %c1_i32 = arith.constant 1 : i32
    %66 = arith.addi %c0_i32, %c1_i32 : i32
    %67 = vector.broadcast %66 : i32 to vector<8x1xi32>
    %68 = arith.cmpi eq, %30, %67 : vector<8x1xi32>
    %69 = vector.shape_cast %68 : vector<8x1xi1> to vector<8x1xi1>
    %70 = vector.broadcast %69 : vector<8x1xi1> to vector<8x16xi1>
    %71 = arith.select %70, %65, %23 : vector<8x16xi1>, vector<8x16xf32>
    %c1_i32_40 = arith.constant 1 : i32
    %c8_i32_41 = arith.constant 8 : i32
    %72 = arith.muli %c1_i32_40, %c8_i32_41 : i32
    %73 = tpu.assume_multiple %72, 8 : i32
    %74 = arith.index_cast %73 : i32 to index
    %c0_42 = arith.constant 0 : index
    %75 = vector.load %arg16[%74, %c0_42] : memref<64x32xf32, #tpu.memory_space<vmem>>, vector<8x32xf32>
    %76 = arith.index_cast %73 : i32 to index
    %c0_43 = arith.constant 0 : index
    %77 = vector.load %arg17[%76, %c0_43] : memref<64x32xf32, #tpu.memory_space<vmem>>, vector<8x32xf32>
    %cst_44 = arith.constant dense<0.000000e+00> : vector<8x32xf32>
    %78 = tpu.matmul %65, %27, %cst_44 {dimension_numbers = #tpu.dot_dimension_numbers<[1], [0], [0], [1], [0, 0, 1, 1], [], []>} : vector<8x16xf32>, vector<16x32xf32>, vector<8x32xf32> -> vector<8x32xf32>
    %79 = arith.addf %78, %77 : vector<8x32xf32>
    %cst_45 = arith.constant 2.000000e+00 : f32
    %80 = vector.broadcast %cst_45 : f32 to vector<8x32xf32>
    %81 = arith.mulf %79, %80 : vector<8x32xf32>
    %82 = arith.negf %81 : vector<8x32xf32>
    %83 = math.exp %82 : vector<8x32xf32>
    %cst_46 = arith.constant 1.000000e+00 : f32
    %84 = vector.broadcast %cst_46 : f32 to vector<8x32xf32>
    %85 = arith.addf %84, %83 : vector<8x32xf32>
    %86 = arith.divf %84, %85 : vector<8x32xf32>
    %87 = vector.extract_strided_slice %86 {offsets = [0, 0], sizes = [8, 16], strides = [1, 1]} : vector<8x32xf32> to vector<8x16xf32>
    %88 = vector.extract_strided_slice %86 {offsets = [0, 16], sizes = [8, 16], strides = [1, 1]} : vector<8x32xf32> to vector<8x16xf32>
    %cst_47 = arith.constant 1.000000e+00 : f32
    %89 = vector.broadcast %cst_47 : f32 to vector<8x16xf32>
    %90 = arith.subf %89, %88 : vector<8x16xf32>
    %91 = arith.mulf %90, %26 : vector<8x16xf32>
    %92 = arith.mulf %88, %65 : vector<8x16xf32>
    %93 = arith.addf %91, %92 : vector<8x16xf32>
    %cst_48 = arith.constant dense<0.000000e+00> : vector<8x48xf32>
    %94 = tpu.matmul %93, %28, %cst_48 {dimension_numbers = #tpu.dot_dimension_numbers<[1], [0], [0], [1], [0, 0, 1, 1], [], []>} : vector<8x16xf32>, vector<16x48xf32>, vector<8x48xf32> -> vector<8x48xf32>
    %95 = vector.extract_strided_slice %94 {offsets = [0, 0], sizes = [8, 32], strides = [1, 1]} : vector<8x48xf32> to vector<8x32xf32>
    %96 = vector.extract_strided_slice %94 {offsets = [0, 32], sizes = [8, 16], strides = [1, 1]} : vector<8x48xf32> to vector<8x16xf32>
    %97 = arith.mulf %75, %95 : vector<8x32xf32>
    %cst_49 = arith.constant dense<0.000000e+00> : vector<8x16xf32>
    %98 = tpu.matmul %97, %29, %cst_49 {dimension_numbers = #tpu.dot_dimension_numbers<[1], [0], [0], [1], [0, 0, 1, 1], [], []>} : vector<8x32xf32>, vector<32x16xf32>, vector<8x16xf32> -> vector<8x16xf32>
    %99 = arith.addf %98, %96 : vector<8x16xf32>
    %cst_50 = arith.constant 0.000000e+00 : f32
    %100 = vector.broadcast %cst_50 : f32 to vector<8x16xf32>
    %101 = arith.maximumf %99, %100 : vector<8x16xf32>
    %cst_51 = arith.constant 1.000000e+00 : f32
    %102 = vector.broadcast %cst_51 : f32 to vector<8x16xf32>
    %103 = arith.subf %102, %87 : vector<8x16xf32>
    %104 = arith.mulf %103, %65 : vector<8x16xf32>
    %105 = arith.mulf %87, %101 : vector<8x16xf32>
    %106 = arith.addf %104, %105 : vector<8x16xf32>
    %c1_i32_52 = arith.constant 1 : i32
    %107 = arith.addi %c1_i32_40, %c1_i32_52 : i32
    %108 = vector.broadcast %107 : i32 to vector<8x1xi32>
    %109 = arith.cmpi eq, %30, %108 : vector<8x1xi32>
    %110 = vector.shape_cast %109 : vector<8x1xi1> to vector<8x1xi1>
    %111 = vector.broadcast %110 : vector<8x1xi1> to vector<8x16xi1>
    %112 = arith.select %111, %106, %71 : vector<8x16xi1>, vector<8x16xf32>
    %c2_i32 = arith.constant 2 : i32
    %c8_i32_53 = arith.constant 8 : i32
    %113 = arith.muli %c2_i32, %c8_i32_53 : i32
    %114 = tpu.assume_multiple %113, 8 : i32
    %115 = arith.index_cast %114 : i32 to index
    %c0_54 = arith.constant 0 : index
    %116 = vector.load %arg16[%115, %c0_54] : memref<64x32xf32, #tpu.memory_space<vmem>>, vector<8x32xf32>
    %117 = arith.index_cast %114 : i32 to index
    %c0_55 = arith.constant 0 : index
    %118 = vector.load %arg17[%117, %c0_55] : memref<64x32xf32, #tpu.memory_space<vmem>>, vector<8x32xf32>
    %cst_56 = arith.constant dense<0.000000e+00> : vector<8x32xf32>
    %119 = tpu.matmul %106, %27, %cst_56 {dimension_numbers = #tpu.dot_dimension_numbers<[1], [0], [0], [1], [0, 0, 1, 1], [], []>} : vector<8x16xf32>, vector<16x32xf32>, vector<8x32xf32> -> vector<8x32xf32>
    %120 = arith.addf %119, %118 : vector<8x32xf32>
    %cst_57 = arith.constant 2.000000e+00 : f32
    %121 = vector.broadcast %cst_57 : f32 to vector<8x32xf32>
    %122 = arith.mulf %120, %121 : vector<8x32xf32>
    %123 = arith.negf %122 : vector<8x32xf32>
    %124 = math.exp %123 : vector<8x32xf32>
    %cst_58 = arith.constant 1.000000e+00 : f32
    %125 = vector.broadcast %cst_58 : f32 to vector<8x32xf32>
    %126 = arith.addf %125, %124 : vector<8x32xf32>
    %127 = arith.divf %125, %126 : vector<8x32xf32>
    %128 = vector.extract_strided_slice %127 {offsets = [0, 0], sizes = [8, 16], strides = [1, 1]} : vector<8x32xf32> to vector<8x16xf32>
    %129 = vector.extract_strided_slice %127 {offsets = [0, 16], sizes = [8, 16], strides = [1, 1]} : vector<8x32xf32> to vector<8x16xf32>
    %cst_59 = arith.constant 1.000000e+00 : f32
    %130 = vector.broadcast %cst_59 : f32 to vector<8x16xf32>
    %131 = arith.subf %130, %129 : vector<8x16xf32>
    %132 = arith.mulf %131, %26 : vector<8x16xf32>
    %133 = arith.mulf %129, %106 : vector<8x16xf32>
    %134 = arith.addf %132, %133 : vector<8x16xf32>
    %cst_60 = arith.constant dense<0.000000e+00> : vector<8x48xf32>
    %135 = tpu.matmul %134, %28, %cst_60 {dimension_numbers = #tpu.dot_dimension_numbers<[1], [0], [0], [1], [0, 0, 1, 1], [], []>} : vector<8x16xf32>, vector<16x48xf32>, vector<8x48xf32> -> vector<8x48xf32>
    %136 = vector.extract_strided_slice %135 {offsets = [0, 0], sizes = [8, 32], strides = [1, 1]} : vector<8x48xf32> to vector<8x32xf32>
    %137 = vector.extract_strided_slice %135 {offsets = [0, 32], sizes = [8, 16], strides = [1, 1]} : vector<8x48xf32> to vector<8x16xf32>
    %138 = arith.mulf %116, %136 : vector<8x32xf32>
    %cst_61 = arith.constant dense<0.000000e+00> : vector<8x16xf32>
    %139 = tpu.matmul %138, %29, %cst_61 {dimension_numbers = #tpu.dot_dimension_numbers<[1], [0], [0], [1], [0, 0, 1, 1], [], []>} : vector<8x32xf32>, vector<32x16xf32>, vector<8x16xf32> -> vector<8x16xf32>
    %140 = arith.addf %139, %137 : vector<8x16xf32>
    %cst_62 = arith.constant 0.000000e+00 : f32
    %141 = vector.broadcast %cst_62 : f32 to vector<8x16xf32>
    %142 = arith.maximumf %140, %141 : vector<8x16xf32>
    %cst_63 = arith.constant 1.000000e+00 : f32
    %143 = vector.broadcast %cst_63 : f32 to vector<8x16xf32>
    %144 = arith.subf %143, %128 : vector<8x16xf32>
    %145 = arith.mulf %144, %106 : vector<8x16xf32>
    %146 = arith.mulf %128, %142 : vector<8x16xf32>
    %147 = arith.addf %145, %146 : vector<8x16xf32>
    %c1_i32_64 = arith.constant 1 : i32
    %148 = arith.addi %c2_i32, %c1_i32_64 : i32
    %149 = vector.broadcast %148 : i32 to vector<8x1xi32>
    %150 = arith.cmpi eq, %30, %149 : vector<8x1xi32>
    %151 = vector.shape_cast %150 : vector<8x1xi1> to vector<8x1xi1>
    %152 = vector.broadcast %151 : vector<8x1xi1> to vector<8x16xi1>
    %153 = arith.select %152, %147, %112 : vector<8x16xi1>, vector<8x16xf32>
    %c3_i32 = arith.constant 3 : i32
    %c8_i32_65 = arith.constant 8 : i32
    %154 = arith.muli %c3_i32, %c8_i32_65 : i32
    %155 = tpu.assume_multiple %154, 8 : i32
    %156 = arith.index_cast %155 : i32 to index
    %c0_66 = arith.constant 0 : index
    %157 = vector.load %arg16[%156, %c0_66] : memref<64x32xf32, #tpu.memory_space<vmem>>, vector<8x32xf32>
    %158 = arith.index_cast %155 : i32 to index
    %c0_67 = arith.constant 0 : index
    %159 = vector.load %arg17[%158, %c0_67] : memref<64x32xf32, #tpu.memory_space<vmem>>, vector<8x32xf32>
    %cst_68 = arith.constant dense<0.000000e+00> : vector<8x32xf32>
    %160 = tpu.matmul %147, %27, %cst_68 {dimension_numbers = #tpu.dot_dimension_numbers<[1], [0], [0], [1], [0, 0, 1, 1], [], []>} : vector<8x16xf32>, vector<16x32xf32>, vector<8x32xf32> -> vector<8x32xf32>
    %161 = arith.addf %160, %159 : vector<8x32xf32>
    %cst_69 = arith.constant 2.000000e+00 : f32
    %162 = vector.broadcast %cst_69 : f32 to vector<8x32xf32>
    %163 = arith.mulf %161, %162 : vector<8x32xf32>
    %164 = arith.negf %163 : vector<8x32xf32>
    %165 = math.exp %164 : vector<8x32xf32>
    %cst_70 = arith.constant 1.000000e+00 : f32
    %166 = vector.broadcast %cst_70 : f32 to vector<8x32xf32>
    %167 = arith.addf %166, %165 : vector<8x32xf32>
    %168 = arith.divf %166, %167 : vector<8x32xf32>
    %169 = vector.extract_strided_slice %168 {offsets = [0, 0], sizes = [8, 16], strides = [1, 1]} : vector<8x32xf32> to vector<8x16xf32>
    %170 = vector.extract_strided_slice %168 {offsets = [0, 16], sizes = [8, 16], strides = [1, 1]} : vector<8x32xf32> to vector<8x16xf32>
    %cst_71 = arith.constant 1.000000e+00 : f32
    %171 = vector.broadcast %cst_71 : f32 to vector<8x16xf32>
    %172 = arith.subf %171, %170 : vector<8x16xf32>
    %173 = arith.mulf %172, %26 : vector<8x16xf32>
    %174 = arith.mulf %170, %147 : vector<8x16xf32>
    %175 = arith.addf %173, %174 : vector<8x16xf32>
    %cst_72 = arith.constant dense<0.000000e+00> : vector<8x48xf32>
    %176 = tpu.matmul %175, %28, %cst_72 {dimension_numbers = #tpu.dot_dimension_numbers<[1], [0], [0], [1], [0, 0, 1, 1], [], []>} : vector<8x16xf32>, vector<16x48xf32>, vector<8x48xf32> -> vector<8x48xf32>
    %177 = vector.extract_strided_slice %176 {offsets = [0, 0], sizes = [8, 32], strides = [1, 1]} : vector<8x48xf32> to vector<8x32xf32>
    %178 = vector.extract_strided_slice %176 {offsets = [0, 32], sizes = [8, 16], strides = [1, 1]} : vector<8x48xf32> to vector<8x16xf32>
    %179 = arith.mulf %157, %177 : vector<8x32xf32>
    %cst_73 = arith.constant dense<0.000000e+00> : vector<8x16xf32>
    %180 = tpu.matmul %179, %29, %cst_73 {dimension_numbers = #tpu.dot_dimension_numbers<[1], [0], [0], [1], [0, 0, 1, 1], [], []>} : vector<8x32xf32>, vector<32x16xf32>, vector<8x16xf32> -> vector<8x16xf32>
    %181 = arith.addf %180, %178 : vector<8x16xf32>
    %cst_74 = arith.constant 0.000000e+00 : f32
    %182 = vector.broadcast %cst_74 : f32 to vector<8x16xf32>
    %183 = arith.maximumf %181, %182 : vector<8x16xf32>
    %cst_75 = arith.constant 1.000000e+00 : f32
    %184 = vector.broadcast %cst_75 : f32 to vector<8x16xf32>
    %185 = arith.subf %184, %169 : vector<8x16xf32>
    %186 = arith.mulf %185, %147 : vector<8x16xf32>
    %187 = arith.mulf %169, %183 : vector<8x16xf32>
    %188 = arith.addf %186, %187 : vector<8x16xf32>
    %c1_i32_76 = arith.constant 1 : i32
    %189 = arith.addi %c3_i32, %c1_i32_76 : i32
    %190 = vector.broadcast %189 : i32 to vector<8x1xi32>
    %191 = arith.cmpi eq, %30, %190 : vector<8x1xi32>
    %192 = vector.shape_cast %191 : vector<8x1xi1> to vector<8x1xi1>
    %193 = vector.broadcast %192 : vector<8x1xi1> to vector<8x16xi1>
    %194 = arith.select %193, %188, %153 : vector<8x16xi1>, vector<8x16xf32>
    %c4_i32 = arith.constant 4 : i32
    %c8_i32_77 = arith.constant 8 : i32
    %195 = arith.muli %c4_i32, %c8_i32_77 : i32
    %196 = tpu.assume_multiple %195, 8 : i32
    %197 = arith.index_cast %196 : i32 to index
    %c0_78 = arith.constant 0 : index
    %198 = vector.load %arg16[%197, %c0_78] : memref<64x32xf32, #tpu.memory_space<vmem>>, vector<8x32xf32>
    %199 = arith.index_cast %196 : i32 to index
    %c0_79 = arith.constant 0 : index
    %200 = vector.load %arg17[%199, %c0_79] : memref<64x32xf32, #tpu.memory_space<vmem>>, vector<8x32xf32>
    %cst_80 = arith.constant dense<0.000000e+00> : vector<8x32xf32>
    %201 = tpu.matmul %188, %27, %cst_80 {dimension_numbers = #tpu.dot_dimension_numbers<[1], [0], [0], [1], [0, 0, 1, 1], [], []>} : vector<8x16xf32>, vector<16x32xf32>, vector<8x32xf32> -> vector<8x32xf32>
    %202 = arith.addf %201, %200 : vector<8x32xf32>
    %cst_81 = arith.constant 2.000000e+00 : f32
    %203 = vector.broadcast %cst_81 : f32 to vector<8x32xf32>
    %204 = arith.mulf %202, %203 : vector<8x32xf32>
    %205 = arith.negf %204 : vector<8x32xf32>
    %206 = math.exp %205 : vector<8x32xf32>
    %cst_82 = arith.constant 1.000000e+00 : f32
    %207 = vector.broadcast %cst_82 : f32 to vector<8x32xf32>
    %208 = arith.addf %207, %206 : vector<8x32xf32>
    %209 = arith.divf %207, %208 : vector<8x32xf32>
    %210 = vector.extract_strided_slice %209 {offsets = [0, 0], sizes = [8, 16], strides = [1, 1]} : vector<8x32xf32> to vector<8x16xf32>
    %211 = vector.extract_strided_slice %209 {offsets = [0, 16], sizes = [8, 16], strides = [1, 1]} : vector<8x32xf32> to vector<8x16xf32>
    %cst_83 = arith.constant 1.000000e+00 : f32
    %212 = vector.broadcast %cst_83 : f32 to vector<8x16xf32>
    %213 = arith.subf %212, %211 : vector<8x16xf32>
    %214 = arith.mulf %213, %26 : vector<8x16xf32>
    %215 = arith.mulf %211, %188 : vector<8x16xf32>
    %216 = arith.addf %214, %215 : vector<8x16xf32>
    %cst_84 = arith.constant dense<0.000000e+00> : vector<8x48xf32>
    %217 = tpu.matmul %216, %28, %cst_84 {dimension_numbers = #tpu.dot_dimension_numbers<[1], [0], [0], [1], [0, 0, 1, 1], [], []>} : vector<8x16xf32>, vector<16x48xf32>, vector<8x48xf32> -> vector<8x48xf32>
    %218 = vector.extract_strided_slice %217 {offsets = [0, 0], sizes = [8, 32], strides = [1, 1]} : vector<8x48xf32> to vector<8x32xf32>
    %219 = vector.extract_strided_slice %217 {offsets = [0, 32], sizes = [8, 16], strides = [1, 1]} : vector<8x48xf32> to vector<8x16xf32>
    %220 = arith.mulf %198, %218 : vector<8x32xf32>
    %cst_85 = arith.constant dense<0.000000e+00> : vector<8x16xf32>
    %221 = tpu.matmul %220, %29, %cst_85 {dimension_numbers = #tpu.dot_dimension_numbers<[1], [0], [0], [1], [0, 0, 1, 1], [], []>} : vector<8x32xf32>, vector<32x16xf32>, vector<8x16xf32> -> vector<8x16xf32>
    %222 = arith.addf %221, %219 : vector<8x16xf32>
    %cst_86 = arith.constant 0.000000e+00 : f32
    %223 = vector.broadcast %cst_86 : f32 to vector<8x16xf32>
    %224 = arith.maximumf %222, %223 : vector<8x16xf32>
    %cst_87 = arith.constant 1.000000e+00 : f32
    %225 = vector.broadcast %cst_87 : f32 to vector<8x16xf32>
    %226 = arith.subf %225, %210 : vector<8x16xf32>
    %227 = arith.mulf %226, %188 : vector<8x16xf32>
    %228 = arith.mulf %210, %224 : vector<8x16xf32>
    %229 = arith.addf %227, %228 : vector<8x16xf32>
    %c1_i32_88 = arith.constant 1 : i32
    %230 = arith.addi %c4_i32, %c1_i32_88 : i32
    %231 = vector.broadcast %230 : i32 to vector<8x1xi32>
    %232 = arith.cmpi eq, %30, %231 : vector<8x1xi32>
    %233 = vector.shape_cast %232 : vector<8x1xi1> to vector<8x1xi1>
    %234 = vector.broadcast %233 : vector<8x1xi1> to vector<8x16xi1>
    %235 = arith.select %234, %229, %194 : vector<8x16xi1>, vector<8x16xf32>
    %c5_i32 = arith.constant 5 : i32
    %c8_i32_89 = arith.constant 8 : i32
    %236 = arith.muli %c5_i32, %c8_i32_89 : i32
    %237 = tpu.assume_multiple %236, 8 : i32
    %238 = arith.index_cast %237 : i32 to index
    %c0_90 = arith.constant 0 : index
    %239 = vector.load %arg16[%238, %c0_90] : memref<64x32xf32, #tpu.memory_space<vmem>>, vector<8x32xf32>
    %240 = arith.index_cast %237 : i32 to index
    %c0_91 = arith.constant 0 : index
    %241 = vector.load %arg17[%240, %c0_91] : memref<64x32xf32, #tpu.memory_space<vmem>>, vector<8x32xf32>
    %cst_92 = arith.constant dense<0.000000e+00> : vector<8x32xf32>
    %242 = tpu.matmul %229, %27, %cst_92 {dimension_numbers = #tpu.dot_dimension_numbers<[1], [0], [0], [1], [0, 0, 1, 1], [], []>} : vector<8x16xf32>, vector<16x32xf32>, vector<8x32xf32> -> vector<8x32xf32>
    %243 = arith.addf %242, %241 : vector<8x32xf32>
    %cst_93 = arith.constant 2.000000e+00 : f32
    %244 = vector.broadcast %cst_93 : f32 to vector<8x32xf32>
    %245 = arith.mulf %243, %244 : vector<8x32xf32>
    %246 = arith.negf %245 : vector<8x32xf32>
    %247 = math.exp %246 : vector<8x32xf32>
    %cst_94 = arith.constant 1.000000e+00 : f32
    %248 = vector.broadcast %cst_94 : f32 to vector<8x32xf32>
    %249 = arith.addf %248, %247 : vector<8x32xf32>
    %250 = arith.divf %248, %249 : vector<8x32xf32>
    %251 = vector.extract_strided_slice %250 {offsets = [0, 0], sizes = [8, 16], strides = [1, 1]} : vector<8x32xf32> to vector<8x16xf32>
    %252 = vector.extract_strided_slice %250 {offsets = [0, 16], sizes = [8, 16], strides = [1, 1]} : vector<8x32xf32> to vector<8x16xf32>
    %cst_95 = arith.constant 1.000000e+00 : f32
    %253 = vector.broadcast %cst_95 : f32 to vector<8x16xf32>
    %254 = arith.subf %253, %252 : vector<8x16xf32>
    %255 = arith.mulf %254, %26 : vector<8x16xf32>
    %256 = arith.mulf %252, %229 : vector<8x16xf32>
    %257 = arith.addf %255, %256 : vector<8x16xf32>
    %cst_96 = arith.constant dense<0.000000e+00> : vector<8x48xf32>
    %258 = tpu.matmul %257, %28, %cst_96 {dimension_numbers = #tpu.dot_dimension_numbers<[1], [0], [0], [1], [0, 0, 1, 1], [], []>} : vector<8x16xf32>, vector<16x48xf32>, vector<8x48xf32> -> vector<8x48xf32>
    %259 = vector.extract_strided_slice %258 {offsets = [0, 0], sizes = [8, 32], strides = [1, 1]} : vector<8x48xf32> to vector<8x32xf32>
    %260 = vector.extract_strided_slice %258 {offsets = [0, 32], sizes = [8, 16], strides = [1, 1]} : vector<8x48xf32> to vector<8x16xf32>
    %261 = arith.mulf %239, %259 : vector<8x32xf32>
    %cst_97 = arith.constant dense<0.000000e+00> : vector<8x16xf32>
    %262 = tpu.matmul %261, %29, %cst_97 {dimension_numbers = #tpu.dot_dimension_numbers<[1], [0], [0], [1], [0, 0, 1, 1], [], []>} : vector<8x32xf32>, vector<32x16xf32>, vector<8x16xf32> -> vector<8x16xf32>
    %263 = arith.addf %262, %260 : vector<8x16xf32>
    %cst_98 = arith.constant 0.000000e+00 : f32
    %264 = vector.broadcast %cst_98 : f32 to vector<8x16xf32>
    %265 = arith.maximumf %263, %264 : vector<8x16xf32>
    %cst_99 = arith.constant 1.000000e+00 : f32
    %266 = vector.broadcast %cst_99 : f32 to vector<8x16xf32>
    %267 = arith.subf %266, %251 : vector<8x16xf32>
    %268 = arith.mulf %267, %229 : vector<8x16xf32>
    %269 = arith.mulf %251, %265 : vector<8x16xf32>
    %270 = arith.addf %268, %269 : vector<8x16xf32>
    %c1_i32_100 = arith.constant 1 : i32
    %271 = arith.addi %c5_i32, %c1_i32_100 : i32
    %272 = vector.broadcast %271 : i32 to vector<8x1xi32>
    %273 = arith.cmpi eq, %30, %272 : vector<8x1xi32>
    %274 = vector.shape_cast %273 : vector<8x1xi1> to vector<8x1xi1>
    %275 = vector.broadcast %274 : vector<8x1xi1> to vector<8x16xi1>
    %276 = arith.select %275, %270, %235 : vector<8x16xi1>, vector<8x16xf32>
    %c6_i32 = arith.constant 6 : i32
    %c8_i32_101 = arith.constant 8 : i32
    %277 = arith.muli %c6_i32, %c8_i32_101 : i32
    %278 = tpu.assume_multiple %277, 8 : i32
    %279 = arith.index_cast %278 : i32 to index
    %c0_102 = arith.constant 0 : index
    %280 = vector.load %arg16[%279, %c0_102] : memref<64x32xf32, #tpu.memory_space<vmem>>, vector<8x32xf32>
    %281 = arith.index_cast %278 : i32 to index
    %c0_103 = arith.constant 0 : index
    %282 = vector.load %arg17[%281, %c0_103] : memref<64x32xf32, #tpu.memory_space<vmem>>, vector<8x32xf32>
    %cst_104 = arith.constant dense<0.000000e+00> : vector<8x32xf32>
    %283 = tpu.matmul %270, %27, %cst_104 {dimension_numbers = #tpu.dot_dimension_numbers<[1], [0], [0], [1], [0, 0, 1, 1], [], []>} : vector<8x16xf32>, vector<16x32xf32>, vector<8x32xf32> -> vector<8x32xf32>
    %284 = arith.addf %283, %282 : vector<8x32xf32>
    %cst_105 = arith.constant 2.000000e+00 : f32
    %285 = vector.broadcast %cst_105 : f32 to vector<8x32xf32>
    %286 = arith.mulf %284, %285 : vector<8x32xf32>
    %287 = arith.negf %286 : vector<8x32xf32>
    %288 = math.exp %287 : vector<8x32xf32>
    %cst_106 = arith.constant 1.000000e+00 : f32
    %289 = vector.broadcast %cst_106 : f32 to vector<8x32xf32>
    %290 = arith.addf %289, %288 : vector<8x32xf32>
    %291 = arith.divf %289, %290 : vector<8x32xf32>
    %292 = vector.extract_strided_slice %291 {offsets = [0, 0], sizes = [8, 16], strides = [1, 1]} : vector<8x32xf32> to vector<8x16xf32>
    %293 = vector.extract_strided_slice %291 {offsets = [0, 16], sizes = [8, 16], strides = [1, 1]} : vector<8x32xf32> to vector<8x16xf32>
    %cst_107 = arith.constant 1.000000e+00 : f32
    %294 = vector.broadcast %cst_107 : f32 to vector<8x16xf32>
    %295 = arith.subf %294, %293 : vector<8x16xf32>
    %296 = arith.mulf %295, %26 : vector<8x16xf32>
    %297 = arith.mulf %293, %270 : vector<8x16xf32>
    %298 = arith.addf %296, %297 : vector<8x16xf32>
    %cst_108 = arith.constant dense<0.000000e+00> : vector<8x48xf32>
    %299 = tpu.matmul %298, %28, %cst_108 {dimension_numbers = #tpu.dot_dimension_numbers<[1], [0], [0], [1], [0, 0, 1, 1], [], []>} : vector<8x16xf32>, vector<16x48xf32>, vector<8x48xf32> -> vector<8x48xf32>
    %300 = vector.extract_strided_slice %299 {offsets = [0, 0], sizes = [8, 32], strides = [1, 1]} : vector<8x48xf32> to vector<8x32xf32>
    %301 = vector.extract_strided_slice %299 {offsets = [0, 32], sizes = [8, 16], strides = [1, 1]} : vector<8x48xf32> to vector<8x16xf32>
    %302 = arith.mulf %280, %300 : vector<8x32xf32>
    %cst_109 = arith.constant dense<0.000000e+00> : vector<8x16xf32>
    %303 = tpu.matmul %302, %29, %cst_109 {dimension_numbers = #tpu.dot_dimension_numbers<[1], [0], [0], [1], [0, 0, 1, 1], [], []>} : vector<8x32xf32>, vector<32x16xf32>, vector<8x16xf32> -> vector<8x16xf32>
    %304 = arith.addf %303, %301 : vector<8x16xf32>
    %cst_110 = arith.constant 0.000000e+00 : f32
    %305 = vector.broadcast %cst_110 : f32 to vector<8x16xf32>
    %306 = arith.maximumf %304, %305 : vector<8x16xf32>
    %cst_111 = arith.constant 1.000000e+00 : f32
    %307 = vector.broadcast %cst_111 : f32 to vector<8x16xf32>
    %308 = arith.subf %307, %292 : vector<8x16xf32>
    %309 = arith.mulf %308, %270 : vector<8x16xf32>
    %310 = arith.mulf %292, %306 : vector<8x16xf32>
    %311 = arith.addf %309, %310 : vector<8x16xf32>
    %c1_i32_112 = arith.constant 1 : i32
    %312 = arith.addi %c6_i32, %c1_i32_112 : i32
    %313 = vector.broadcast %312 : i32 to vector<8x1xi32>
    %314 = arith.cmpi eq, %30, %313 : vector<8x1xi32>
    %315 = vector.shape_cast %314 : vector<8x1xi1> to vector<8x1xi1>
    %316 = vector.broadcast %315 : vector<8x1xi1> to vector<8x16xi1>
    %317 = arith.select %316, %311, %276 : vector<8x16xi1>, vector<8x16xf32>
    %c7_i32 = arith.constant 7 : i32
    %c8_i32_113 = arith.constant 8 : i32
    %318 = arith.muli %c7_i32, %c8_i32_113 : i32
    %319 = tpu.assume_multiple %318, 8 : i32
    %320 = arith.index_cast %319 : i32 to index
    %c0_114 = arith.constant 0 : index
    %321 = vector.load %arg16[%320, %c0_114] : memref<64x32xf32, #tpu.memory_space<vmem>>, vector<8x32xf32>
    %322 = arith.index_cast %319 : i32 to index
    %c0_115 = arith.constant 0 : index
    %323 = vector.load %arg17[%322, %c0_115] : memref<64x32xf32, #tpu.memory_space<vmem>>, vector<8x32xf32>
    %cst_116 = arith.constant dense<0.000000e+00> : vector<8x32xf32>
    %324 = tpu.matmul %311, %27, %cst_116 {dimension_numbers = #tpu.dot_dimension_numbers<[1], [0], [0], [1], [0, 0, 1, 1], [], []>} : vector<8x16xf32>, vector<16x32xf32>, vector<8x32xf32> -> vector<8x32xf32>
    %325 = arith.addf %324, %323 : vector<8x32xf32>
    %cst_117 = arith.constant 2.000000e+00 : f32
    %326 = vector.broadcast %cst_117 : f32 to vector<8x32xf32>
    %327 = arith.mulf %325, %326 : vector<8x32xf32>
    %328 = arith.negf %327 : vector<8x32xf32>
    %329 = math.exp %328 : vector<8x32xf32>
    %cst_118 = arith.constant 1.000000e+00 : f32
    %330 = vector.broadcast %cst_118 : f32 to vector<8x32xf32>
    %331 = arith.addf %330, %329 : vector<8x32xf32>
    %332 = arith.divf %330, %331 : vector<8x32xf32>
    %333 = vector.extract_strided_slice %332 {offsets = [0, 0], sizes = [8, 16], strides = [1, 1]} : vector<8x32xf32> to vector<8x16xf32>
    %334 = vector.extract_strided_slice %332 {offsets = [0, 16], sizes = [8, 16], strides = [1, 1]} : vector<8x32xf32> to vector<8x16xf32>
    %cst_119 = arith.constant 1.000000e+00 : f32
    %335 = vector.broadcast %cst_119 : f32 to vector<8x16xf32>
    %336 = arith.subf %335, %334 : vector<8x16xf32>
    %337 = arith.mulf %336, %26 : vector<8x16xf32>
    %338 = arith.mulf %334, %311 : vector<8x16xf32>
    %339 = arith.addf %337, %338 : vector<8x16xf32>
    %cst_120 = arith.constant dense<0.000000e+00> : vector<8x48xf32>
    %340 = tpu.matmul %339, %28, %cst_120 {dimension_numbers = #tpu.dot_dimension_numbers<[1], [0], [0], [1], [0, 0, 1, 1], [], []>} : vector<8x16xf32>, vector<16x48xf32>, vector<8x48xf32> -> vector<8x48xf32>
    %341 = vector.extract_strided_slice %340 {offsets = [0, 0], sizes = [8, 32], strides = [1, 1]} : vector<8x48xf32> to vector<8x32xf32>
    %342 = vector.extract_strided_slice %340 {offsets = [0, 32], sizes = [8, 16], strides = [1, 1]} : vector<8x48xf32> to vector<8x16xf32>
    %343 = arith.mulf %321, %341 : vector<8x32xf32>
    %cst_121 = arith.constant dense<0.000000e+00> : vector<8x16xf32>
    %344 = tpu.matmul %343, %29, %cst_121 {dimension_numbers = #tpu.dot_dimension_numbers<[1], [0], [0], [1], [0, 0, 1, 1], [], []>} : vector<8x32xf32>, vector<32x16xf32>, vector<8x16xf32> -> vector<8x16xf32>
    %345 = arith.addf %344, %342 : vector<8x16xf32>
    %cst_122 = arith.constant 0.000000e+00 : f32
    %346 = vector.broadcast %cst_122 : f32 to vector<8x16xf32>
    %347 = arith.maximumf %345, %346 : vector<8x16xf32>
    %cst_123 = arith.constant 1.000000e+00 : f32
    %348 = vector.broadcast %cst_123 : f32 to vector<8x16xf32>
    %349 = arith.subf %348, %333 : vector<8x16xf32>
    %350 = arith.mulf %349, %311 : vector<8x16xf32>
    %351 = arith.mulf %333, %347 : vector<8x16xf32>
    %352 = arith.addf %350, %351 : vector<8x16xf32>
    %c1_i32_124 = arith.constant 1 : i32
    %353 = arith.addi %c7_i32, %c1_i32_124 : i32
    %354 = vector.broadcast %353 : i32 to vector<8x1xi32>
    %355 = arith.cmpi eq, %30, %354 : vector<8x1xi32>
    %356 = vector.shape_cast %355 : vector<8x1xi1> to vector<8x1xi1>
    %357 = vector.broadcast %356 : vector<8x1xi1> to vector<8x16xi1>
    %358 = arith.select %357, %352, %317 : vector<8x16xi1>, vector<8x16xf32>
    %c8_i32_125 = arith.constant 8 : i32
    %cst_126 = arith.constant 0.000000e+00 : f32
    %cst_127 = arith.constant 1.000000e+00 : f32
    %359 = vector.broadcast %cst_126 : f32 to vector<8x16xf32>
    %360 = arith.maximumf %359, %358 : vector<8x16xf32>
    %361 = vector.broadcast %cst_127 : f32 to vector<8x16xf32>
    %362 = arith.minimumf %361, %360 : vector<8x16xf32>
    %c0_128 = arith.constant 0 : index
    %c0_129 = arith.constant 0 : index
    %363 = vector.load %arg13[%c0_128, %c0_129] : memref<16x5xf32, #tpu.memory_space<vmem>>, vector<16x5xf32>
    %cst_130 = arith.constant dense<0.000000e+00> : vector<8x5xf32>
    %364 = tpu.matmul %362, %363, %cst_130 {dimension_numbers = #tpu.dot_dimension_numbers<[1], [0], [0], [1], [0, 0, 1, 1], [], []>} : vector<8x16xf32>, vector<16x5xf32>, vector<8x5xf32> -> vector<8x5xf32>
    %c0_131 = arith.constant 0 : index
    %c0_132 = arith.constant 0 : index
    %365 = vector.load %arg14[%c0_131, %c0_132] : memref<1x5xf32, #tpu.memory_space<vmem>>, vector<1x5xf32>
    %366 = vector.broadcast %365 : vector<1x5xf32> to vector<8x5xf32>
    %367 = arith.addf %364, %366 : vector<8x5xf32>
    %cst_133 = arith.constant 0.000000e+00 : f32
    %cst_134 = arith.constant 1.000000e+00 : f32
    %368 = vector.broadcast %cst_133 : f32 to vector<8x5xf32>
    %369 = arith.maximumf %368, %367 : vector<8x5xf32>
    %370 = vector.broadcast %cst_134 : f32 to vector<8x5xf32>
    %371 = arith.minimumf %370, %369 : vector<8x5xf32>
    %c0_135 = arith.constant 0 : index
    %c0_136 = arith.constant 0 : index
    %372 = vector.load %arg15[%c0_135, %c0_136] : memref<8x5xf32, #tpu.memory_space<vmem>>, vector<8x5xf32>
    tpu.vector_store %arg15[%c0_135, %c0_136], %371 {strides = array<i32>} : memref<8x5xf32, #tpu.memory_space<vmem>>, vector<8x5xf32>,
    return
  }
  func.func @transform_0(%arg0: i32) -> (i32, i32) {
    %c0_i32 = arith.constant 0 : i32
    %c0_i32_0 = arith.constant 0 : i32
    %c0_i32_1 = arith.constant 0 : i32
    return %c0_i32, %c0_i32_0 : i32, i32
  }
  func.func @transform_1(%arg0: i32) -> (i32, i32) {
    %c0_i32 = arith.constant 0 : i32
    %c0_i32_0 = arith.constant 0 : i32
    %c0_i32_1 = arith.constant 0 : i32
    return %c0_i32, %c0_i32_0 : i32, i32
  }
  func.func @transform_2(%arg0: i32) -> (i32, i32) {
    %c0_i32 = arith.constant 0 : i32
    %c0_i32_0 = arith.constant 0 : i32
    %c0_i32_1 = arith.constant 0 : i32
    return %c0_i32, %c0_i32_0 : i32, i32
  }
  func.func @transform_3(%arg0: i32) -> (i32, i32) {
    %c0_i32 = arith.constant 0 : i32
    %c0_i32_0 = arith.constant 0 : i32
    %c0_i32_1 = arith.constant 0 : i32
    return %c0_i32, %c0_i32_0 : i32, i32
  }
  func.func @transform_4(%arg0: i32) -> (i32, i32) {
    %c0_i32 = arith.constant 0 : i32
    %c0_i32_0 = arith.constant 0 : i32
    %c0_i32_1 = arith.constant 0 : i32
    return %c0_i32, %c0_i32_0 : i32, i32
  }
  func.func @transform_5(%arg0: i32) -> (i32, i32) {
    %c0_i32 = arith.constant 0 : i32
    %c0_i32_0 = arith.constant 0 : i32
    %c0_i32_1 = arith.constant 0 : i32
    return %c0_i32, %c0_i32_0 : i32, i32
  }
  func.func @transform_6(%arg0: i32) -> (i32, i32) {
    %c0_i32 = arith.constant 0 : i32
    %c0_i32_0 = arith.constant 0 : i32
    %c0_i32_1 = arith.constant 0 : i32
    return %c0_i32, %c0_i32_0 : i32, i32
  }
  func.func @transform_7(%arg0: i32) -> (i32, i32) {
    %c0_i32 = arith.constant 0 : i32
    %c0_i32_0 = arith.constant 0 : i32
    %c0_i32_1 = arith.constant 0 : i32
    return %c0_i32, %c0_i32_0 : i32, i32
  }
  func.func @transform_8(%arg0: i32) -> (i32, i32) {
    %c0_i32 = arith.constant 0 : i32
    %c0_i32_0 = arith.constant 0 : i32
    %c0_i32_1 = arith.constant 0 : i32
    return %c0_i32, %c0_i32_0 : i32, i32
  }
  func.func @transform_9(%arg0: i32) -> (i32, i32) {
    %c0_i32 = arith.constant 0 : i32
    %c0_i32_0 = arith.constant 0 : i32
    %c0_i32_1 = arith.constant 0 : i32
    return %c0_i32, %c0_i32_0 : i32, i32
  }
  func.func @transform_10(%arg0: i32) -> (i32, i32) {
    %c0_i32 = arith.constant 0 : i32
    %c0_i32_0 = arith.constant 0 : i32
    %c0_i32_1 = arith.constant 0 : i32
    return %c0_i32, %c0_i32_0 : i32, i32
  }
  func.func @transform_11(%arg0: i32) -> (i32, i32) {
    %c0_i32 = arith.constant 0 : i32
    %c0_i32_0 = arith.constant 0 : i32
    %c0_i32_1 = arith.constant 0 : i32
    return %c0_i32, %c0_i32_0 : i32, i32
  }
  func.func @transform_12(%arg0: i32) -> (i32, i32) {
    %c0_i32 = arith.constant 0 : i32
    %c0_i32_0 = arith.constant 0 : i32
    %c0_i32_1 = arith.constant 0 : i32
    return %c0_i32, %c0_i32_0 : i32, i32
  }
  func.func @transform_13(%arg0: i32) -> (i32, i32) {
    %c0_i32 = arith.constant 0 : i32
    %c0_i32_0 = arith.constant 0 : i32
    %c0_i32_1 = arith.constant 0 : i32
    return %c0_i32, %c0_i32_0 : i32, i32
  }
  func.func @transform_14(%arg0: i32) -> (i32, i32) {
    %c0_i32 = arith.constant 0 : i32
    %c0_i32_0 = arith.constant 0 : i32
    %c0_i32_1 = arith.constant 0 : i32
    return %c0_i32, %c0_i32_0 : i32, i32
  }
}

</mosaic_0001>

<llo_original>
// kernel: tpu_custom_call.1
$region0: #{tpu_custom_call.1}
  #allocation0 [shape = 'u32[]', space=smem, size = 0x4, offset = 0x4, fixed_abs, tag = 'smem constant byte address 0x4 - core index']
  #allocation1 [shape = 'u32[144,128]{1,0:T(1,128)}', space=vmem, size = 0x12000, scoped, tag = 'internal scratch']
  #allocation2 [shape = 'f32[64,32]{1,0:T(8,128)}', space=vmem, size = 0x8000, scoped, tag = 'scratch operand']
  #allocation3 [shape = 'f32[64,32]{1,0:T(8,128)}', space=vmem, size = 0x8000, scoped, tag = 'scratch operand']
  %s0 = inlined_call_operand.vmem [shape: s32[8,1], index: 0, kind: input, shape index: {}]
  %s1 = inlined_call_operand.vmem [shape: f32[64,64], index: 1, kind: input, shape index: {}]
  %s2 = inlined_call_operand.vmem [shape: f32[64,32], index: 2, kind: input, shape index: {}]
  %s3 = inlined_call_operand.vmem [shape: f32[64,32], index: 3, kind: input, shape index: {}]
  %s4 = inlined_call_operand.vmem [shape: f32[1,32], index: 4, kind: input, shape index: {}]
  %s5 = inlined_call_operand.vmem [shape: f32[16,32], index: 5, kind: input, shape index: {}]
  %s6 = inlined_call_operand.vmem [shape: f32[32,32], index: 6, kind: input, shape index: {}]
  %s7 = inlined_call_operand.vmem [shape: f32[1,32], index: 7, kind: input, shape index: {}]
  %s8 = inlined_call_operand.vmem [shape: f32[1,16], index: 8, kind: input, shape index: {}]
  %s9 = inlined_call_operand.vmem [shape: f32[1,16], index: 9, kind: input, shape index: {}]
  %s10 = inlined_call_operand.vmem [shape: f32[16,48], index: 10, kind: input, shape index: {}]
  %s11 = inlined_call_operand.vmem [shape: f32[32,16], index: 11, kind: input, shape index: {}]
  %s12 = inlined_call_operand.vmem [shape: f32[16,5], index: 12, kind: input, shape index: {}]
  %s13 = inlined_call_operand.vmem [shape: f32[1,5], index: 13, kind: input, shape index: {}]
  %s14 = inlined_call_operand.hbm [shape: f32[8,5], index: 14, kind: output, shape index: {}]
  %s15 = sld [smem:[#allocation0]]
  $region66: #{tpu_custom_call.1} parent=0
    _
  %s17 = ssub.s32 1, %s15
  %s18 = scalar_select 0, %s17, %s15
  $region1: #{tpu_custom_call.1} parent=0
    #allocation4 [shape = 'u8[4096]{0}', space=vmem, size = 0x1000, scoped, tag = 'output window, operand 0, single buffered']
    #allocation5 [shape = 's32[1]{0}', space=sflag, size = 0x4, scoped, tag = 'scoped memory for tpu_custom_call.1']
    %19 = vsyncpa [#allocation5], 0
    // Predicated region
    $region2: #{tpu_custom_call.1} parent=1 // pred_check
      _
    $region3: #{tpu_custom_call.1} parent=1 // pred_check_branch
      %21 = sbr.rel (0) target = $region5
    $region4: #{tpu_custom_call.1} parent=1 // pred_region
      _
    $region5: #{tpu_custom_call.1} parent=1 // pred_fallthru
      _
    // Predicated region
    $region6: #{tpu_custom_call.1} parent=1 // pred_check
      _
    $region7: #{tpu_custom_call.1} parent=1 // pred_check_branch
      %23 = sbr.rel (0) target = $region9
    $region8: #{tpu_custom_call.1} parent=1 // pred_region
      _
    $region9: #{tpu_custom_call.1} parent=1 // pred_fallthru
      _
    // Predicated region
    $region10: #{tpu_custom_call.1} parent=1 // pred_check
      _
    $region11: #{tpu_custom_call.1} parent=1 // pred_check_branch
      %25 = sbr.rel (0) target = $region13
    $region12: #{tpu_custom_call.1} parent=1 // pred_region
      _
    $region13: #{tpu_custom_call.1} parent=1 // pred_fallthru
      _
    // Predicated region
    $region14: #{tpu_custom_call.1} parent=1 // pred_check
      _
    $region15: #{tpu_custom_call.1} parent=1 // pred_check_branch
      %27 = sbr.rel (0) target = $region17
    $region16: #{tpu_custom_call.1} parent=1 // pred_region
      _
    $region17: #{tpu_custom_call.1} parent=1 // pred_fallthru
      _
    // Predicated region
    $region18: #{tpu_custom_call.1} parent=1 // pred_check
      _
    $region19: #{tpu_custom_call.1} parent=1 // pred_check_branch
      %29 = sbr.rel (0) target = $region21
    $region20: #{tpu_custom_call.1} parent=1 // pred_region
      _
    $region21: #{tpu_custom_call.1} parent=1 // pred_fallthru
      _
    // Predicated region
    $region22: #{tpu_custom_call.1} parent=1 // pred_check
      _
    $region23: #{tpu_custom_call.1} parent=1 // pred_check_branch
      %31 = sbr.rel (0) target = $region25
    $region24: #{tpu_custom_call.1} parent=1 // pred_region
      _
    $region25: #{tpu_custom_call.1} parent=1 // pred_fallthru
      _
    // Predicated region
    $region26: #{tpu_custom_call.1} parent=1 // pred_check
      _
    $region27: #{tpu_custom_call.1} parent=1 // pred_check_branch
      %33 = sbr.rel (0) target = $region29
    $region28: #{tpu_custom_call.1} parent=1 // pred_region
      _
    $region29: #{tpu_custom_call.1} parent=1 // pred_fallthru
      _
    // Predicated region
    $region30: #{tpu_custom_call.1} parent=1 // pred_check
      _
    $region31: #{tpu_custom_call.1} parent=1 // pred_check_branch
      %35 = sbr.rel (0) target = $region33
    $region32: #{tpu_custom_call.1} parent=1 // pred_region
      _
    $region33: #{tpu_custom_call.1} parent=1 // pred_fallthru
      _
    // Predicated region
    $region34: #{tpu_custom_call.1} parent=1 // pred_check
      _
    $region35: #{tpu_custom_call.1} parent=1 // pred_check_branch
      %37 = sbr.rel (0) target = $region37
    $region36: #{tpu_custom_call.1} parent=1 // pred_region
      _
    $region37: #{tpu_custom_call.1} parent=1 // pred_fallthru
      _
    // Predicated region
    $region38: #{tpu_custom_call.1} parent=1 // pred_check
      _
    $region39: #{tpu_custom_call.1} parent=1 // pred_check_branch
      %39 = sbr.rel (0) target = $region41
    $region40: #{tpu_custom_call.1} parent=1 // pred_region
      _
    $region41: #{tpu_custom_call.1} parent=1 // pred_fallthru
      _
    // Predicated region
    $region42: #{tpu_custom_call.1} parent=1 // pred_check
      _
    $region43: #{tpu_custom_call.1} parent=1 // pred_check_branch
      %41 = sbr.rel (0) target = $region45
    $region44: #{tpu_custom_call.1} parent=1 // pred_region
      _
    $region45: #{tpu_custom_call.1} parent=1 // pred_fallthru
      _
    // Predicated region
    $region46: #{tpu_custom_call.1} parent=1 // pred_check
      _
    $region47: #{tpu_custom_call.1} parent=1 // pred_check_branch
      %43 = sbr.rel (0) target = $region49
    $region48: #{tpu_custom_call.1} parent=1 // pred_region
      _
    $region49: #{tpu_custom_call.1} parent=1 // pred_fallthru
      _
    // Predicated region
    $region50: #{tpu_custom_call.1} parent=1 // pred_check
      _
    $region51: #{tpu_custom_call.1} parent=1 // pred_check_branch
      %45 = sbr.rel (0) target = $region53
    $region52: #{tpu_custom_call.1} parent=1 // pred_region
      _
    $region53: #{tpu_custom_call.1} parent=1 // pred_fallthru
      _
    // Predicated region
    $region54: #{tpu_custom_call.1} parent=1 // pred_check
      _
    $region55: #{tpu_custom_call.1} parent=1 // pred_check_branch
      %47 = sbr.rel (0) target = $region57
    $region56: #{tpu_custom_call.1} parent=1 // pred_region
      _
    $region57: #{tpu_custom_call.1} parent=1 // pred_fallthru
      _
    %v48 = vld [vmem:[%s1] sm:$0xff]
    %v49 = vld [vmem:[%s1 + $0x8] sm:$0xff]
    %v50 = vld [vmem:[%s1 + $0x10] sm:$0xff]
    %v51 = vld [vmem:[%s1 + $0x18] sm:$0xff]
    %v52 = vld [vmem:[%s1 + $0x20] sm:$0xff]
    %v53 = vld [vmem:[%s1 + $0x28] sm:$0xff]
    %v54 = vld [vmem:[%s1 + $0x30] sm:$0xff]
    %v55 = vld [vmem:[%s1 + $0x38] sm:$0xff]
    %v56 = vld [vmem:[%s3] sm:$0xff]
    %v57 = vld [vmem:[%s3 + $0x8] sm:$0xff]
    %v58 = vld [vmem:[%s3 + $0x10] sm:$0xff]
    %v59 = vld [vmem:[%s3 + $0x18] sm:$0xff]
    %v60 = vld [vmem:[%s3 + $0x20] sm:$0xff]
    %v61 = vld [vmem:[%s3 + $0x28] sm:$0xff]
    %v62 = vld [vmem:[%s3 + $0x30] sm:$0xff]
    %v63 = vld [vmem:[%s3 + $0x38] sm:$0xff]
    %vm64 = vcmask 523264
    %v66 = vsel %vm64, %v48, 0
    %v69 = vsel %vm64, %v49, 0
    %v72 = vsel %vm64, %v50, 0
    %v75 = vsel %vm64, %v51, 0
    %v78 = vsel %vm64, %v52, 0
    %v81 = vsel %vm64, %v53, 0
    %v84 = vsel %vm64, %v54, 0
    %v87 = vsel %vm64, %v55, 0
    %89 = vmatprep.subr.mxu0 0.0
    %90 = vmatpush1.msra.mxu0 %v56
    %91 = vmatprep.subr.mxu0 0.0
    %92 = vmatpush1.msra.mxu0 %v57
    %93 = vmatprep.subr.mxu0 0.0
    %94 = vmatpush1.msra.mxu0 %v58
    %95 = vmatprep.subr.mxu0 0.0
    %96 = vmatpush1.msra.mxu0 %v59
    %97 = vmatprep.subr.mxu0 0.0
    %98 = vmatpush1.msra.mxu0 %v60
    %99 = vmatprep.subr.mxu0 0.0
    %100 = vmatpush1.msra.mxu0 %v61
    %101 = vmatprep.subr.mxu0 0.0
    %102 = vmatpush1.msra.mxu0 %v62
    %103 = vmatprep.subr.mxu0 0.0
    %104 = vmatpush1.msra.mxu0 %v63
    %105 = vmatprep.subr.mxu0 0.0
    %106 = vmatpush1.msra.mxu0 0.0
    %107 = vmatprep.subr.mxu0 0.0
    %108 = vmatpush1.msra.mxu0 0.0
    %109 = vmatprep.subr.mxu0 0.0
    %110 = vmatpush1.msra.mxu0 0.0
    %111 = vmatprep.subr.mxu0 0.0
    %112 = vmatpush1.msra.mxu0 0.0
    %113 = vmatprep.subr.mxu0 0.0
    %114 = vmatpush1.msra.mxu0 0.0
    %115 = vmatprep.subr.mxu0 0.0
    %116 = vmatpush1.msra.mxu0 0.0
    %117 = vmatprep.subr.mxu0 0.0
    %118 = vmatpush1.msra.mxu0 0.0
    %119 = vmatprep.subr.mxu0 0.0
    %120 = vmatpush1.msra.mxu0 0.0
    %121 = vmatprep.subr.mxu0 0.0
    %122 = vmatpush1.msra.mxu0 0.0
    %123 = vmatprep.subr.mxu0 0.0
    %124 = vmatpush1.msra.mxu0 0.0
    %125 = vmatprep.subr.mxu0 0.0
    %126 = vmatpush1.msra.mxu0 0.0
    %127 = vmatprep.subr.mxu0 0.0
    %128 = vmatpush1.msra.mxu0 0.0
    %129 = vmatprep.subr.mxu0 0.0
    %130 = vmatpush1.msra.mxu0 0.0
    %131 = vmatprep.subr.mxu0 0.0
    %132 = vmatpush1.msra.mxu0 0.0
    %133 = vmatprep.subr.mxu0 0.0
    %134 = vmatpush1.msra.mxu0 0.0
    %135 = vmatprep.subr.mxu0 0.0
    %136 = vmatpush1.msra.mxu0 0.0
    %137 = vmatprep.subr.mxu0 0.0
    %138 = vmatpush1.msra.mxu0 0.0
    %139 = vmatprep.subr.mxu0 0.0
    %140 = vmatpush1.msra.mxu0 0.0
    %141 = vmatprep.subr.mxu0 0.0
    %142 = vmatpush1.msra.mxu0 0.0
    %143 = vmatprep.subr.mxu0 0.0
    %144 = vmatpush1.msra.mxu0 0.0
    %145 = vmatprep.subr.mxu0 0.0
    %146 = vmatpush1.msra.mxu0 0.0
    %147 = vmatprep.subr.mxu0 0.0
    %148 = vmatpush1.msra.mxu0 0.0
    %149 = vmatprep.subr.mxu0 0.0
    %150 = vmatpush1.msra.mxu0 0.0
    %151 = vmatprep.subr.mxu0 0.0
    %152 = vmatpush1.msra.mxu0 0.0
    %153 = vmatprep.mubr.f32.mxu0 0.0
    %154 = vmatmul.mubr.f32.gmra.mrb[0].mxu0 %v66
    %v155 = vpop.f32.mrb[0].mxu0
    %v156 = vadd.f32 0.0, %v155
    %v157 = vpop.f32.mrb[0].mxu0
    %158 = vmatprep.mubr.f32.mxu0 0.0
    %159 = vmatmul.mubr.f32.gmra.mrb[0].mxu0 %v69
    %v160 = vpop.f32.mrb[0].mxu0
    %v161 = vadd.f32 0.0, %v160
    %v162 = vpop.f32.mrb[0].mxu0
    %163 = vmatprep.mubr.f32.mxu0 0.0
    %164 = vmatmul.mubr.f32.gmra.mrb[0].mxu0 %v72
    %v165 = vpop.f32.mrb[0].mxu0
    %v166 = vadd.f32 0.0, %v165
    %v167 = vpop.f32.mrb[0].mxu0
    %168 = vmatprep.mubr.f32.mxu0 0.0
    %169 = vmatmul.mubr.f32.gmra.mrb[0].mxu0 %v75
    %v170 = vpop.f32.mrb[0].mxu0
    %v171 = vadd.f32 0.0, %v170
    %v172 = vpop.f32.mrb[0].mxu0
    %173 = vmatprep.mubr.f32.mxu0 0.0
    %174 = vmatmul.mubr.f32.gmra.mrb[0].mxu0 %v78
    %v175 = vpop.f32.mrb[0].mxu0
    %v176 = vadd.f32 0.0, %v175
    %v177 = vpop.f32.mrb[0].mxu0
    %178 = vmatprep.mubr.f32.mxu0 0.0
    %179 = vmatmul.mubr.f32.gmra.mrb[0].mxu0 %v81
    %v180 = vpop.f32.mrb[0].mxu0
    %v181 = vadd.f32 0.0, %v180
    %v182 = vpop.f32.mrb[0].mxu0
    %183 = vmatprep.mubr.f32.mxu0 0.0
    %184 = vmatmul.mubr.f32.gmra.mrb[0].mxu0 %v84
    %v185 = vpop.f32.mrb[0].mxu0
    %v186 = vadd.f32 0.0, %v185
    %v187 = vpop.f32.mrb[0].mxu0
    %188 = vmatprep.mubr.f32.mxu0 0.0
    %189 = vmatmul.mubr.f32.gmra.mrb[0].mxu0 %v87
    %v190 = vpop.f32.mrb[0].mxu0
    %v191 = vadd.f32 0.0, %v190
    %v192 = vpop.f32.mrb[0].mxu0
    %193 = vdwg.mxu0
    %v194 = vmax.f32 %v156, 0.0
    %v195 = vmax.f32 %v161, 0.0
    %v196 = vmax.f32 %v166, 0.0
    %v197 = vmax.f32 %v171, 0.0
    %v198 = vmax.f32 %v176, 0.0
    %v199 = vmax.f32 %v181, 0.0
    %v200 = vmax.f32 %v186, 0.0
    %v201 = vmax.f32 %v191, 0.0
    %v202 = vld [vmem:[%s4] sm:$0x1]
    %v203 = vld [vmem:[%s2] sm:$0xff]
    %v204 = vld [vmem:[%s2 + $0x8] sm:$0xff]
    %v205 = vld [vmem:[%s2 + $0x10] sm:$0xff]
    %v206 = vld [vmem:[%s2 + $0x18] sm:$0xff]
    %v207 = vld [vmem:[%s2 + $0x20] sm:$0xff]
    %v208 = vld [vmem:[%s2 + $0x28] sm:$0xff]
    %v209 = vld [vmem:[%s2 + $0x30] sm:$0xff]
    %v210 = vld [vmem:[%s2 + $0x38] sm:$0xff]
    %v212 = vlaneseq
    %v213 = vshrl.u32 %v212, 7
    %v214 = vsub.s32 0, %v213
    %v215 = vrot.slane %v202, %v214
    %v217 = vmul.f32 %v203, %v215
    %v218 = vmul.f32 %v204, %v215
    %v219 = vmul.f32 %v205, %v215
    %v220 = vmul.f32 %v206, %v215
    %v221 = vmul.f32 %v207, %v215
    %v222 = vmul.f32 %v208, %v215
    %v223 = vmul.f32 %v209, %v215
    %v224 = vmul.f32 %v210, %v215
    %v225 = vsub.f32 1.0, %v202
    %v227 = vlaneseq
    %v228 = vshrl.u32 %v227, 7
    %v229 = vsub.s32 0, %v228
    %v230 = vrot.slane %v225, %v229
    %v232 = vmul.f32 %v194, %v230
    %v233 = vmul.f32 %v195, %v230
    %v234 = vmul.f32 %v196, %v230
    %v235 = vmul.f32 %v197, %v230
    %v236 = vmul.f32 %v198, %v230
    %v237 = vmul.f32 %v199, %v230
    %v238 = vmul.f32 %v200, %v230
    %v239 = vmul.f32 %v201, %v230
    %v240 = vadd.f32 %v217, %v232
    %v241 = vadd.f32 %v218, %v233
    %v242 = vadd.f32 %v219, %v234
    %v243 = vadd.f32 %v220, %v235
    %v244 = vadd.f32 %v221, %v236
    %v245 = vadd.f32 %v222, %v237
    %v246 = vadd.f32 %v223, %v238
    %v247 = vadd.f32 %v224, %v239
    %vm248 = vcmask 261120
    %249 = vst.msk [vmem:[#allocation2] sm:$0xff] %vm248, %v240
    %250 = vst.msk [vmem:[#allocation2 + $0x8] sm:$0xff] %vm248, %v241
    %251 = vst.msk [vmem:[#allocation2 + $0x10] sm:$0xff] %vm248, %v242
    %252 = vst.msk [vmem:[#allocation2 + $0x18] sm:$0xff] %vm248, %v243
    %253 = vst.msk [vmem:[#allocation2 + $0x20] sm:$0xff] %vm248, %v244
    %254 = vst.msk [vmem:[#allocation2 + $0x28] sm:$0xff] %vm248, %v245
    %255 = vst.msk [vmem:[#allocation2 + $0x30] sm:$0xff] %vm248, %v246
    %256 = vst.msk [vmem:[#allocation2 + $0x38] sm:$0xff] %vm248, %v247
    %v257 = vld [vmem:[%s6] sm:$0xff]
    %v258 = vld [vmem:[%s6 + $0x8] sm:$0xff]
    %v259 = vld [vmem:[%s6 + $0x10] sm:$0xff]
    %v260 = vld [vmem:[%s6 + $0x18] sm:$0xff]
    %v261 = vld [vmem:[%s7] sm:$0x1]
    %v263 = vlaneseq
    %v264 = vshrl.u32 %v263, 7
    %v265 = vsub.s32 0, %v264
    %v266 = vrot.slane %v261, %v265
    %v269 = vsel %vm248, %v240, 0
    %v272 = vsel %vm248, %v241, 0
    %v275 = vsel %vm248, %v242, 0
    %v278 = vsel %vm248, %v243, 0
    %v281 = vsel %vm248, %v244, 0
    %v284 = vsel %vm248, %v245, 0
    %v287 = vsel %vm248, %v246, 0
    %v290 = vsel %vm248, %v247, 0
    %292 = vmatprep.subr.mxu0 0.0
    %293 = vmatpush1.msra.mxu0 %v257
    %294 = vmatprep.subr.mxu0 0.0
    %295 = vmatpush1.msra.mxu0 %v258
    %296 = vmatprep.subr.mxu0 0.0
    %297 = vmatpush1.msra.mxu0 %v259
    %298 = vmatprep.subr.mxu0 0.0
    %299 = vmatpush1.msra.mxu0 %v260
    %300 = vmatprep.subr.mxu0 0.0
    %301 = vmatpush1.msra.mxu0 0.0
    %302 = vmatprep.subr.mxu0 0.0
    %303 = vmatpush1.msra.mxu0 0.0
    %304 = vmatprep.subr.mxu0 0.0
    %305 = vmatpush1.msra.mxu0 0.0
    %306 = vmatprep.subr.mxu0 0.0
    %307 = vmatpush1.msra.mxu0 0.0
    %308 = vmatprep.subr.mxu0 0.0
    %309 = vmatpush1.msra.mxu0 0.0
    %310 = vmatprep.subr.mxu0 0.0
    %311 = vmatpush1.msra.mxu0 0.0
    %312 = vmatprep.subr.mxu0 0.0
    %313 = vmatpush1.msra.mxu0 0.0
    %314 = vmatprep.subr.mxu0 0.0
    %315 = vmatpush1.msra.mxu0 0.0
    %316 = vmatprep.subr.mxu0 0.0
    %317 = vmatpush1.msra.mxu0 0.0
    %318 = vmatprep.subr.mxu0 0.0
    %319 = vmatpush1.msra.mxu0 0.0
    %320 = vmatprep.subr.mxu0 0.0
    %321 = vmatpush1.msra.mxu0 0.0
    %322 = vmatprep.subr.mxu0 0.0
    %323 = vmatpush1.msra.mxu0 0.0
    %324 = vmatprep.subr.mxu0 0.0
    %325 = vmatpush1.msra.mxu0 0.0
    %326 = vmatprep.subr.mxu0 0.0
    %327 = vmatpush1.msra.mxu0 0.0
    %328 = vmatprep.subr.mxu0 0.0
    %329 = vmatpush1.msra.mxu0 0.0
    %330 = vmatprep.subr.mxu0 0.0
    %331 = vmatpush1.msra.mxu0 0.0
    %332 = vmatprep.subr.mxu0 0.0
    %333 = vmatpush1.msra.mxu0 0.0
    %334 = vmatprep.subr.mxu0 0.0
    %335 = vmatpush1.msra.mxu0 0.0
    %336 = vmatprep.subr.mxu0 0.0
    %337 = vmatpush1.msra.mxu0 0.0
    %338 = vmatprep.subr.mxu0 0.0
    %339 = vmatpush1.msra.mxu0 0.0
    %340 = vmatprep.subr.mxu0 0.0
    %341 = vmatpush1.msra.mxu0 0.0
    %342 = vmatprep.subr.mxu0 0.0
    %343 = vmatpush1.msra.mxu0 0.0
    %344 = vmatprep.subr.mxu0 0.0
    %345 = vmatpush1.msra.mxu0 0.0
    %346 = vmatprep.subr.mxu0 0.0
    %347 = vmatpush1.msra.mxu0 0.0
    %348 = vmatprep.subr.mxu0 0.0
    %349 = vmatpush1.msra.mxu0 0.0
    %350 = vmatprep.subr.mxu0 0.0
    %351 = vmatpush1.msra.mxu0 0.0
    %352 = vmatprep.subr.mxu0 0.0
    %353 = vmatpush1.msra.mxu0 0.0
    %354 = vmatprep.subr.mxu0 0.0
    %355 = vmatpush1.msra.mxu0 0.0
    %356 = vmatprep.mubr.f32.mxu0 0.0
    %357 = vmatmul.mubr.f32.gmra.mrb[0].mxu0 %v269
    %v358 = vpop.f32.mrb[0].mxu0
    %v359 = vadd.f32 %v266, %v358
    %v360 = vpop.f32.mrb[0].mxu0
    %361 = vmatprep.mubr.f32.mxu0 0.0
    %362 = vmatmul.mubr.f32.gmra.mrb[0].mxu0 %v272
    %v363 = vpop.f32.mrb[0].mxu0
    %v364 = vadd.f32 %v266, %v363
    %v365 = vpop.f32.mrb[0].mxu0
    %366 = vmatprep.mubr.f32.mxu0 0.0
    %367 = vmatmul.mubr.f32.gmra.mrb[0].mxu0 %v275
    %v368 = vpop.f32.mrb[0].mxu0
    %v369 = vadd.f32 %v266, %v368
    %v370 = vpop.f32.mrb[0].mxu0
    %371 = vmatprep.mubr.f32.mxu0 0.0
    %372 = vmatmul.mubr.f32.gmra.mrb[0].mxu0 %v278
    %v373 = vpop.f32.mrb[0].mxu0
    %v374 = vadd.f32 %v266, %v373
    %v375 = vpop.f32.mrb[0].mxu0
    %376 = vmatprep.mubr.f32.mxu0 0.0
    %377 = vmatmul.mubr.f32.gmra.mrb[0].mxu0 %v281
    %v378 = vpop.f32.mrb[0].mxu0
    %v379 = vadd.f32 %v266, %v378
    %v380 = vpop.f32.mrb[0].mxu0
    %381 = vmatprep.mubr.f32.mxu0 0.0
    %382 = vmatmul.mubr.f32.gmra.mrb[0].mxu0 %v284
    %v383 = vpop.f32.mrb[0].mxu0
    %v384 = vadd.f32 %v266, %v383
    %v385 = vpop.f32.mrb[0].mxu0
    %386 = vmatprep.mubr.f32.mxu0 0.0
    %387 = vmatmul.mubr.f32.gmra.mrb[0].mxu0 %v287
    %v388 = vpop.f32.mrb[0].mxu0
    %v389 = vadd.f32 %v266, %v388
    %v390 = vpop.f32.mrb[0].mxu0
    %391 = vmatprep.mubr.f32.mxu0 0.0
    %392 = vmatmul.mubr.f32.gmra.mrb[0].mxu0 %v290
    %v393 = vpop.f32.mrb[0].mxu0
    %v394 = vadd.f32 %v266, %v393
    %v395 = vpop.f32.mrb[0].mxu0
    %396 = vdwg.mxu0
    %397 = vst.msk [vmem:[#allocation3] sm:$0xff] %vm248, %v359
    %398 = vst.msk [vmem:[#allocation3 + $0x8] sm:$0xff] %vm248, %v364
    %399 = vst.msk [vmem:[#allocation3 + $0x10] sm:$0xff] %vm248, %v369
    %400 = vst.msk [vmem:[#allocation3 + $0x18] sm:$0xff] %vm248, %v374
    %401 = vst.msk [vmem:[#allocation3 + $0x20] sm:$0xff] %vm248, %v379
    %402 = vst.msk [vmem:[#allocation3 + $0x28] sm:$0xff] %vm248, %v384
    %403 = vst.msk [vmem:[#allocation3 + $0x30] sm:$0xff] %vm248, %v389
    %404 = vst.msk [vmem:[#allocation3 + $0x38] sm:$0xff] %vm248, %v394
    %v405 = vld [vmem:[%s9] sm:$0x1]
    %v407 = vlaneseq
    %v408 = vshrl.u32 %v407, 7
    %v409 = vsub.s32 0, %v408
    %v410 = vrot.slane %v405, %v409
    %v412 = vld [vmem:[%s8] sm:$0x1]
    %v414 = vlaneseq
    %v415 = vshrl.u32 %v414, 7
    %v416 = vsub.s32 0, %v415
    %v417 = vrot.slane %v412, %v416
    %v418 = vld [vmem:[%s5] sm:$0xff]
    %v419 = vld [vmem:[%s5 + $0x8] sm:$0xff]
    %v420 = vld [vmem:[%s10] sm:$0xff]
    %v421 = vld [vmem:[%s10 + $0x8] sm:$0xff]
    %v422 = vld [vmem:[%s11] sm:$0xff]
    %v423 = vld [vmem:[%s11 + $0x8] sm:$0xff]
    %v424 = vld [vmem:[%s11 + $0x10] sm:$0xff]
    %v425 = vld [vmem:[%s11 + $0x18] sm:$0xff]
    %v426 = vld [vmem:[%s0] sm:$0xff]
    %v427 = vld [vmem:[#allocation2] sm:$0xff]
    %v428 = vld [vmem:[#allocation3] sm:$0xff]
    %vm429 = vcmask 130048
    %v430 = vsel %vm429, %v410, 0
    %432 = vmatprep.subr.mxu0 0.0
    %433 = vmatpush1.msra.mxu0 %v418
    %434 = vmatprep.subr.mxu0 0.0
    %435 = vmatpush1.msra.mxu0 %v419
    %436 = vmatprep.subr.mxu0 0.0
    %437 = vmatpush1.msra.mxu0 0.0
    %438 = vmatprep.subr.mxu0 0.0
    %439 = vmatpush1.msra.mxu0 0.0
    %440 = vmatprep.subr.mxu0 0.0
    %441 = vmatpush1.msra.mxu0 0.0
    %442 = vmatprep.subr.mxu0 0.0
    %443 = vmatpush1.msra.mxu0 0.0
    %444 = vmatprep.subr.mxu0 0.0
    %445 = vmatpush1.msra.mxu0 0.0
    %446 = vmatprep.subr.mxu0 0.0
    %447 = vmatpush1.msra.mxu0 0.0
    %448 = vmatprep.subr.mxu0 0.0
    %449 = vmatpush1.msra.mxu0 0.0
    %450 = vmatprep.subr.mxu0 0.0
    %451 = vmatpush1.msra.mxu0 0.0
    %452 = vmatprep.subr.mxu0 0.0
    %453 = vmatpush1.msra.mxu0 0.0
    %454 = vmatprep.subr.mxu0 0.0
    %455 = vmatpush1.msra.mxu0 0.0
    %456 = vmatprep.subr.mxu0 0.0
    %457 = vmatpush1.msra.mxu0 0.0
    %458 = vmatprep.subr.mxu0 0.0
    %459 = vmatpush1.msra.mxu0 0.0
    %460 = vmatprep.subr.mxu0 0.0
    %461 = vmatpush1.msra.mxu0 0.0
    %462 = vmatprep.subr.mxu0 0.0
    %463 = vmatpush1.msra.mxu0 0.0
    %464 = vmatprep.subr.mxu0 0.0
    %465 = vmatpush1.msra.mxu0 0.0
    %466 = vmatprep.subr.mxu0 0.0
    %467 = vmatpush1.msra.mxu0 0.0
    %468 = vmatprep.subr.mxu0 0.0
    %469 = vmatpush1.msra.mxu0 0.0
    %470 = vmatprep.subr.mxu0 0.0
    %471 = vmatpush1.msra.mxu0 0.0
    %472 = vmatprep.subr.mxu0 0.0
    %473 = vmatpush1.msra.mxu0 0.0
    %474 = vmatprep.subr.mxu0 0.0
    %475 = vmatpush1.msra.mxu0 0.0
    %476 = vmatprep.subr.mxu0 0.0
    %477 = vmatpush1.msra.mxu0 0.0
    %478 = vmatprep.subr.mxu0 0.0
    %479 = vmatpush1.msra.mxu0 0.0
    %480 = vmatprep.subr.mxu0 0.0
    %481 = vmatpush1.msra.mxu0 0.0
    %482 = vmatprep.subr.mxu0 0.0
    %483 = vmatpush1.msra.mxu0 0.0
    %484 = vmatprep.subr.mxu0 0.0
    %485 = vmatpush1.msra.mxu0 0.0
    %486 = vmatprep.subr.mxu0 0.0
    %487 = vmatpush1.msra.mxu0 0.0
    %488 = vmatprep.subr.mxu0 0.0
    %489 = vmatpush1.msra.mxu0 0.0
    %490 = vmatprep.subr.mxu0 0.0
    %491 = vmatpush1.msra.mxu0 0.0
    %492 = vmatprep.subr.mxu0 0.0
    %493 = vmatpush1.msra.mxu0 0.0
    %494 = vmatprep.subr.mxu0 0.0
    %495 = vmatpush1.msra.mxu0 0.0
    %496 = vmatprep.mubr.f32.mxu0 0.0
    %497 = vmatmul.mubr.f32.gmra.mrb[0].mxu0 %v430
    %v498 = vpop.f32.mrb[0].mxu0
    %v499 = vadd.f32 %v428, %v498
    %v500 = vpop.f32.mrb[0].mxu0
    %501 = vdwg.mxu0
    %v502 = vmul.f32 %v499, 2.0
    %v503 = vxor.u32 %v502, 2147483648
    %v504 = vmul.f32 %v503, 1.442695
    %v505 = vpow.pop %v504
    %v506 = vadd.f32 %v505, 1.0
    %v507 = vrcp.pop %v506
    %v508 = vmul.f32 1.0, %v507
    %v509 = vsub.f32 1.0, %v508
    %510 = vrot.lane.b32.xlu0 %v417, 16
    %v511 = vpop.permute.xlu0 %510
    %v513 = vmul.f32 %v509, %v511
    %514 = vrot.lane.b32.xlu0 %v410, 16
    %v515 = vpop.permute.xlu0 %514
    %v517 = vmul.f32 %v508, %v515
    %v518 = vadd.f32 %v513, %v517
    %520 = vrot.lane.b32.xlu0 %v518, 112
    %v521 = vpop.permute.xlu0 %520
    %v522 = vsel %vm429, %v521, 0
    %524 = vmatprep.subr.mxu0 0.0
    %525 = vmatpush1.msra.mxu0 %v420
    %526 = vmatprep.subr.mxu0 0.0
    %527 = vmatpush1.msra.mxu0 %v421
    %528 = vmatprep.subr.mxu0 0.0
    %529 = vmatpush1.msra.mxu0 0.0
    %530 = vmatprep.subr.mxu0 0.0
    %531 = vmatpush1.msra.mxu0 0.0
    %532 = vmatprep.subr.mxu0 0.0
    %533 = vmatpush1.msra.mxu0 0.0
    %534 = vmatprep.subr.mxu0 0.0
    %535 = vmatpush1.msra.mxu0 0.0
    %536 = vmatprep.subr.mxu0 0.0
    %537 = vmatpush1.msra.mxu0 0.0
    %538 = vmatprep.subr.mxu0 0.0
    %539 = vmatpush1.msra.mxu0 0.0
    %540 = vmatprep.subr.mxu0 0.0
    %541 = vmatpush1.msra.mxu0 0.0
    %542 = vmatprep.subr.mxu0 0.0
    %543 = vmatpush1.msra.mxu0 0.0
    %544 = vmatprep.subr.mxu0 0.0
    %545 = vmatpush1.msra.mxu0 0.0
    %546 = vmatprep.subr.mxu0 0.0
    %547 = vmatpush1.msra.mxu0 0.0
    %548 = vmatprep.subr.mxu0 0.0
    %549 = vmatpush1.msra.mxu0 0.0
    %550 = vmatprep.subr.mxu0 0.0
    %551 = vmatpush1.msra.mxu0 0.0
    %552 = vmatprep.subr.mxu0 0.0
    %553 = vmatpush1.msra.mxu0 0.0
    %554 = vmatprep.subr.mxu0 0.0
    %555 = vmatpush1.msra.mxu0 0.0
    %556 = vmatprep.subr.mxu0 0.0
    %557 = vmatpush1.msra.mxu0 0.0
    %558 = vmatprep.subr.mxu0 0.0
    %559 = vmatpush1.msra.mxu0 0.0
    %560 = vmatprep.subr.mxu0 0.0
    %561 = vmatpush1.msra.mxu0 0.0
    %562 = vmatprep.subr.mxu0 0.0
    %563 = vmatpush1.msra.mxu0 0.0
    %564 = vmatprep.subr.mxu0 0.0
    %565 = vmatpush1.msra.mxu0 0.0
    %566 = vmatprep.subr.mxu0 0.0
    %567 = vmatpush1.msra.mxu0 0.0
    %568 = vmatprep.subr.mxu0 0.0
    %569 = vmatpush1.msra.mxu0 0.0
    %570 = vmatprep.subr.mxu0 0.0
    %571 = vmatpush1.msra.mxu0 0.0
    %572 = vmatprep.subr.mxu0 0.0
    %573 = vmatpush1.msra.mxu0 0.0
    %574 = vmatprep.subr.mxu0 0.0
    %575 = vmatpush1.msra.mxu0 0.0
    %576 = vmatprep.subr.mxu0 0.0
    %577 = vmatpush1.msra.mxu0 0.0
    %578 = vmatprep.subr.mxu0 0.0
    %579 = vmatpush1.msra.mxu0 0.0
    %580 = vmatprep.subr.mxu0 0.0
    %581 = vmatpush1.msra.mxu0 0.0
    %582 = vmatprep.subr.mxu0 0.0
    %583 = vmatpush1.msra.mxu0 0.0
    %584 = vmatprep.subr.mxu0 0.0
    %585 = vmatpush1.msra.mxu0 0.0
    %586 = vmatprep.subr.mxu0 0.0
    %587 = vmatpush1.msra.mxu0 0.0
    %588 = vmatprep.mubr.f32.mxu0 0.0
    %589 = vmatmul.mubr.f32.gmra.mrb[0].mxu0 %v522
    %v590 = vpop.f32.mrb[0].mxu0
    %v591 = vadd.f32 0.0, %v590
    %v592 = vpop.f32.mrb[0].mxu0
    %593 = vdwg.mxu0
    %v594 = vmul.f32 %v427, %v591
    %596 = vrot.lane.b32.xlu0 %v591, 96
    %v597 = vpop.permute.xlu0 %596
    %v600 = vsel %vm248, %v594, 0
    %602 = vmatprep.subr.mxu0 0.0
    %603 = vmatpush1.msra.mxu0 %v422
    %604 = vmatprep.subr.mxu0 0.0
    %605 = vmatpush1.msra.mxu0 %v423
    %606 = vmatprep.subr.mxu0 0.0
    %607 = vmatpush1.msra.mxu0 %v424
    %608 = vmatprep.subr.mxu0 0.0
    %609 = vmatpush1.msra.mxu0 %v425
    %610 = vmatprep.subr.mxu0 0.0
    %611 = vmatpush1.msra.mxu0 0.0
    %612 = vmatprep.subr.mxu0 0.0
    %613 = vmatpush1.msra.mxu0 0.0
    %614 = vmatprep.subr.mxu0 0.0
    %615 = vmatpush1.msra.mxu0 0.0
    %616 = vmatprep.subr.mxu0 0.0
    %617 = vmatpush1.msra.mxu0 0.0
    %618 = vmatprep.subr.mxu0 0.0
    %619 = vmatpush1.msra.mxu0 0.0
    %620 = vmatprep.subr.mxu0 0.0
    %621 = vmatpush1.msra.mxu0 0.0
    %622 = vmatprep.subr.mxu0 0.0
    %623 = vmatpush1.msra.mxu0 0.0
    %624 = vmatprep.subr.mxu0 0.0
    %625 = vmatpush1.msra.mxu0 0.0
    %626 = vmatprep.subr.mxu0 0.0
    %627 = vmatpush1.msra.mxu0 0.0
    %628 = vmatprep.subr.mxu0 0.0
    %629 = vmatpush1.msra.mxu0 0.0
    %630 = vmatprep.subr.mxu0 0.0
    %631 = vmatpush1.msra.mxu0 0.0
    %632 = vmatprep.subr.mxu0 0.0
    %633 = vmatpush1.msra.mxu0 0.0
    %634 = vmatprep.subr.mxu0 0.0
    %635 = vmatpush1.msra.mxu0 0.0
    %636 = vmatprep.subr.mxu0 0.0
    %637 = vmatpush1.msra.mxu0 0.0
    %638 = vmatprep.subr.mxu0 0.0
    %639 = vmatpush1.msra.mxu0 0.0
    %640 = vmatprep.subr.mxu0 0.0
    %641 = vmatpush1.msra.mxu0 0.0
    %642 = vmatprep.subr.mxu0 0.0
    %643 = vmatpush1.msra.mxu0 0.0
    %644 = vmatprep.subr.mxu0 0.0
    %645 = vmatpush1.msra.mxu0 0.0
    %646 = vmatprep.subr.mxu0 0.0
    %647 = vmatpush1.msra.mxu0 0.0
    %648 = vmatprep.subr.mxu0 0.0
    %649 = vmatpush1.msra.mxu0 0.0
    %650 = vmatprep.subr.mxu0 0.0
    %651 = vmatpush1.msra.mxu0 0.0
    %652 = vmatprep.subr.mxu0 0.0
    %653 = vmatpush1.msra.mxu0 0.0
    %654 = vmatprep.subr.mxu0 0.0
    %655 = vmatpush1.msra.mxu0 0.0
    %656 = vmatprep.subr.mxu0 0.0
    %657 = vmatpush1.msra.mxu0 0.0
    %658 = vmatprep.subr.mxu0 0.0
    %659 = vmatpush1.msra.mxu0 0.0
    %660 = vmatprep.subr.mxu0 0.0
    %661 = vmatpush1.msra.mxu0 0.0
    %662 = vmatprep.subr.mxu0 0.0
    %663 = vmatpush1.msra.mxu0 0.0
    %664 = vmatprep.subr.mxu0 0.0
    %665 = vmatpush1.msra.mxu0 0.0
    %666 = vmatprep.mubr.f32.mxu0 0.0
    %667 = vmatmul.mubr.f32.gmra.mrb[0].mxu0 %v600
    %v668 = vpop.f32.mrb[0].mxu0
    %v669 = vadd.f32 %v597, %v668
    %v670 = vpop.f32.mrb[0].mxu0
    %671 = vdwg.mxu0
    %v672 = vmax.f32 %v669, 0.0
    %v673 = vmul.f32 %v509, %v410
    %v674 = vmul.f32 %v508, %v672
    %v675 = vadd.f32 %v673, %v674
    %vm676 = vcmp.eq.s32.totalorder %v426, 1
    %v677 = vsel %vm676, 1, 0
    %678 = vset.pattern.permute.xlu0 0
    %679 = vperm.xlu0 %678, %v677
    %v680 = vpop.permute.xlu0 %679
    %vm681 = vcmp.eq.s32.totalorder %v680, 1
    %v682 = vsel %vm681, %v675, %v410
    %s683 = scalar_lea.vmem [#allocation2], 8
    %v684 = vld [vmem:[%s683] sm:$0xff]
    %s685 = scalar_lea.vmem [#allocation3], 8
    %v686 = vld [vmem:[%s685] sm:$0xff]
    %v688 = vsel %vm429, %v675, 0
    %690 = vmatprep.subr.mxu0 0.0
    %691 = vmatpush1.msra.mxu0 %v418
    %692 = vmatprep.subr.mxu0 0.0
    %693 = vmatpush1.msra.mxu0 %v419
    %694 = vmatprep.subr.mxu0 0.0
    %695 = vmatpush1.msra.mxu0 0.0
    %696 = vmatprep.subr.mxu0 0.0
    %697 = vmatpush1.msra.mxu0 0.0
    %698 = vmatprep.subr.mxu0 0.0
    %699 = vmatpush1.msra.mxu0 0.0
    %700 = vmatprep.subr.mxu0 0.0
    %701 = vmatpush1.msra.mxu0 0.0
    %702 = vmatprep.subr.mxu0 0.0
    %703 = vmatpush1.msra.mxu0 0.0
    %704 = vmatprep.subr.mxu0 0.0
    %705 = vmatpush1.msra.mxu0 0.0
    %706 = vmatprep.subr.mxu0 0.0
    %707 = vmatpush1.msra.mxu0 0.0
    %708 = vmatprep.subr.mxu0 0.0
    %709 = vmatpush1.msra.mxu0 0.0
    %710 = vmatprep.subr.mxu0 0.0
    %711 = vmatpush1.msra.mxu0 0.0
    %712 = vmatprep.subr.mxu0 0.0
    %713 = vmatpush1.msra.mxu0 0.0
    %714 = vmatprep.subr.mxu0 0.0
    %715 = vmatpush1.msra.mxu0 0.0
    %716 = vmatprep.subr.mxu0 0.0
    %717 = vmatpush1.msra.mxu0 0.0
    %718 = vmatprep.subr.mxu0 0.0
    %719 = vmatpush1.msra.mxu0 0.0
    %720 = vmatprep.subr.mxu0 0.0
    %721 = vmatpush1.msra.mxu0 0.0
    %722 = vmatprep.subr.mxu0 0.0
    %723 = vmatpush1.msra.mxu0 0.0
    %724 = vmatprep.subr.mxu0 0.0
    %725 = vmatpush1.msra.mxu0 0.0
    %726 = vmatprep.subr.mxu0 0.0
    %727 = vmatpush1.msra.mxu0 0.0
    %728 = vmatprep.subr.mxu0 0.0
    %729 = vmatpush1.msra.mxu0 0.0
    %730 = vmatprep.subr.mxu0 0.0
    %731 = vmatpush1.msra.mxu0 0.0
    %732 = vmatprep.subr.mxu0 0.0
    %733 = vmatpush1.msra.mxu0 0.0
    %734 = vmatprep.subr.mxu0 0.0
    %735 = vmatpush1.msra.mxu0 0.0
    %736 = vmatprep.subr.mxu0 0.0
    %737 = vmatpush1.msra.mxu0 0.0
    %738 = vmatprep.subr.mxu0 0.0
    %739 = vmatpush1.msra.mxu0 0.0
    %740 = vmatprep.subr.mxu0 0.0
    %741 = vmatpush1.msra.mxu0 0.0
    %742 = vmatprep.subr.mxu0 0.0
    %743 = vmatpush1.msra.mxu0 0.0
    %744 = vmatprep.subr.mxu0 0.0
    %745 = vmatpush1.msra.mxu0 0.0
    %746 = vmatprep.subr.mxu0 0.0
    %747 = vmatpush1.msra.mxu0 0.0
    %748 = vmatprep.subr.mxu0 0.0
    %749 = vmatpush1.msra.mxu0 0.0
    %750 = vmatprep.subr.mxu0 0.0
    %751 = vmatpush1.msra.mxu0 0.0
    %752 = vmatprep.subr.mxu0 0.0
    %753 = vmatpush1.msra.mxu0 0.0
    %754 = vmatprep.mubr.f32.mxu0 0.0
    %755 = vmatmul.mubr.f32.gmra.mrb[0].mxu0 %v688
    %v756 = vpop.f32.mrb[0].mxu0
    %v757 = vadd.f32 %v686, %v756
    %v758 = vpop.f32.mrb[0].mxu0
    %759 = vdwg.mxu0
    %v760 = vmul.f32 %v757, 2.0
    %v761 = vxor.u32 %v760, 2147483648
    %v762 = vmul.f32 %v761, 1.442695
    %v763 = vpow.pop %v762
    %v764 = vadd.f32 %v763, 1.0
    %v765 = vrcp.pop %v764
    %v766 = vmul.f32 1.0, %v765
    %v767 = vsub.f32 1.0, %v766
    %v768 = vmul.f32 %v767, %v511
    %769 = vrot.lane.b32.xlu0 %v675, 16
    %v770 = vpop.permute.xlu0 %769
    %v772 = vmul.f32 %v766, %v770
    %v773 = vadd.f32 %v768, %v772
    %775 = vrot.lane.b32.xlu0 %v773, 112
    %v776 = vpop.permute.xlu0 %775
    %v777 = vsel %vm429, %v776, 0
    %779 = vmatprep.subr.mxu0 0.0
    %780 = vmatpush1.msra.mxu0 %v420
    %781 = vmatprep.subr.mxu0 0.0
    %782 = vmatpush1.msra.mxu0 %v421
    %783 = vmatprep.subr.mxu0 0.0
    %784 = vmatpush1.msra.mxu0 0.0
    %785 = vmatprep.subr.mxu0 0.0
    %786 = vmatpush1.msra.mxu0 0.0
    %787 = vmatprep.subr.mxu0 0.0
    %788 = vmatpush1.msra.mxu0 0.0
    %789 = vmatprep.subr.mxu0 0.0
    %790 = vmatpush1.msra.mxu0 0.0
    %791 = vmatprep.subr.mxu0 0.0
    %792 = vmatpush1.msra.mxu0 0.0
    %793 = vmatprep.subr.mxu0 0.0
    %794 = vmatpush1.msra.mxu0 0.0
    %795 = vmatprep.subr.mxu0 0.0
    %796 = vmatpush1.msra.mxu0 0.0
    %797 = vmatprep.subr.mxu0 0.0
    %798 = vmatpush1.msra.mxu0 0.0
    %799 = vmatprep.subr.mxu0 0.0
    %800 = vmatpush1.msra.mxu0 0.0
    %801 = vmatprep.subr.mxu0 0.0
    %802 = vmatpush1.msra.mxu0 0.0
    %803 = vmatprep.subr.mxu0 0.0
    %804 = vmatpush1.msra.mxu0 0.0
    %805 = vmatprep.subr.mxu0 0.0
    %806 = vmatpush1.msra.mxu0 0.0
    %807 = vmatprep.subr.mxu0 0.0
    %808 = vmatpush1.msra.mxu0 0.0
    %809 = vmatprep.subr.mxu0 0.0
    %810 = vmatpush1.msra.mxu0 0.0
    %811 = vmatprep.subr.mxu0 0.0
    %812 = vmatpush1.msra.mxu0 0.0
    %813 = vmatprep.subr.mxu0 0.0
    %814 = vmatpush1.msra.mxu0 0.0
    %815 = vmatprep.subr.mxu0 0.0
    %816 = vmatpush1.msra.mxu0 0.0
    %817 = vmatprep.subr.mxu0 0.0
    %818 = vmatpush1.msra.mxu0 0.0
    %819 = vmatprep.subr.mxu0 0.0
    %820 = vmatpush1.msra.mxu0 0.0
    %821 = vmatprep.subr.mxu0 0.0
    %822 = vmatpush1.msra.mxu0 0.0
    %823 = vmatprep.subr.mxu0 0.0
    %824 = vmatpush1.msra.mxu0 0.0
    %825 = vmatprep.subr.mxu0 0.0
    %826 = vmatpush1.msra.mxu0 0.0
    %827 = vmatprep.subr.mxu0 0.0
    %828 = vmatpush1.msra.mxu0 0.0
    %829 = vmatprep.subr.mxu0 0.0
    %830 = vmatpush1.msra.mxu0 0.0
    %831 = vmatprep.subr.mxu0 0.0
    %832 = vmatpush1.msra.mxu0 0.0
    %833 = vmatprep.subr.mxu0 0.0
    %834 = vmatpush1.msra.mxu0 0.0
    %835 = vmatprep.subr.mxu0 0.0
    %836 = vmatpush1.msra.mxu0 0.0
    %837 = vmatprep.subr.mxu0 0.0
    %838 = vmatpush1.msra.mxu0 0.0
    %839 = vmatprep.subr.mxu0 0.0
    %840 = vmatpush1.msra.mxu0 0.0
    %841 = vmatprep.subr.mxu0 0.0
    %842 = vmatpush1.msra.mxu0 0.0
    %843 = vmatprep.mubr.f32.mxu0 0.0
    %844 = vmatmul.mubr.f32.gmra.mrb[0].mxu0 %v777
    %v845 = vpop.f32.mrb[0].mxu0
    %v846 = vadd.f32 0.0, %v845
    %v847 = vpop.f32.mrb[0].mxu0
    %848 = vdwg.mxu0
    %v849 = vmul.f32 %v684, %v846
    %851 = vrot.lane.b32.xlu0 %v846, 96
    %v852 = vpop.permute.xlu0 %851
    %v855 = vsel %vm248, %v849, 0
    %857 = vmatprep.subr.mxu0 0.0
    %858 = vmatpush1.msra.mxu0 %v422
    %859 = vmatprep.subr.mxu0 0.0
    %860 = vmatpush1.msra.mxu0 %v423
    %861 = vmatprep.subr.mxu0 0.0
    %862 = vmatpush1.msra.mxu0 %v424
    %863 = vmatprep.subr.mxu0 0.0
    %864 = vmatpush1.msra.mxu0 %v425
    %865 = vmatprep.subr.mxu0 0.0
    %866 = vmatpush1.msra.mxu0 0.0
    %867 = vmatprep.subr.mxu0 0.0
    %868 = vmatpush1.msra.mxu0 0.0
    %869 = vmatprep.subr.mxu0 0.0
    %870 = vmatpush1.msra.mxu0 0.0
    %871 = vmatprep.subr.mxu0 0.0
    %872 = vmatpush1.msra.mxu0 0.0
    %873 = vmatprep.subr.mxu0 0.0
    %874 = vmatpush1.msra.mxu0 0.0
    %875 = vmatprep.subr.mxu0 0.0
    %876 = vmatpush1.msra.mxu0 0.0
    %877 = vmatprep.subr.mxu0 0.0
    %878 = vmatpush1.msra.mxu0 0.0
    %879 = vmatprep.subr.mxu0 0.0
    %880 = vmatpush1.msra.mxu0 0.0
    %881 = vmatprep.subr.mxu0 0.0
    %882 = vmatpush1.msra.mxu0 0.0
    %883 = vmatprep.subr.mxu0 0.0
    %884 = vmatpush1.msra.mxu0 0.0
    %885 = vmatprep.subr.mxu0 0.0
    %886 = vmatpush1.msra.mxu0 0.0
    %887 = vmatprep.subr.mxu0 0.0
    %888 = vmatpush1.msra.mxu0 0.0
    %889 = vmatprep.subr.mxu0 0.0
    %890 = vmatpush1.msra.mxu0 0.0
    %891 = vmatprep.subr.mxu0 0.0
    %892 = vmatpush1.msra.mxu0 0.0
    %893 = vmatprep.subr.mxu0 0.0
    %894 = vmatpush1.msra.mxu0 0.0
    %895 = vmatprep.subr.mxu0 0.0
    %896 = vmatpush1.msra.mxu0 0.0
    %897 = vmatprep.subr.mxu0 0.0
    %898 = vmatpush1.msra.mxu0 0.0
    %899 = vmatprep.subr.mxu0 0.0
    %900 = vmatpush1.msra.mxu0 0.0
    %901 = vmatprep.subr.mxu0 0.0
    %902 = vmatpush1.msra.mxu0 0.0
    %903 = vmatprep.subr.mxu0 0.0
    %904 = vmatpush1.msra.mxu0 0.0
    %905 = vmatprep.subr.mxu0 0.0
    %906 = vmatpush1.msra.mxu0 0.0
    %907 = vmatprep.subr.mxu0 0.0
    %908 = vmatpush1.msra.mxu0 0.0
    %909 = vmatprep.subr.mxu0 0.0
    %910 = vmatpush1.msra.mxu0 0.0
    %911 = vmatprep.subr.mxu0 0.0
    %912 = vmatpush1.msra.mxu0 0.0
    %913 = vmatprep.subr.mxu0 0.0
    %914 = vmatpush1.msra.mxu0 0.0
    %915 = vmatprep.subr.mxu0 0.0
    %916 = vmatpush1.msra.mxu0 0.0
    %917 = vmatprep.subr.mxu0 0.0
    %918 = vmatpush1.msra.mxu0 0.0
    %919 = vmatprep.subr.mxu0 0.0
    %920 = vmatpush1.msra.mxu0 0.0
    %921 = vmatprep.mubr.f32.mxu0 0.0
    %922 = vmatmul.mubr.f32.gmra.mrb[0].mxu0 %v855
    %v923 = vpop.f32.mrb[0].mxu0
    %v924 = vadd.f32 %v852, %v923
    %v925 = vpop.f32.mrb[0].mxu0
    %926 = vdwg.mxu0
    %v927 = vmax.f32 %v924, 0.0
    %v928 = vmul.f32 %v767, %v675
    %v929 = vmul.f32 %v766, %v927
    %v930 = vadd.f32 %v928, %v929
    %vm931 = vcmp.eq.s32.totalorder %v426, 2
    %v932 = vsel %vm931, 1, 0
    %933 = vset.pattern.permute.xlu0 0
    %934 = vperm.xlu0 %933, %v932
    %v935 = vpop.permute.xlu0 %934
    %vm936 = vcmp.eq.s32.totalorder %v935, 1
    %v937 = vsel %vm936, %v930, %v682
    %s938 = scalar_lea.vmem [#allocation2], 16
    %v939 = vld [vmem:[%s938] sm:$0xff]
    %s940 = scalar_lea.vmem [#allocation3], 16
    %v941 = vld [vmem:[%s940] sm:$0xff]
    %v943 = vsel %vm429, %v930, 0
    %945 = vmatprep.subr.mxu0 0.0
    %946 = vmatpush1.msra.mxu0 %v418
    %947 = vmatprep.subr.mxu0 0.0
    %948 = vmatpush1.msra.mxu0 %v419
    %949 = vmatprep.subr.mxu0 0.0
    %950 = vmatpush1.msra.mxu0 0.0
    %951 = vmatprep.subr.mxu0 0.0
    %952 = vmatpush1.msra.mxu0 0.0
    %953 = vmatprep.subr.mxu0 0.0
    %954 = vmatpush1.msra.mxu0 0.0
    %955 = vmatprep.subr.mxu0 0.0
    %956 = vmatpush1.msra.mxu0 0.0
    %957 = vmatprep.subr.mxu0 0.0
    %958 = vmatpush1.msra.mxu0 0.0
    %959 = vmatprep.subr.mxu0 0.0
    %960 = vmatpush1.msra.mxu0 0.0
    %961 = vmatprep.subr.mxu0 0.0
    %962 = vmatpush1.msra.mxu0 0.0
    %963 = vmatprep.subr.mxu0 0.0
    %964 = vmatpush1.msra.mxu0 0.0
    %965 = vmatprep.subr.mxu0 0.0
    %966 = vmatpush1.msra.mxu0 0.0
    %967 = vmatprep.subr.mxu0 0.0
    %968 = vmatpush1.msra.mxu0 0.0
    %969 = vmatprep.subr.mxu0 0.0
    %970 = vmatpush1.msra.mxu0 0.0
    %971 = vmatprep.subr.mxu0 0.0
    %972 = vmatpush1.msra.mxu0 0.0
    %973 = vmatprep.subr.mxu0 0.0
    %974 = vmatpush1.msra.mxu0 0.0
    %975 = vmatprep.subr.mxu0 0.0
    %976 = vmatpush1.msra.mxu0 0.0
    %977 = vmatprep.subr.mxu0 0.0
    %978 = vmatpush1.msra.mxu0 0.0
    %979 = vmatprep.subr.mxu0 0.0
    %980 = vmatpush1.msra.mxu0 0.0
    %981 = vmatprep.subr.mxu0 0.0
    %982 = vmatpush1.msra.mxu0 0.0
    %983 = vmatprep.subr.mxu0 0.0
    %984 = vmatpush1.msra.mxu0 0.0
    %985 = vmatprep.subr.mxu0 0.0
    %986 = vmatpush1.msra.mxu0 0.0
    %987 = vmatprep.subr.mxu0 0.0
    %988 = vmatpush1.msra.mxu0 0.0
    %989 = vmatprep.subr.mxu0 0.0
    %990 = vmatpush1.msra.mxu0 0.0
    %991 = vmatprep.subr.mxu0 0.0
    %992 = vmatpush1.msra.mxu0 0.0
    %993 = vmatprep.subr.mxu0 0.0
    %994 = vmatpush1.msra.mxu0 0.0
    %995 = vmatprep.subr.mxu0 0.0
    %996 = vmatpush1.msra.mxu0 0.0
    %997 = vmatprep.subr.mxu0 0.0
    %998 = vmatpush1.msra.mxu0 0.0
    %999 = vmatprep.subr.mxu0 0.0
    %1000 = vmatpush1.msra.mxu0 0.0
    %1001 = vmatprep.subr.mxu0 0.0
    %1002 = vmatpush1.msra.mxu0 0.0
    %1003 = vmatprep.subr.mxu0 0.0
    %1004 = vmatpush1.msra.mxu0 0.0
    %1005 = vmatprep.subr.mxu0 0.0
    %1006 = vmatpush1.msra.mxu0 0.0
    %1007 = vmatprep.subr.mxu0 0.0
    %1008 = vmatpush1.msra.mxu0 0.0
    %1009 = vmatprep.mubr.f32.mxu0 0.0
    %1010 = vmatmul.mubr.f32.gmra.mrb[0].mxu0 %v943
    %v1011 = vpop.f32.mrb[0].mxu0
    %v1012 = vadd.f32 %v941, %v1011
    %v1013 = vpop.f32.mrb[0].mxu0
    %1014 = vdwg.mxu0
    %v1015 = vmul.f32 %v1012, 2.0
    %v1016 = vxor.u32 %v1015, 2147483648
    %v1017 = vmul.f32 %v1016, 1.442695
    %v1018 = vpow.pop %v1017
    %v1019 = vadd.f32 %v1018, 1.0
    %v1020 = vrcp.pop %v1019
    %v1021 = vmul.f32 1.0, %v1020
    %v1022 = vsub.f32 1.0, %v1021
    %v1023 = vmul.f32 %v1022, %v511
    %1024 = vrot.lane.b32.xlu0 %v930, 16
    %v1025 = vpop.permute.xlu0 %1024
    %v1027 = vmul.f32 %v1021, %v1025
    %v1028 = vadd.f32 %v1023, %v1027
    %1030 = vrot.lane.b32.xlu0 %v1028, 112
    %v1031 = vpop.permute.xlu0 %1030
    %v1032 = vsel %vm429, %v1031, 0
    %1034 = vmatprep.subr.mxu0 0.0
    %1035 = vmatpush1.msra.mxu0 %v420
    %1036 = vmatprep.subr.mxu0 0.0
    %1037 = vmatpush1.msra.mxu0 %v421
    %1038 = vmatprep.subr.mxu0 0.0
    %1039 = vmatpush1.msra.mxu0 0.0
    %1040 = vmatprep.subr.mxu0 0.0
    %1041 = vmatpush1.msra.mxu0 0.0
    %1042 = vmatprep.subr.mxu0 0.0
    %1043 = vmatpush1.msra.mxu0 0.0
    %1044 = vmatprep.subr.mxu0 0.0
    %1045 = vmatpush1.msra.mxu0 0.0
    %1046 = vmatprep.subr.mxu0 0.0
    %1047 = vmatpush1.msra.mxu0 0.0
    %1048 = vmatprep.subr.mxu0 0.0
    %1049 = vmatpush1.msra.mxu0 0.0
    %1050 = vmatprep.subr.mxu0 0.0
    %1051 = vmatpush1.msra.mxu0 0.0
    %1052 = vmatprep.subr.mxu0 0.0
    %1053 = vmatpush1.msra.mxu0 0.0
    %1054 = vmatprep.subr.mxu0 0.0
    %1055 = vmatpush1.msra.mxu0 0.0
    %1056 = vmatprep.subr.mxu0 0.0
    %1057 = vmatpush1.msra.mxu0 0.0
    %1058 = vmatprep.subr.mxu0 0.0
    %1059 = vmatpush1.msra.mxu0 0.0
    %1060 = vmatprep.subr.mxu0 0.0
    %1061 = vmatpush1.msra.mxu0 0.0
    %1062 = vmatprep.subr.mxu0 0.0
    %1063 = vmatpush1.msra.mxu0 0.0
    %1064 = vmatprep.subr.mxu0 0.0
    %1065 = vmatpush1.msra.mxu0 0.0
    %1066 = vmatprep.subr.mxu0 0.0
    %1067 = vmatpush1.msra.mxu0 0.0
    %1068 = vmatprep.subr.mxu0 0.0
    %1069 = vmatpush1.msra.mxu0 0.0
    %1070 = vmatprep.subr.mxu0 0.0
    %1071 = vmatpush1.msra.mxu0 0.0
    %1072 = vmatprep.subr.mxu0 0.0
    %1073 = vmatpush1.msra.mxu0 0.0
    %1074 = vmatprep.subr.mxu0 0.0
    %1075 = vmatpush1.msra.mxu0 0.0
    %1076 = vmatprep.subr.mxu0 0.0
    %1077 = vmatpush1.msra.mxu0 0.0
    %1078 = vmatprep.subr.mxu0 0.0
    %1079 = vmatpush1.msra.mxu0 0.0
    %1080 = vmatprep.subr.mxu0 0.0
    %1081 = vmatpush1.msra.mxu0 0.0
    %1082 = vmatprep.subr.mxu0 0.0
    %1083 = vmatpush1.msra.mxu0 0.0
    %1084 = vmatprep.subr.mxu0 0.0
    %1085 = vmatpush1.msra.mxu0 0.0
    %1086 = vmatprep.subr.mxu0 0.0
    %1087 = vmatpush1.msra.mxu0 0.0
    %1088 = vmatprep.subr.mxu0 0.0
    %1089 = vmatpush1.msra.mxu0 0.0
    %1090 = vmatprep.subr.mxu0 0.0
    %1091 = vmatpush1.msra.mxu0 0.0
    %1092 = vmatprep.subr.mxu0 0.0
    %1093 = vmatpush1.msra.mxu0 0.0
    %1094 = vmatprep.subr.mxu0 0.0
    %1095 = vmatpush1.msra.mxu0 0.0
    %1096 = vmatprep.subr.mxu0 0.0
    %1097 = vmatpush1.msra.mxu0 0.0
    %1098 = vmatprep.mubr.f32.mxu0 0.0
    %1099 = vmatmul.mubr.f32.gmra.mrb[0].mxu0 %v1032
    %v1100 = vpop.f32.mrb[0].mxu0
    %v1101 = vadd.f32 0.0, %v1100
    %v1102 = vpop.f32.mrb[0].mxu0
    %1103 = vdwg.mxu0
    %v1104 = vmul.f32 %v939, %v1101
    %1106 = vrot.lane.b32.xlu0 %v1101, 96
    %v1107 = vpop.permute.xlu0 %1106
    %v1110 = vsel %vm248, %v1104, 0
    %1112 = vmatprep.subr.mxu0 0.0
    %1113 = vmatpush1.msra.mxu0 %v422
    %1114 = vmatprep.subr.mxu0 0.0
    %1115 = vmatpush1.msra.mxu0 %v423
    %1116 = vmatprep.subr.mxu0 0.0
    %1117 = vmatpush1.msra.mxu0 %v424
    %1118 = vmatprep.subr.mxu0 0.0
    %1119 = vmatpush1.msra.mxu0 %v425
    %1120 = vmatprep.subr.mxu0 0.0
    %1121 = vmatpush1.msra.mxu0 0.0
    %1122 = vmatprep.subr.mxu0 0.0
    %1123 = vmatpush1.msra.mxu0 0.0
    %1124 = vmatprep.subr.mxu0 0.0
    %1125 = vmatpush1.msra.mxu0 0.0
    %1126 = vmatprep.subr.mxu0 0.0
    %1127 = vmatpush1.msra.mxu0 0.0
    %1128 = vmatprep.subr.mxu0 0.0
    %1129 = vmatpush1.msra.mxu0 0.0
    %1130 = vmatprep.subr.mxu0 0.0
    %1131 = vmatpush1.msra.mxu0 0.0
    %1132 = vmatprep.subr.mxu0 0.0
    %1133 = vmatpush1.msra.mxu0 0.0
    %1134 = vmatprep.subr.mxu0 0.0
    %1135 = vmatpush1.msra.mxu0 0.0
    %1136 = vmatprep.subr.mxu0 0.0
    %1137 = vmatpush1.msra.mxu0 0.0
    %1138 = vmatprep.subr.mxu0 0.0
    %1139 = vmatpush1.msra.mxu0 0.0
    %1140 = vmatprep.subr.mxu0 0.0
    %1141 = vmatpush1.msra.mxu0 0.0
    %1142 = vmatprep.subr.mxu0 0.0
    %1143 = vmatpush1.msra.mxu0 0.0
    %1144 = vmatprep.subr.mxu0 0.0
    %1145 = vmatpush1.msra.mxu0 0.0
    %1146 = vmatprep.subr.mxu0 0.0
    %1147 = vmatpush1.msra.mxu0 0.0
    %1148 = vmatprep.subr.mxu0 0.0
    %1149 = vmatpush1.msra.mxu0 0.0
    %1150 = vmatprep.subr.mxu0 0.0
    %1151 = vmatpush1.msra.mxu0 0.0
    %1152 = vmatprep.subr.mxu0 0.0
    %1153 = vmatpush1.msra.mxu0 0.0
    %1154 = vmatprep.subr.mxu0 0.0
    %1155 = vmatpush1.msra.mxu0 0.0
    %1156 = vmatprep.subr.mxu0 0.0
    %1157 = vmatpush1.msra.mxu0 0.0
    %1158 = vmatprep.subr.mxu0 0.0
    %1159 = vmatpush1.msra.mxu0 0.0
    %1160 = vmatprep.subr.mxu0 0.0
    %1161 = vmatpush1.msra.mxu0 0.0
    %1162 = vmatprep.subr.mxu0 0.0
    %1163 = vmatpush1.msra.mxu0 0.0
    %1164 = vmatprep.subr.mxu0 0.0
    %1165 = vmatpush1.msra.mxu0 0.0
    %1166 = vmatprep.subr.mxu0 0.0
    %1167 = vmatpush1.msra.mxu0 0.0
    %1168 = vmatprep.subr.mxu0 0.0
    %1169 = vmatpush1.msra.mxu0 0.0
    %1170 = vmatprep.subr.mxu0 0.0
    %1171 = vmatpush1.msra.mxu0 0.0
    %1172 = vmatprep.subr.mxu0 0.0
    %1173 = vmatpush1.msra.mxu0 0.0
    %1174 = vmatprep.subr.mxu0 0.0
    %1175 = vmatpush1.msra.mxu0 0.0
    %1176 = vmatprep.mubr.f32.mxu0 0.0
    %1177 = vmatmul.mubr.f32.gmra.mrb[0].mxu0 %v1110
    %v1178 = vpop.f32.mrb[0].mxu0
    %v1179 = vadd.f32 %v1107, %v1178
    %v1180 = vpop.f32.mrb[0].mxu0
    %1181 = vdwg.mxu0
    %v1182 = vmax.f32 %v1179, 0.0
    %v1183 = vmul.f32 %v1022, %v930
    %v1184 = vmul.f32 %v1021, %v1182
    %v1185 = vadd.f32 %v1183, %v1184
    %vm1186 = vcmp.eq.s32.totalorder %v426, 3
    %v1187 = vsel %vm1186, 1, 0
    %1188 = vset.pattern.permute.xlu0 0
    %1189 = vperm.xlu0 %1188, %v1187
    %v1190 = vpop.permute.xlu0 %1189
    %vm1191 = vcmp.eq.s32.totalorder %v1190, 1
    %v1192 = vsel %vm1191, %v1185, %v937
    %s1193 = scalar_lea.vmem [#allocation2], 24
    %v1194 = vld [vmem:[%s1193] sm:$0xff]
    %s1195 = scalar_lea.vmem [#allocation3], 24
    %v1196 = vld [vmem:[%s1195] sm:$0xff]
    %v1198 = vsel %vm429, %v1185, 0
    %1200 = vmatprep.subr.mxu0 0.0
    %1201 = vmatpush1.msra.mxu0 %v418
    %1202 = vmatprep.subr.mxu0 0.0
    %1203 = vmatpush1.msra.mxu0 %v419
    %1204 = vmatprep.subr.mxu0 0.0
    %1205 = vmatpush1.msra.mxu0 0.0
    %1206 = vmatprep.subr.mxu0 0.0
    %1207 = vmatpush1.msra.mxu0 0.0
    %1208 = vmatprep.subr.mxu0 0.0
    %1209 = vmatpush1.msra.mxu0 0.0
    %1210 = vmatprep.subr.mxu0 0.0
    %1211 = vmatpush1.msra.mxu0 0.0
    %1212 = vmatprep.subr.mxu0 0.0
    %1213 = vmatpush1.msra.mxu0 0.0
    %1214 = vmatprep.subr.mxu0 0.0
    %1215 = vmatpush1.msra.mxu0 0.0
    %1216 = vmatprep.subr.mxu0 0.0
    %1217 = vmatpush1.msra.mxu0 0.0
    %1218 = vmatprep.subr.mxu0 0.0
    %1219 = vmatpush1.msra.mxu0 0.0
    %1220 = vmatprep.subr.mxu0 0.0
    %1221 = vmatpush1.msra.mxu0 0.0
    %1222 = vmatprep.subr.mxu0 0.0
    %1223 = vmatpush1.msra.mxu0 0.0
    %1224 = vmatprep.subr.mxu0 0.0
    %1225 = vmatpush1.msra.mxu0 0.0
    %1226 = vmatprep.subr.mxu0 0.0
    %1227 = vmatpush1.msra.mxu0 0.0
    %1228 = vmatprep.subr.mxu0 0.0
    %1229 = vmatpush1.msra.mxu0 0.0
    %1230 = vmatprep.subr.mxu0 0.0
    %1231 = vmatpush1.msra.mxu0 0.0
    %1232 = vmatprep.subr.mxu0 0.0
    %1233 = vmatpush1.msra.mxu0 0.0
    %1234 = vmatprep.subr.mxu0 0.0
    %1235 = vmatpush1.msra.mxu0 0.0
    %1236 = vmatprep.subr.mxu0 0.0
    %1237 = vmatpush1.msra.mxu0 0.0
    %1238 = vmatprep.subr.mxu0 0.0
    %1239 = vmatpush1.msra.mxu0 0.0
    %1240 = vmatprep.subr.mxu0 0.0
    %1241 = vmatpush1.msra.mxu0 0.0
    %1242 = vmatprep.subr.mxu0 0.0
    %1243 = vmatpush1.msra.mxu0 0.0
    %1244 = vmatprep.subr.mxu0 0.0
    %1245 = vmatpush1.msra.mxu0 0.0
    %1246 = vmatprep.subr.mxu0 0.0
    %1247 = vmatpush1.msra.mxu0 0.0
    %1248 = vmatprep.subr.mxu0 0.0
    %1249 = vmatpush1.msra.mxu0 0.0
    %1250 = vmatprep.subr.mxu0 0.0
    %1251 = vmatpush1.msra.mxu0 0.0
    %1252 = vmatprep.subr.mxu0 0.0
    %1253 = vmatpush1.msra.mxu0 0.0
    %1254 = vmatprep.subr.mxu0 0.0
    %1255 = vmatpush1.msra.mxu0 0.0
    %1256 = vmatprep.subr.mxu0 0.0
    %1257 = vmatpush1.msra.mxu0 0.0
    %1258 = vmatprep.subr.mxu0 0.0
    %1259 = vmatpush1.msra.mxu0 0.0
    %1260 = vmatprep.subr.mxu0 0.0
    %1261 = vmatpush1.msra.mxu0 0.0
    %1262 = vmatprep.subr.mxu0 0.0
    %1263 = vmatpush1.msra.mxu0 0.0
    %1264 = vmatprep.mubr.f32.mxu0 0.0
    %1265 = vmatmul.mubr.f32.gmra.mrb[0].mxu0 %v1198
    %v1266 = vpop.f32.mrb[0].mxu0
    %v1267 = vadd.f32 %v1196, %v1266
    %v1268 = vpop.f32.mrb[0].mxu0
    %1269 = vdwg.mxu0
    %v1270 = vmul.f32 %v1267, 2.0
    %v1271 = vxor.u32 %v1270, 2147483648
    %v1272 = vmul.f32 %v1271, 1.442695
    %v1273 = vpow.pop %v1272
    %v1274 = vadd.f32 %v1273, 1.0
    %v1275 = vrcp.pop %v1274
    %v1276 = vmul.f32 1.0, %v1275
    %v1277 = vsub.f32 1.0, %v1276
    %v1278 = vmul.f32 %v1277, %v511
    %1279 = vrot.lane.b32.xlu0 %v1185, 16
    %v1280 = vpop.permute.xlu0 %1279
    %v1282 = vmul.f32 %v1276, %v1280
    %v1283 = vadd.f32 %v1278, %v1282
    %1285 = vrot.lane.b32.xlu0 %v1283, 112
    %v1286 = vpop.permute.xlu0 %1285
    %v1287 = vsel %vm429, %v1286, 0
    %1289 = vmatprep.subr.mxu0 0.0
    %1290 = vmatpush1.msra.mxu0 %v420
    %1291 = vmatprep.subr.mxu0 0.0
    %1292 = vmatpush1.msra.mxu0 %v421
    %1293 = vmatprep.subr.mxu0 0.0
    %1294 = vmatpush1.msra.mxu0 0.0
    %1295 = vmatprep.subr.mxu0 0.0
    %1296 = vmatpush1.msra.mxu0 0.0
    %1297 = vmatprep.subr.mxu0 0.0
    %1298 = vmatpush1.msra.mxu0 0.0
    %1299 = vmatprep.subr.mxu0 0.0
    %1300 = vmatpush1.msra.mxu0 0.0
    %1301 = vmatprep.subr.mxu0 0.0
    %1302 = vmatpush1.msra.mxu0 0.0
    %1303 = vmatprep.subr.mxu0 0.0
    %1304 = vmatpush1.msra.mxu0 0.0
    %1305 = vmatprep.subr.mxu0 0.0
    %1306 = vmatpush1.msra.mxu0 0.0
    %1307 = vmatprep.subr.mxu0 0.0
    %1308 = vmatpush1.msra.mxu0 0.0
    %1309 = vmatprep.subr.mxu0 0.0
    %1310 = vmatpush1.msra.mxu0 0.0
    %1311 = vmatprep.subr.mxu0 0.0
    %1312 = vmatpush1.msra.mxu0 0.0
    %1313 = vmatprep.subr.mxu0 0.0
    %1314 = vmatpush1.msra.mxu0 0.0
    %1315 = vmatprep.subr.mxu0 0.0
    %1316 = vmatpush1.msra.mxu0 0.0
    %1317 = vmatprep.subr.mxu0 0.0
    %1318 = vmatpush1.msra.mxu0 0.0
    %1319 = vmatprep.subr.mxu0 0.0
    %1320 = vmatpush1.msra.mxu0 0.0
    %1321 = vmatprep.subr.mxu0 0.0
    %1322 = vmatpush1.msra.mxu0 0.0
    %1323 = vmatprep.subr.mxu0 0.0
    %1324 = vmatpush1.msra.mxu0 0.0
    %1325 = vmatprep.subr.mxu0 0.0
    %1326 = vmatpush1.msra.mxu0 0.0
    %1327 = vmatprep.subr.mxu0 0.0
    %1328 = vmatpush1.msra.mxu0 0.0
    %1329 = vmatprep.subr.mxu0 0.0
    %1330 = vmatpush1.msra.mxu0 0.0
    %1331 = vmatprep.subr.mxu0 0.0
    %1332 = vmatpush1.msra.mxu0 0.0
    %1333 = vmatprep.subr.mxu0 0.0
    %1334 = vmatpush1.msra.mxu0 0.0
    %1335 = vmatprep.subr.mxu0 0.0
    %1336 = vmatpush1.msra.mxu0 0.0
    %1337 = vmatprep.subr.mxu0 0.0
    %1338 = vmatpush1.msra.mxu0 0.0
    %1339 = vmatprep.subr.mxu0 0.0
    %1340 = vmatpush1.msra.mxu0 0.0
    %1341 = vmatprep.subr.mxu0 0.0
    %1342 = vmatpush1.msra.mxu0 0.0
    %1343 = vmatprep.subr.mxu0 0.0
    %1344 = vmatpush1.msra.mxu0 0.0
    %1345 = vmatprep.subr.mxu0 0.0
    %1346 = vmatpush1.msra.mxu0 0.0
    %1347 = vmatprep.subr.mxu0 0.0
    %1348 = vmatpush1.msra.mxu0 0.0
    %1349 = vmatprep.subr.mxu0 0.0
    %1350 = vmatpush1.msra.mxu0 0.0
    %1351 = vmatprep.subr.mxu0 0.0
    %1352 = vmatpush1.msra.mxu0 0.0
    %1353 = vmatprep.mubr.f32.mxu0 0.0
    %1354 = vmatmul.mubr.f32.gmra.mrb[0].mxu0 %v1287
    %v1355 = vpop.f32.mrb[0].mxu0
    %v1356 = vadd.f32 0.0, %v1355
    %v1357 = vpop.f32.mrb[0].mxu0
    %1358 = vdwg.mxu0
    %v1359 = vmul.f32 %v1194, %v1356
    %1361 = vrot.lane.b32.xlu0 %v1356, 96
    %v1362 = vpop.permute.xlu0 %1361
    %v1365 = vsel %vm248, %v1359, 0
    %1367 = vmatprep.subr.mxu0 0.0
    %1368 = vmatpush1.msra.mxu0 %v422
    %1369 = vmatprep.subr.mxu0 0.0
    %1370 = vmatpush1.msra.mxu0 %v423
    %1371 = vmatprep.subr.mxu0 0.0
    %1372 = vmatpush1.msra.mxu0 %v424
    %1373 = vmatprep.subr.mxu0 0.0
    %1374 = vmatpush1.msra.mxu0 %v425
    %1375 = vmatprep.subr.mxu0 0.0
    %1376 = vmatpush1.msra.mxu0 0.0
    %1377 = vmatprep.subr.mxu0 0.0
    %1378 = vmatpush1.msra.mxu0 0.0
    %1379 = vmatprep.subr.mxu0 0.0
    %1380 = vmatpush1.msra.mxu0 0.0
    %1381 = vmatprep.subr.mxu0 0.0
    %1382 = vmatpush1.msra.mxu0 0.0
    %1383 = vmatprep.subr.mxu0 0.0
    %1384 = vmatpush1.msra.mxu0 0.0
    %1385 = vmatprep.subr.mxu0 0.0
    %1386 = vmatpush1.msra.mxu0 0.0
    %1387 = vmatprep.subr.mxu0 0.0
    %1388 = vmatpush1.msra.mxu0 0.0
    %1389 = vmatprep.subr.mxu0 0.0
    %1390 = vmatpush1.msra.mxu0 0.0
    %1391 = vmatprep.subr.mxu0 0.0
    %1392 = vmatpush1.msra.mxu0 0.0
    %1393 = vmatprep.subr.mxu0 0.0
    %1394 = vmatpush1.msra.mxu0 0.0
    %1395 = vmatprep.subr.mxu0 0.0
    %1396 = vmatpush1.msra.mxu0 0.0
    %1397 = vmatprep.subr.mxu0 0.0
    %1398 = vmatpush1.msra.mxu0 0.0
    %1399 = vmatprep.subr.mxu0 0.0
    %1400 = vmatpush1.msra.mxu0 0.0
    %1401 = vmatprep.subr.mxu0 0.0
    %1402 = vmatpush1.msra.mxu0 0.0
    %1403 = vmatprep.subr.mxu0 0.0
    %1404 = vmatpush1.msra.mxu0 0.0
    %1405 = vmatprep.subr.mxu0 0.0
    %1406 = vmatpush1.msra.mxu0 0.0
    %1407 = vmatprep.subr.mxu0 0.0
    %1408 = vmatpush1.msra.mxu0 0.0
    %1409 = vmatprep.subr.mxu0 0.0
    %1410 = vmatpush1.msra.mxu0 0.0
    %1411 = vmatprep.subr.mxu0 0.0
    %1412 = vmatpush1.msra.mxu0 0.0
    %1413 = vmatprep.subr.mxu0 0.0
    %1414 = vmatpush1.msra.mxu0 0.0
    %1415 = vmatprep.subr.mxu0 0.0
    %1416 = vmatpush1.msra.mxu0 0.0
    %1417 = vmatprep.subr.mxu0 0.0
    %1418 = vmatpush1.msra.mxu0 0.0
    %1419 = vmatprep.subr.mxu0 0.0
    %1420 = vmatpush1.msra.mxu0 0.0
    %1421 = vmatprep.subr.mxu0 0.0
    %1422 = vmatpush1.msra.mxu0 0.0
    %1423 = vmatprep.subr.mxu0 0.0
    %1424 = vmatpush1.msra.mxu0 0.0
    %1425 = vmatprep.subr.mxu0 0.0
    %1426 = vmatpush1.msra.mxu0 0.0
    %1427 = vmatprep.subr.mxu0 0.0
    %1428 = vmatpush1.msra.mxu0 0.0
    %1429 = vmatprep.subr.mxu0 0.0
    %1430 = vmatpush1.msra.mxu0 0.0
    %1431 = vmatprep.mubr.f32.mxu0 0.0
    %1432 = vmatmul.mubr.f32.gmra.mrb[0].mxu0 %v1365
    %v1433 = vpop.f32.mrb[0].mxu0
    %v1434 = vadd.f32 %v1362, %v1433
    %v1435 = vpop.f32.mrb[0].mxu0
    %1436 = vdwg.mxu0
    %v1437 = vmax.f32 %v1434, 0.0
    %v1438 = vmul.f32 %v1277, %v1185
    %v1439 = vmul.f32 %v1276, %v1437
    %v1440 = vadd.f32 %v1438, %v1439
    %vm1441 = vcmp.eq.s32.totalorder %v426, 4
    %v1442 = vsel %vm1441, 1, 0
    %1443 = vset.pattern.permute.xlu0 0
    %1444 = vperm.xlu0 %1443, %v1442
    %v1445 = vpop.permute.xlu0 %1444
    %vm1446 = vcmp.eq.s32.totalorder %v1445, 1
    %v1447 = vsel %vm1446, %v1440, %v1192
    %s1448 = scalar_lea.vmem [#allocation2], 32
    %v1449 = vld [vmem:[%s1448] sm:$0xff]
    %s1450 = scalar_lea.vmem [#allocation3], 32
    %v1451 = vld [vmem:[%s1450] sm:$0xff]
    %v1453 = vsel %vm429, %v1440, 0
    %1455 = vmatprep.subr.mxu0 0.0
    %1456 = vmatpush1.msra.mxu0 %v418
    %1457 = vmatprep.subr.mxu0 0.0
    %1458 = vmatpush1.msra.mxu0 %v419
    %1459 = vmatprep.subr.mxu0 0.0
    %1460 = vmatpush1.msra.mxu0 0.0
    %1461 = vmatprep.subr.mxu0 0.0
    %1462 = vmatpush1.msra.mxu0 0.0
    %1463 = vmatprep.subr.mxu0 0.0
    %1464 = vmatpush1.msra.mxu0 0.0
    %1465 = vmatprep.subr.mxu0 0.0
    %1466 = vmatpush1.msra.mxu0 0.0
    %1467 = vmatprep.subr.mxu0 0.0
    %1468 = vmatpush1.msra.mxu0 0.0
    %1469 = vmatprep.subr.mxu0 0.0
    %1470 = vmatpush1.msra.mxu0 0.0
    %1471 = vmatprep.subr.mxu0 0.0
    %1472 = vmatpush1.msra.mxu0 0.0
    %1473 = vmatprep.subr.mxu0 0.0
    %1474 = vmatpush1.msra.mxu0 0.0
    %1475 = vmatprep.subr.mxu0 0.0
    %1476 = vmatpush1.msra.mxu0 0.0
    %1477 = vmatprep.subr.mxu0 0.0
    %1478 = vmatpush1.msra.mxu0 0.0
    %1479 = vmatprep.subr.mxu0 0.0
    %1480 = vmatpush1.msra.mxu0 0.0
    %1481 = vmatprep.subr.mxu0 0.0
    %1482 = vmatpush1.msra.mxu0 0.0
    %1483 = vmatprep.subr.mxu0 0.0
    %1484 = vmatpush1.msra.mxu0 0.0
    %1485 = vmatprep.subr.mxu0 0.0
    %1486 = vmatpush1.msra.mxu0 0.0
    %1487 = vmatprep.subr.mxu0 0.0
    %1488 = vmatpush1.msra.mxu0 0.0
    %1489 = vmatprep.subr.mxu0 0.0
    %1490 = vmatpush1.msra.mxu0 0.0
    %1491 = vmatprep.subr.mxu0 0.0
    %1492 = vmatpush1.msra.mxu0 0.0
    %1493 = vmatprep.subr.mxu0 0.0
    %1494 = vmatpush1.msra.mxu0 0.0
    %1495 = vmatprep.subr.mxu0 0.0
    %1496 = vmatpush1.msra.mxu0 0.0
    %1497 = vmatprep.subr.mxu0 0.0
    %1498 = vmatpush1.msra.mxu0 0.0
    %1499 = vmatprep.subr.mxu0 0.0
    %1500 = vmatpush1.msra.mxu0 0.0
    %1501 = vmatprep.subr.mxu0 0.0
    %1502 = vmatpush1.msra.mxu0 0.0
    %1503 = vmatprep.subr.mxu0 0.0
    %1504 = vmatpush1.msra.mxu0 0.0
    %1505 = vmatprep.subr.mxu0 0.0
    %1506 = vmatpush1.msra.mxu0 0.0
    %1507 = vmatprep.subr.mxu0 0.0
    %1508 = vmatpush1.msra.mxu0 0.0
    %1509 = vmatprep.subr.mxu0 0.0
    %1510 = vmatpush1.msra.mxu0 0.0
    %1511 = vmatprep.subr.mxu0 0.0
    %1512 = vmatpush1.msra.mxu0 0.0
    %1513 = vmatprep.subr.mxu0 0.0
    %1514 = vmatpush1.msra.mxu0 0.0
    %1515 = vmatprep.subr.mxu0 0.0
    %1516 = vmatpush1.msra.mxu0 0.0
    %1517 = vmatprep.subr.mxu0 0.0
    %1518 = vmatpush1.msra.mxu0 0.0
    %1519 = vmatprep.mubr.f32.mxu0 0.0
    %1520 = vmatmul.mubr.f32.gmra.mrb[0].mxu0 %v1453
    %v1521 = vpop.f32.mrb[0].mxu0
    %v1522 = vadd.f32 %v1451, %v1521
    %v1523 = vpop.f32.mrb[0].mxu0
    %1524 = vdwg.mxu0
    %v1525 = vmul.f32 %v1522, 2.0
    %v1526 = vxor.u32 %v1525, 2147483648
    %v1527 = vmul.f32 %v1526, 1.442695
    %v1528 = vpow.pop %v1527
    %v1529 = vadd.f32 %v1528, 1.0
    %v1530 = vrcp.pop %v1529
    %v1531 = vmul.f32 1.0, %v1530
    %v1532 = vsub.f32 1.0, %v1531
    %v1533 = vmul.f32 %v1532, %v511
    %1534 = vrot.lane.b32.xlu0 %v1440, 16
    %v1535 = vpop.permute.xlu0 %1534
    %v1537 = vmul.f32 %v1531, %v1535
    %v1538 = vadd.f32 %v1533, %v1537
    %1540 = vrot.lane.b32.xlu0 %v1538, 112
    %v1541 = vpop.permute.xlu0 %1540
    %v1542 = vsel %vm429, %v1541, 0
    %1544 = vmatprep.subr.mxu0 0.0
    %1545 = vmatpush1.msra.mxu0 %v420
    %1546 = vmatprep.subr.mxu0 0.0
    %1547 = vmatpush1.msra.mxu0 %v421
    %1548 = vmatprep.subr.mxu0 0.0
    %1549 = vmatpush1.msra.mxu0 0.0
    %1550 = vmatprep.subr.mxu0 0.0
    %1551 = vmatpush1.msra.mxu0 0.0
    %1552 = vmatprep.subr.mxu0 0.0
    %1553 = vmatpush1.msra.mxu0 0.0
    %1554 = vmatprep.subr.mxu0 0.0
    %1555 = vmatpush1.msra.mxu0 0.0
    %1556 = vmatprep.subr.mxu0 0.0
    %1557 = vmatpush1.msra.mxu0 0.0
    %1558 = vmatprep.subr.mxu0 0.0
    %1559 = vmatpush1.msra.mxu0 0.0
    %1560 = vmatprep.subr.mxu0 0.0
    %1561 = vmatpush1.msra.mxu0 0.0
    %1562 = vmatprep.subr.mxu0 0.0
    %1563 = vmatpush1.msra.mxu0 0.0
    %1564 = vmatprep.subr.mxu0 0.0
    %1565 = vmatpush1.msra.mxu0 0.0
    %1566 = vmatprep.subr.mxu0 0.0
    %1567 = vmatpush1.msra.mxu0 0.0
    %1568 = vmatprep.subr.mxu0 0.0
    %1569 = vmatpush1.msra.mxu0 0.0
    %1570 = vmatprep.subr.mxu0 0.0
    %1571 = vmatpush1.msra.mxu0 0.0
    %1572 = vmatprep.subr.mxu0 0.0
    %1573 = vmatpush1.msra.mxu0 0.0
    %1574 = vmatprep.subr.mxu0 0.0
    %1575 = vmatpush1.msra.mxu0 0.0
    %1576 = vmatprep.subr.mxu0 0.0
    %1577 = vmatpush1.msra.mxu0 0.0
    %1578 = vmatprep.subr.mxu0 0.0
    %1579 = vmatpush1.msra.mxu0 0.0
    %1580 = vmatprep.subr.mxu0 0.0
    %1581 = vmatpush1.msra.mxu0 0.0
    %1582 = vmatprep.subr.mxu0 0.0
    %1583 = vmatpush1.msra.mxu0 0.0
    %1584 = vmatprep.subr.mxu0 0.0
    %1585 = vmatpush1.msra.mxu0 0.0
    %1586 = vmatprep.subr.mxu0 0.0
    %1587 = vmatpush1.msra.mxu0 0.0
    %1588 = vmatprep.subr.mxu0 0.0
    %1589 = vmatpush1.msra.mxu0 0.0
    %1590 = vmatprep.subr.mxu0 0.0
    %1591 = vmatpush1.msra.mxu0 0.0
    %1592 = vmatprep.subr.mxu0 0.0
    %1593 = vmatpush1.msra.mxu0 0.0
    %1594 = vmatprep.subr.mxu0 0.0
    %1595 = vmatpush1.msra.mxu0 0.0
    %1596 = vmatprep.subr.mxu0 0.0
    %1597 = vmatpush1.msra.mxu0 0.0
    %1598 = vmatprep.subr.mxu0 0.0
    %1599 = vmatpush1.msra.mxu0 0.0
    %1600 = vmatprep.subr.mxu0 0.0
    %1601 = vmatpush1.msra.mxu0 0.0
    %1602 = vmatprep.subr.mxu0 0.0
    %1603 = vmatpush1.msra.mxu0 0.0
    %1604 = vmatprep.subr.mxu0 0.0
    %1605 = vmatpush1.msra.mxu0 0.0
    %1606 = vmatprep.subr.mxu0 0.0
    %1607 = vmatpush1.msra.mxu0 0.0
    %1608 = vmatprep.mubr.f32.mxu0 0.0
    %1609 = vmatmul.mubr.f32.gmra.mrb[0].mxu0 %v1542
    %v1610 = vpop.f32.mrb[0].mxu0
    %v1611 = vadd.f32 0.0, %v1610
    %v1612 = vpop.f32.mrb[0].mxu0
    %1613 = vdwg.mxu0
    %v1614 = vmul.f32 %v1449, %v1611
    %1616 = vrot.lane.b32.xlu0 %v1611, 96
    %v1617 = vpop.permute.xlu0 %1616
    %v1620 = vsel %vm248, %v1614, 0
    %1622 = vmatprep.subr.mxu0 0.0
    %1623 = vmatpush1.msra.mxu0 %v422
    %1624 = vmatprep.subr.mxu0 0.0
    %1625 = vmatpush1.msra.mxu0 %v423
    %1626 = vmatprep.subr.mxu0 0.0
    %1627 = vmatpush1.msra.mxu0 %v424
    %1628 = vmatprep.subr.mxu0 0.0
    %1629 = vmatpush1.msra.mxu0 %v425
    %1630 = vmatprep.subr.mxu0 0.0
    %1631 = vmatpush1.msra.mxu0 0.0
    %1632 = vmatprep.subr.mxu0 0.0
    %1633 = vmatpush1.msra.mxu0 0.0
    %1634 = vmatprep.subr.mxu0 0.0
    %1635 = vmatpush1.msra.mxu0 0.0
    %1636 = vmatprep.subr.mxu0 0.0
    %1637 = vmatpush1.msra.mxu0 0.0
    %1638 = vmatprep.subr.mxu0 0.0
    %1639 = vmatpush1.msra.mxu0 0.0
    %1640 = vmatprep.subr.mxu0 0.0
    %1641 = vmatpush1.msra.mxu0 0.0
    %1642 = vmatprep.subr.mxu0 0.0
    %1643 = vmatpush1.msra.mxu0 0.0
    %1644 = vmatprep.subr.mxu0 0.0
    %1645 = vmatpush1.msra.mxu0 0.0
    %1646 = vmatprep.subr.mxu0 0.0
    %1647 = vmatpush1.msra.mxu0 0.0
    %1648 = vmatprep.subr.mxu0 0.0
    %1649 = vmatpush1.msra.mxu0 0.0
    %1650 = vmatprep.subr.mxu0 0.0
    %1651 = vmatpush1.msra.mxu0 0.0
    %1652 = vmatprep.subr.mxu0 0.0
    %1653 = vmatpush1.msra.mxu0 0.0
    %1654 = vmatprep.subr.mxu0 0.0
    %1655 = vmatpush1.msra.mxu0 0.0
    %1656 = vmatprep.subr.mxu0 0.0
    %1657 = vmatpush1.msra.mxu0 0.0
    %1658 = vmatprep.subr.mxu0 0.0
    %1659 = vmatpush1.msra.mxu0 0.0
    %1660 = vmatprep.subr.mxu0 0.0
    %1661 = vmatpush1.msra.mxu0 0.0
    %1662 = vmatprep.subr.mxu0 0.0
    %1663 = vmatpush1.msra.mxu0 0.0
    %1664 = vmatprep.subr.mxu0 0.0
    %1665 = vmatpush1.msra.mxu0 0.0
    %1666 = vmatprep.subr.mxu0 0.0
    %1667 = vmatpush1.msra.mxu0 0.0
    %1668 = vmatprep.subr.mxu0 0.0
    %1669 = vmatpush1.msra.mxu0 0.0
    %1670 = vmatprep.subr.mxu0 0.0
    %1671 = vmatpush1.msra.mxu0 0.0
    %1672 = vmatprep.subr.mxu0 0.0
    %1673 = vmatpush1.msra.mxu0 0.0
    %1674 = vmatprep.subr.mxu0 0.0
    %1675 = vmatpush1.msra.mxu0 0.0
    %1676 = vmatprep.subr.mxu0 0.0
    %1677 = vmatpush1.msra.mxu0 0.0
    %1678 = vmatprep.subr.mxu0 0.0
    %1679 = vmatpush1.msra.mxu0 0.0
    %1680 = vmatprep.subr.mxu0 0.0
    %1681 = vmatpush1.msra.mxu0 0.0
    %1682 = vmatprep.subr.mxu0 0.0
    %1683 = vmatpush1.msra.mxu0 0.0
    %1684 = vmatprep.subr.mxu0 0.0
    %1685 = vmatpush1.msra.mxu0 0.0
    %1686 = vmatprep.mubr.f32.mxu0 0.0
    %1687 = vmatmul.mubr.f32.gmra.mrb[0].mxu0 %v1620
    %v1688 = vpop.f32.mrb[0].mxu0
    %v1689 = vadd.f32 %v1617, %v1688
    %v1690 = vpop.f32.mrb[0].mxu0
    %1691 = vdwg.mxu0
    %v1692 = vmax.f32 %v1689, 0.0
    %v1693 = vmul.f32 %v1532, %v1440
    %v1694 = vmul.f32 %v1531, %v1692
    %v1695 = vadd.f32 %v1693, %v1694
    %vm1696 = vcmp.eq.s32.totalorder %v426, 5
    %v1697 = vsel %vm1696, 1, 0
    %1698 = vset.pattern.permute.xlu0 0
    %1699 = vperm.xlu0 %1698, %v1697
    %v1700 = vpop.permute.xlu0 %1699
    %vm1701 = vcmp.eq.s32.totalorder %v1700, 1
    %v1702 = vsel %vm1701, %v1695, %v1447
    %s1703 = scalar_lea.vmem [#allocation2], 40
    %v1704 = vld [vmem:[%s1703] sm:$0xff]
    %s1705 = scalar_lea.vmem [#allocation3], 40
    %v1706 = vld [vmem:[%s1705] sm:$0xff]
    %v1708 = vsel %vm429, %v1695, 0
    %1710 = vmatprep.subr.mxu0 0.0
    %1711 = vmatpush1.msra.mxu0 %v418
    %1712 = vmatprep.subr.mxu0 0.0
    %1713 = vmatpush1.msra.mxu0 %v419
    %1714 = vmatprep.subr.mxu0 0.0
    %1715 = vmatpush1.msra.mxu0 0.0
    %1716 = vmatprep.subr.mxu0 0.0
    %1717 = vmatpush1.msra.mxu0 0.0
    %1718 = vmatprep.subr.mxu0 0.0
    %1719 = vmatpush1.msra.mxu0 0.0
    %1720 = vmatprep.subr.mxu0 0.0
    %1721 = vmatpush1.msra.mxu0 0.0
    %1722 = vmatprep.subr.mxu0 0.0
    %1723 = vmatpush1.msra.mxu0 0.0
    %1724 = vmatprep.subr.mxu0 0.0
    %1725 = vmatpush1.msra.mxu0 0.0
    %1726 = vmatprep.subr.mxu0 0.0
    %1727 = vmatpush1.msra.mxu0 0.0
    %1728 = vmatprep.subr.mxu0 0.0
    %1729 = vmatpush1.msra.mxu0 0.0
    %1730 = vmatprep.subr.mxu0 0.0
    %1731 = vmatpush1.msra.mxu0 0.0
    %1732 = vmatprep.subr.mxu0 0.0
    %1733 = vmatpush1.msra.mxu0 0.0
    %1734 = vmatprep.subr.mxu0 0.0
    %1735 = vmatpush1.msra.mxu0 0.0
    %1736 = vmatprep.subr.mxu0 0.0
    %1737 = vmatpush1.msra.mxu0 0.0
    %1738 = vmatprep.subr.mxu0 0.0
    %1739 = vmatpush1.msra.mxu0 0.0
    %1740 = vmatprep.subr.mxu0 0.0
    %1741 = vmatpush1.msra.mxu0 0.0
    %1742 = vmatprep.subr.mxu0 0.0
    %1743 = vmatpush1.msra.mxu0 0.0
    %1744 = vmatprep.subr.mxu0 0.0
    %1745 = vmatpush1.msra.mxu0 0.0
    %1746 = vmatprep.subr.mxu0 0.0
    %1747 = vmatpush1.msra.mxu0 0.0
    %1748 = vmatprep.subr.mxu0 0.0
    %1749 = vmatpush1.msra.mxu0 0.0
    %1750 = vmatprep.subr.mxu0 0.0
    %1751 = vmatpush1.msra.mxu0 0.0
    %1752 = vmatprep.subr.mxu0 0.0
    %1753 = vmatpush1.msra.mxu0 0.0
    %1754 = vmatprep.subr.mxu0 0.0
    %1755 = vmatpush1.msra.mxu0 0.0
    %1756 = vmatprep.subr.mxu0 0.0
    %1757 = vmatpush1.msra.mxu0 0.0
    %1758 = vmatprep.subr.mxu0 0.0
    %1759 = vmatpush1.msra.mxu0 0.0
    %1760 = vmatprep.subr.mxu0 0.0
    %1761 = vmatpush1.msra.mxu0 0.0
    %1762 = vmatprep.subr.mxu0 0.0
    %1763 = vmatpush1.msra.mxu0 0.0
    %1764 = vmatprep.subr.mxu0 0.0
    %1765 = vmatpush1.msra.mxu0 0.0
    %1766 = vmatprep.subr.mxu0 0.0
    %1767 = vmatpush1.msra.mxu0 0.0
    %1768 = vmatprep.subr.mxu0 0.0
    %1769 = vmatpush1.msra.mxu0 0.0
    %1770 = vmatprep.subr.mxu0 0.0
    %1771 = vmatpush1.msra.mxu0 0.0
    %1772 = vmatprep.subr.mxu0 0.0
    %1773 = vmatpush1.msra.mxu0 0.0
    %1774 = vmatprep.mubr.f32.mxu0 0.0
    %1775 = vmatmul.mubr.f32.gmra.mrb[0].mxu0 %v1708
    %v1776 = vpop.f32.mrb[0].mxu0
    %v1777 = vadd.f32 %v1706, %v1776
    %v1778 = vpop.f32.mrb[0].mxu0
    %1779 = vdwg.mxu0
    %v1780 = vmul.f32 %v1777, 2.0
    %v1781 = vxor.u32 %v1780, 2147483648
    %v1782 = vmul.f32 %v1781, 1.442695
    %v1783 = vpow.pop %v1782
    %v1784 = vadd.f32 %v1783, 1.0
    %v1785 = vrcp.pop %v1784
    %v1786 = vmul.f32 1.0, %v1785
    %v1787 = vsub.f32 1.0, %v1786
    %v1788 = vmul.f32 %v1787, %v511
    %1789 = vrot.lane.b32.xlu0 %v1695, 16
    %v1790 = vpop.permute.xlu0 %1789
    %v1792 = vmul.f32 %v1786, %v1790
    %v1793 = vadd.f32 %v1788, %v1792
    %1795 = vrot.lane.b32.xlu0 %v1793, 112
    %v1796 = vpop.permute.xlu0 %1795
    %v1797 = vsel %vm429, %v1796, 0
    %1799 = vmatprep.subr.mxu0 0.0
    %1800 = vmatpush1.msra.mxu0 %v420
    %1801 = vmatprep.subr.mxu0 0.0
    %1802 = vmatpush1.msra.mxu0 %v421
    %1803 = vmatprep.subr.mxu0 0.0
    %1804 = vmatpush1.msra.mxu0 0.0
    %1805 = vmatprep.subr.mxu0 0.0
    %1806 = vmatpush1.msra.mxu0 0.0
    %1807 = vmatprep.subr.mxu0 0.0
    %1808 = vmatpush1.msra.mxu0 0.0
    %1809 = vmatprep.subr.mxu0 0.0
    %1810 = vmatpush1.msra.mxu0 0.0
    %1811 = vmatprep.subr.mxu0 0.0
    %1812 = vmatpush1.msra.mxu0 0.0
    %1813 = vmatprep.subr.mxu0 0.0
    %1814 = vmatpush1.msra.mxu0 0.0
    %1815 = vmatprep.subr.mxu0 0.0
    %1816 = vmatpush1.msra.mxu0 0.0
    %1817 = vmatprep.subr.mxu0 0.0
    %1818 = vmatpush1.msra.mxu0 0.0
    %1819 = vmatprep.subr.mxu0 0.0
    %1820 = vmatpush1.msra.mxu0 0.0
    %1821 = vmatprep.subr.mxu0 0.0
    %1822 = vmatpush1.msra.mxu0 0.0
    %1823 = vmatprep.subr.mxu0 0.0
    %1824 = vmatpush1.msra.mxu0 0.0
    %1825 = vmatprep.subr.mxu0 0.0
    %1826 = vmatpush1.msra.mxu0 0.0
    %1827 = vmatprep.subr.mxu0 0.0
    %1828 = vmatpush1.msra.mxu0 0.0
    %1829 = vmatprep.subr.mxu0 0.0
    %1830 = vmatpush1.msra.mxu0 0.0
    %1831 = vmatprep.subr.mxu0 0.0
    %1832 = vmatpush1.msra.mxu0 0.0
    %1833 = vmatprep.subr.mxu0 0.0
    %1834 = vmatpush1.msra.mxu0 0.0
    %1835 = vmatprep.subr.mxu0 0.0
    %1836 = vmatpush1.msra.mxu0 0.0
    %1837 = vmatprep.subr.mxu0 0.0
    %1838 = vmatpush1.msra.mxu0 0.0
    %1839 = vmatprep.subr.mxu0 0.0
    %1840 = vmatpush1.msra.mxu0 0.0
    %1841 = vmatprep.subr.mxu0 0.0
    %1842 = vmatpush1.msra.mxu0 0.0
    %1843 = vmatprep.subr.mxu0 0.0
    %1844 = vmatpush1.msra.mxu0 0.0
    %1845 = vmatprep.subr.mxu0 0.0
    %1846 = vmatpush1.msra.mxu0 0.0
    %1847 = vmatprep.subr.mxu0 0.0
    %1848 = vmatpush1.msra.mxu0 0.0
    %1849 = vmatprep.subr.mxu0 0.0
    %1850 = vmatpush1.msra.mxu0 0.0
    %1851 = vmatprep.subr.mxu0 0.0
    %1852 = vmatpush1.msra.mxu0 0.0
    %1853 = vmatprep.subr.mxu0 0.0
    %1854 = vmatpush1.msra.mxu0 0.0
    %1855 = vmatprep.subr.mxu0 0.0
    %1856 = vmatpush1.msra.mxu0 0.0
    %1857 = vmatprep.subr.mxu0 0.0
    %1858 = vmatpush1.msra.mxu0 0.0
    %1859 = vmatprep.subr.mxu0 0.0
    %1860 = vmatpush1.msra.mxu0 0.0
    %1861 = vmatprep.subr.mxu0 0.0
    %1862 = vmatpush1.msra.mxu0 0.0
    %1863 = vmatprep.mubr.f32.mxu0 0.0
    %1864 = vmatmul.mubr.f32.gmra.mrb[0].mxu0 %v1797
    %v1865 = vpop.f32.mrb[0].mxu0
    %v1866 = vadd.f32 0.0, %v1865
    %v1867 = vpop.f32.mrb[0].mxu0
    %1868 = vdwg.mxu0
    %v1869 = vmul.f32 %v1704, %v1866
    %1871 = vrot.lane.b32.xlu0 %v1866, 96
    %v1872 = vpop.permute.xlu0 %1871
    %v1875 = vsel %vm248, %v1869, 0
    %1877 = vmatprep.subr.mxu0 0.0
    %1878 = vmatpush1.msra.mxu0 %v422
    %1879 = vmatprep.subr.mxu0 0.0
    %1880 = vmatpush1.msra.mxu0 %v423
    %1881 = vmatprep.subr.mxu0 0.0
    %1882 = vmatpush1.msra.mxu0 %v424
    %1883 = vmatprep.subr.mxu0 0.0
    %1884 = vmatpush1.msra.mxu0 %v425
    %1885 = vmatprep.subr.mxu0 0.0
    %1886 = vmatpush1.msra.mxu0 0.0
    %1887 = vmatprep.subr.mxu0 0.0
    %1888 = vmatpush1.msra.mxu0 0.0
    %1889 = vmatprep.subr.mxu0 0.0
    %1890 = vmatpush1.msra.mxu0 0.0
    %1891 = vmatprep.subr.mxu0 0.0
    %1892 = vmatpush1.msra.mxu0 0.0
    %1893 = vmatprep.subr.mxu0 0.0
    %1894 = vmatpush1.msra.mxu0 0.0
    %1895 = vmatprep.subr.mxu0 0.0
    %1896 = vmatpush1.msra.mxu0 0.0
    %1897 = vmatprep.subr.mxu0 0.0
    %1898 = vmatpush1.msra.mxu0 0.0
    %1899 = vmatprep.subr.mxu0 0.0
    %1900 = vmatpush1.msra.mxu0 0.0
    %1901 = vmatprep.subr.mxu0 0.0
    %1902 = vmatpush1.msra.mxu0 0.0
    %1903 = vmatprep.subr.mxu0 0.0
    %1904 = vmatpush1.msra.mxu0 0.0
    %1905 = vmatprep.subr.mxu0 0.0
    %1906 = vmatpush1.msra.mxu0 0.0
    %1907 = vmatprep.subr.mxu0 0.0
    %1908 = vmatpush1.msra.mxu0 0.0
    %1909 = vmatprep.subr.mxu0 0.0
    %1910 = vmatpush1.msra.mxu0 0.0
    %1911 = vmatprep.subr.mxu0 0.0
    %1912 = vmatpush1.msra.mxu0 0.0
    %1913 = vmatprep.subr.mxu0 0.0
    %1914 = vmatpush1.msra.mxu0 0.0
    %1915 = vmatprep.subr.mxu0 0.0
    %1916 = vmatpush1.msra.mxu0 0.0
    %1917 = vmatprep.subr.mxu0 0.0
    %1918 = vmatpush1.msra.mxu0 0.0
    %1919 = vmatprep.subr.mxu0 0.0
    %1920 = vmatpush1.msra.mxu0 0.0
    %1921 = vmatprep.subr.mxu0 0.0
    %1922 = vmatpush1.msra.mxu0 0.0
    %1923 = vmatprep.subr.mxu0 0.0
    %1924 = vmatpush1.msra.mxu0 0.0
    %1925 = vmatprep.subr.mxu0 0.0
    %1926 = vmatpush1.msra.mxu0 0.0
    %1927 = vmatprep.subr.mxu0 0.0
    %1928 = vmatpush1.msra.mxu0 0.0
    %1929 = vmatprep.subr.mxu0 0.0
    %1930 = vmatpush1.msra.mxu0 0.0
    %1931 = vmatprep.subr.mxu0 0.0
    %1932 = vmatpush1.msra.mxu0 0.0
    %1933 = vmatprep.subr.mxu0 0.0
    %1934 = vmatpush1.msra.mxu0 0.0
    %1935 = vmatprep.subr.mxu0 0.0
    %1936 = vmatpush1.msra.mxu0 0.0
    %1937 = vmatprep.subr.mxu0 0.0
    %1938 = vmatpush1.msra.mxu0 0.0
    %1939 = vmatprep.subr.mxu0 0.0
    %1940 = vmatpush1.msra.mxu0 0.0
    %1941 = vmatprep.mubr.f32.mxu0 0.0
    %1942 = vmatmul.mubr.f32.gmra.mrb[0].mxu0 %v1875
    %v1943 = vpop.f32.mrb[0].mxu0
    %v1944 = vadd.f32 %v1872, %v1943
    %v1945 = vpop.f32.mrb[0].mxu0
    %1946 = vdwg.mxu0
    %v1947 = vmax.f32 %v1944, 0.0
    %v1948 = vmul.f32 %v1787, %v1695
    %v1949 = vmul.f32 %v1786, %v1947
    %v1950 = vadd.f32 %v1948, %v1949
    %vm1951 = vcmp.eq.s32.totalorder %v426, 6
    %v1952 = vsel %vm1951, 1, 0
    %1953 = vset.pattern.permute.xlu0 0
    %1954 = vperm.xlu0 %1953, %v1952
    %v1955 = vpop.permute.xlu0 %1954
    %vm1956 = vcmp.eq.s32.totalorder %v1955, 1
    %v1957 = vsel %vm1956, %v1950, %v1702
    %s1958 = scalar_lea.vmem [#allocation2], 48
    %v1959 = vld [vmem:[%s1958] sm:$0xff]
    %s1960 = scalar_lea.vmem [#allocation3], 48
    %v1961 = vld [vmem:[%s1960] sm:$0xff]
    %v1963 = vsel %vm429, %v1950, 0
    %1965 = vmatprep.subr.mxu0 0.0
    %1966 = vmatpush1.msra.mxu0 %v418
    %1967 = vmatprep.subr.mxu0 0.0
    %1968 = vmatpush1.msra.mxu0 %v419
    %1969 = vmatprep.subr.mxu0 0.0
    %1970 = vmatpush1.msra.mxu0 0.0
    %1971 = vmatprep.subr.mxu0 0.0
    %1972 = vmatpush1.msra.mxu0 0.0
    %1973 = vmatprep.subr.mxu0 0.0
    %1974 = vmatpush1.msra.mxu0 0.0
    %1975 = vmatprep.subr.mxu0 0.0
    %1976 = vmatpush1.msra.mxu0 0.0
    %1977 = vmatprep.subr.mxu0 0.0
    %1978 = vmatpush1.msra.mxu0 0.0
    %1979 = vmatprep.subr.mxu0 0.0
    %1980 = vmatpush1.msra.mxu0 0.0
    %1981 = vmatprep.subr.mxu0 0.0
    %1982 = vmatpush1.msra.mxu0 0.0
    %1983 = vmatprep.subr.mxu0 0.0
    %1984 = vmatpush1.msra.mxu0 0.0
    %1985 = vmatprep.subr.mxu0 0.0
    %1986 = vmatpush1.msra.mxu0 0.0
    %1987 = vmatprep.subr.mxu0 0.0
    %1988 = vmatpush1.msra.mxu0 0.0
    %1989 = vmatprep.subr.mxu0 0.0
    %1990 = vmatpush1.msra.mxu0 0.0
    %1991 = vmatprep.subr.mxu0 0.0
    %1992 = vmatpush1.msra.mxu0 0.0
    %1993 = vmatprep.subr.mxu0 0.0
    %1994 = vmatpush1.msra.mxu0 0.0
    %1995 = vmatprep.subr.mxu0 0.0
    %1996 = vmatpush1.msra.mxu0 0.0
    %1997 = vmatprep.subr.mxu0 0.0
    %1998 = vmatpush1.msra.mxu0 0.0
    %1999 = vmatprep.subr.mxu0 0.0
    %2000 = vmatpush1.msra.mxu0 0.0
    %2001 = vmatprep.subr.mxu0 0.0
    %2002 = vmatpush1.msra.mxu0 0.0
    %2003 = vmatprep.subr.mxu0 0.0
    %2004 = vmatpush1.msra.mxu0 0.0
    %2005 = vmatprep.subr.mxu0 0.0
    %2006 = vmatpush1.msra.mxu0 0.0
    %2007 = vmatprep.subr.mxu0 0.0
    %2008 = vmatpush1.msra.mxu0 0.0
    %2009 = vmatprep.subr.mxu0 0.0
    %2010 = vmatpush1.msra.mxu0 0.0
    %2011 = vmatprep.subr.mxu0 0.0
    %2012 = vmatpush1.msra.mxu0 0.0
    %2013 = vmatprep.subr.mxu0 0.0
    %2014 = vmatpush1.msra.mxu0 0.0
    %2015 = vmatprep.subr.mxu0 0.0
    %2016 = vmatpush1.msra.mxu0 0.0
    %2017 = vmatprep.subr.mxu0 0.0
    %2018 = vmatpush1.msra.mxu0 0.0
    %2019 = vmatprep.subr.mxu0 0.0
    %2020 = vmatpush1.msra.mxu0 0.0
    %2021 = vmatprep.subr.mxu0 0.0
    %2022 = vmatpush1.msra.mxu0 0.0
    %2023 = vmatprep.subr.mxu0 0.0
    %2024 = vmatpush1.msra.mxu0 0.0
    %2025 = vmatprep.subr.mxu0 0.0
    %2026 = vmatpush1.msra.mxu0 0.0
    %2027 = vmatprep.subr.mxu0 0.0
    %2028 = vmatpush1.msra.mxu0 0.0
    %2029 = vmatprep.mubr.f32.mxu0 0.0
    %2030 = vmatmul.mubr.f32.gmra.mrb[0].mxu0 %v1963
    %v2031 = vpop.f32.mrb[0].mxu0
    %v2032 = vadd.f32 %v1961, %v2031
    %v2033 = vpop.f32.mrb[0].mxu0
    %2034 = vdwg.mxu0
    %v2035 = vmul.f32 %v2032, 2.0
    %v2036 = vxor.u32 %v2035, 2147483648
    %v2037 = vmul.f32 %v2036, 1.442695
    %v2038 = vpow.pop %v2037
    %v2039 = vadd.f32 %v2038, 1.0
    %v2040 = vrcp.pop %v2039
    %v2041 = vmul.f32 1.0, %v2040
    %v2042 = vsub.f32 1.0, %v2041
    %v2043 = vmul.f32 %v2042, %v511
    %2044 = vrot.lane.b32.xlu0 %v1950, 16
    %v2045 = vpop.permute.xlu0 %2044
    %v2047 = vmul.f32 %v2041, %v2045
    %v2048 = vadd.f32 %v2043, %v2047
    %2050 = vrot.lane.b32.xlu0 %v2048, 112
    %v2051 = vpop.permute.xlu0 %2050
    %v2052 = vsel %vm429, %v2051, 0
    %2054 = vmatprep.subr.mxu0 0.0
    %2055 = vmatpush1.msra.mxu0 %v420
    %2056 = vmatprep.subr.mxu0 0.0
    %2057 = vmatpush1.msra.mxu0 %v421
    %2058 = vmatprep.subr.mxu0 0.0
    %2059 = vmatpush1.msra.mxu0 0.0
    %2060 = vmatprep.subr.mxu0 0.0
    %2061 = vmatpush1.msra.mxu0 0.0
    %2062 = vmatprep.subr.mxu0 0.0
    %2063 = vmatpush1.msra.mxu0 0.0
    %2064 = vmatprep.subr.mxu0 0.0
    %2065 = vmatpush1.msra.mxu0 0.0
    %2066 = vmatprep.subr.mxu0 0.0
    %2067 = vmatpush1.msra.mxu0 0.0
    %2068 = vmatprep.subr.mxu0 0.0
    %2069 = vmatpush1.msra.mxu0 0.0
    %2070 = vmatprep.subr.mxu0 0.0
    %2071 = vmatpush1.msra.mxu0 0.0
    %2072 = vmatprep.subr.mxu0 0.0
    %2073 = vmatpush1.msra.mxu0 0.0
    %2074 = vmatprep.subr.mxu0 0.0
    %2075 = vmatpush1.msra.mxu0 0.0
    %2076 = vmatprep.subr.mxu0 0.0
    %2077 = vmatpush1.msra.mxu0 0.0
    %2078 = vmatprep.subr.mxu0 0.0
    %2079 = vmatpush1.msra.mxu0 0.0
    %2080 = vmatprep.subr.mxu0 0.0
    %2081 = vmatpush1.msra.mxu0 0.0
    %2082 = vmatprep.subr.mxu0 0.0
    %2083 = vmatpush1.msra.mxu0 0.0
    %2084 = vmatprep.subr.mxu0 0.0
    %2085 = vmatpush1.msra.mxu0 0.0
    %2086 = vmatprep.subr.mxu0 0.0
    %2087 = vmatpush1.msra.mxu0 0.0
    %2088 = vmatprep.subr.mxu0 0.0
    %2089 = vmatpush1.msra.mxu0 0.0
    %2090 = vmatprep.subr.mxu0 0.0
    %2091 = vmatpush1.msra.mxu0 0.0
    %2092 = vmatprep.subr.mxu0 0.0
    %2093 = vmatpush1.msra.mxu0 0.0
    %2094 = vmatprep.subr.mxu0 0.0
    %2095 = vmatpush1.msra.mxu0 0.0
    %2096 = vmatprep.subr.mxu0 0.0
    %2097 = vmatpush1.msra.mxu0 0.0
    %2098 = vmatprep.subr.mxu0 0.0
    %2099 = vmatpush1.msra.mxu0 0.0
    %2100 = vmatprep.subr.mxu0 0.0
    %2101 = vmatpush1.msra.mxu0 0.0
    %2102 = vmatprep.subr.mxu0 0.0
    %2103 = vmatpush1.msra.mxu0 0.0
    %2104 = vmatprep.subr.mxu0 0.0
    %2105 = vmatpush1.msra.mxu0 0.0
    %2106 = vmatprep.subr.mxu0 0.0
    %2107 = vmatpush1.msra.mxu0 0.0
    %2108 = vmatprep.subr.mxu0 0.0
    %2109 = vmatpush1.msra.mxu0 0.0
    %2110 = vmatprep.subr.mxu0 0.0
    %2111 = vmatpush1.msra.mxu0 0.0
    %2112 = vmatprep.subr.mxu0 0.0
    %2113 = vmatpush1.msra.mxu0 0.0
    %2114 = vmatprep.subr.mxu0 0.0
    %2115 = vmatpush1.msra.mxu0 0.0
    %2116 = vmatprep.subr.mxu0 0.0
    %2117 = vmatpush1.msra.mxu0 0.0
    %2118 = vmatprep.mubr.f32.mxu0 0.0
    %2119 = vmatmul.mubr.f32.gmra.mrb[0].mxu0 %v2052
    %v2120 = vpop.f32.mrb[0].mxu0
    %v2121 = vadd.f32 0.0, %v2120
    %v2122 = vpop.f32.mrb[0].mxu0
    %2123 = vdwg.mxu0
    %v2124 = vmul.f32 %v1959, %v2121
    %2126 = vrot.lane.b32.xlu0 %v2121, 96
    %v2127 = vpop.permute.xlu0 %2126
    %v2130 = vsel %vm248, %v2124, 0
    %2132 = vmatprep.subr.mxu0 0.0
    %2133 = vmatpush1.msra.mxu0 %v422
    %2134 = vmatprep.subr.mxu0 0.0
    %2135 = vmatpush1.msra.mxu0 %v423
    %2136 = vmatprep.subr.mxu0 0.0
    %2137 = vmatpush1.msra.mxu0 %v424
    %2138 = vmatprep.subr.mxu0 0.0
    %2139 = vmatpush1.msra.mxu0 %v425
    %2140 = vmatprep.subr.mxu0 0.0
    %2141 = vmatpush1.msra.mxu0 0.0
    %2142 = vmatprep.subr.mxu0 0.0
    %2143 = vmatpush1.msra.mxu0 0.0
    %2144 = vmatprep.subr.mxu0 0.0
    %2145 = vmatpush1.msra.mxu0 0.0
    %2146 = vmatprep.subr.mxu0 0.0
    %2147 = vmatpush1.msra.mxu0 0.0
    %2148 = vmatprep.subr.mxu0 0.0
    %2149 = vmatpush1.msra.mxu0 0.0
    %2150 = vmatprep.subr.mxu0 0.0
    %2151 = vmatpush1.msra.mxu0 0.0
    %2152 = vmatprep.subr.mxu0 0.0
    %2153 = vmatpush1.msra.mxu0 0.0
    %2154 = vmatprep.subr.mxu0 0.0
    %2155 = vmatpush1.msra.mxu0 0.0
    %2156 = vmatprep.subr.mxu0 0.0
    %2157 = vmatpush1.msra.mxu0 0.0
    %2158 = vmatprep.subr.mxu0 0.0
    %2159 = vmatpush1.msra.mxu0 0.0
    %2160 = vmatprep.subr.mxu0 0.0
    %2161 = vmatpush1.msra.mxu0 0.0
    %2162 = vmatprep.subr.mxu0 0.0
    %2163 = vmatpush1.msra.mxu0 0.0
    %2164 = vmatprep.subr.mxu0 0.0
    %2165 = vmatpush1.msra.mxu0 0.0
    %2166 = vmatprep.subr.mxu0 0.0
    %2167 = vmatpush1.msra.mxu0 0.0
    %2168 = vmatprep.subr.mxu0 0.0
    %2169 = vmatpush1.msra.mxu0 0.0
    %2170 = vmatprep.subr.mxu0 0.0
    %2171 = vmatpush1.msra.mxu0 0.0
    %2172 = vmatprep.subr.mxu0 0.0
    %2173 = vmatpush1.msra.mxu0 0.0
    %2174 = vmatprep.subr.mxu0 0.0
    %2175 = vmatpush1.msra.mxu0 0.0
    %2176 = vmatprep.subr.mxu0 0.0
    %2177 = vmatpush1.msra.mxu0 0.0
    %2178 = vmatprep.subr.mxu0 0.0
    %2179 = vmatpush1.msra.mxu0 0.0
    %2180 = vmatprep.subr.mxu0 0.0
    %2181 = vmatpush1.msra.mxu0 0.0
    %2182 = vmatprep.subr.mxu0 0.0
    %2183 = vmatpush1.msra.mxu0 0.0
    %2184 = vmatprep.subr.mxu0 0.0
    %2185 = vmatpush1.msra.mxu0 0.0
    %2186 = vmatprep.subr.mxu0 0.0
    %2187 = vmatpush1.msra.mxu0 0.0
    %2188 = vmatprep.subr.mxu0 0.0
    %2189 = vmatpush1.msra.mxu0 0.0
    %2190 = vmatprep.subr.mxu0 0.0
    %2191 = vmatpush1.msra.mxu0 0.0
    %2192 = vmatprep.subr.mxu0 0.0
    %2193 = vmatpush1.msra.mxu0 0.0
    %2194 = vmatprep.subr.mxu0 0.0
    %2195 = vmatpush1.msra.mxu0 0.0
    %2196 = vmatprep.mubr.f32.mxu0 0.0
    %2197 = vmatmul.mubr.f32.gmra.mrb[0].mxu0 %v2130
    %v2198 = vpop.f32.mrb[0].mxu0
    %v2199 = vadd.f32 %v2127, %v2198
    %v2200 = vpop.f32.mrb[0].mxu0
    %2201 = vdwg.mxu0
    %v2202 = vmax.f32 %v2199, 0.0
    %v2203 = vmul.f32 %v2042, %v1950
    %v2204 = vmul.f32 %v2041, %v2202
    %v2205 = vadd.f32 %v2203, %v2204
    %vm2206 = vcmp.eq.s32.totalorder %v426, 7
    %v2207 = vsel %vm2206, 1, 0
    %2208 = vset.pattern.permute.xlu0 0
    %2209 = vperm.xlu0 %2208, %v2207
    %v2210 = vpop.permute.xlu0 %2209
    %vm2211 = vcmp.eq.s32.totalorder %v2210, 1
    %v2212 = vsel %vm2211, %v2205, %v1957
    %s2213 = scalar_lea.vmem [#allocation2], 56
    %v2214 = vld [vmem:[%s2213] sm:$0xff]
    %s2215 = scalar_lea.vmem [#allocation3], 56
    %v2216 = vld [vmem:[%s2215] sm:$0xff]
    %v2218 = vsel %vm429, %v2205, 0
    %2220 = vmatprep.subr.mxu0 0.0
    %2221 = vmatpush1.msra.mxu0 %v418
    %2222 = vmatprep.subr.mxu0 0.0
    %2223 = vmatpush1.msra.mxu0 %v419
    %2224 = vmatprep.subr.mxu0 0.0
    %2225 = vmatpush1.msra.mxu0 0.0
    %2226 = vmatprep.subr.mxu0 0.0
    %2227 = vmatpush1.msra.mxu0 0.0
    %2228 = vmatprep.subr.mxu0 0.0
    %2229 = vmatpush1.msra.mxu0 0.0
    %2230 = vmatprep.subr.mxu0 0.0
    %2231 = vmatpush1.msra.mxu0 0.0
    %2232 = vmatprep.subr.mxu0 0.0
    %2233 = vmatpush1.msra.mxu0 0.0
    %2234 = vmatprep.subr.mxu0 0.0
    %2235 = vmatpush1.msra.mxu0 0.0
    %2236 = vmatprep.subr.mxu0 0.0
    %2237 = vmatpush1.msra.mxu0 0.0
    %2238 = vmatprep.subr.mxu0 0.0
    %2239 = vmatpush1.msra.mxu0 0.0
    %2240 = vmatprep.subr.mxu0 0.0
    %2241 = vmatpush1.msra.mxu0 0.0
    %2242 = vmatprep.subr.mxu0 0.0
    %2243 = vmatpush1.msra.mxu0 0.0
    %2244 = vmatprep.subr.mxu0 0.0
    %2245 = vmatpush1.msra.mxu0 0.0
    %2246 = vmatprep.subr.mxu0 0.0
    %2247 = vmatpush1.msra.mxu0 0.0
    %2248 = vmatprep.subr.mxu0 0.0
    %2249 = vmatpush1.msra.mxu0 0.0
    %2250 = vmatprep.subr.mxu0 0.0
    %2251 = vmatpush1.msra.mxu0 0.0
    %2252 = vmatprep.subr.mxu0 0.0
    %2253 = vmatpush1.msra.mxu0 0.0
    %2254 = vmatprep.subr.mxu0 0.0
    %2255 = vmatpush1.msra.mxu0 0.0
    %2256 = vmatprep.subr.mxu0 0.0
    %2257 = vmatpush1.msra.mxu0 0.0
    %2258 = vmatprep.subr.mxu0 0.0
    %2259 = vmatpush1.msra.mxu0 0.0
    %2260 = vmatprep.subr.mxu0 0.0
    %2261 = vmatpush1.msra.mxu0 0.0
    %2262 = vmatprep.subr.mxu0 0.0
    %2263 = vmatpush1.msra.mxu0 0.0
    %2264 = vmatprep.subr.mxu0 0.0
    %2265 = vmatpush1.msra.mxu0 0.0
    %2266 = vmatprep.subr.mxu0 0.0
    %2267 = vmatpush1.msra.mxu0 0.0
    %2268 = vmatprep.subr.mxu0 0.0
    %2269 = vmatpush1.msra.mxu0 0.0
    %2270 = vmatprep.subr.mxu0 0.0
    %2271 = vmatpush1.msra.mxu0 0.0
    %2272 = vmatprep.subr.mxu0 0.0
    %2273 = vmatpush1.msra.mxu0 0.0
    %2274 = vmatprep.subr.mxu0 0.0
    %2275 = vmatpush1.msra.mxu0 0.0
    %2276 = vmatprep.subr.mxu0 0.0
    %2277 = vmatpush1.msra.mxu0 0.0
    %2278 = vmatprep.subr.mxu0 0.0
    %2279 = vmatpush1.msra.mxu0 0.0
    %2280 = vmatprep.subr.mxu0 0.0
    %2281 = vmatpush1.msra.mxu0 0.0
    %2282 = vmatprep.subr.mxu0 0.0
    %2283 = vmatpush1.msra.mxu0 0.0
    %2284 = vmatprep.mubr.f32.mxu0 0.0
    %2285 = vmatmul.mubr.f32.gmra.mrb[0].mxu0 %v2218
    %v2286 = vpop.f32.mrb[0].mxu0
    %v2287 = vadd.f32 %v2216, %v2286
    %v2288 = vpop.f32.mrb[0].mxu0
    %2289 = vdwg.mxu0
    %v2290 = vmul.f32 %v2287, 2.0
    %v2291 = vxor.u32 %v2290, 2147483648
    %v2292 = vmul.f32 %v2291, 1.442695
    %v2293 = vpow.pop %v2292
    %v2294 = vadd.f32 %v2293, 1.0
    %v2295 = vrcp.pop %v2294
    %v2296 = vmul.f32 1.0, %v2295
    %v2297 = vsub.f32 1.0, %v2296
    %v2298 = vmul.f32 %v2297, %v511
    %2299 = vrot.lane.b32.xlu0 %v2205, 16
    %v2300 = vpop.permute.xlu0 %2299
    %v2302 = vmul.f32 %v2296, %v2300
    %v2303 = vadd.f32 %v2298, %v2302
    %2305 = vrot.lane.b32.xlu0 %v2303, 112
    %v2306 = vpop.permute.xlu0 %2305
    %v2307 = vsel %vm429, %v2306, 0
    %2309 = vmatprep.subr.mxu0 0.0
    %2310 = vmatpush1.msra.mxu0 %v420
    %2311 = vmatprep.subr.mxu0 0.0
    %2312 = vmatpush1.msra.mxu0 %v421
    %2313 = vmatprep.subr.mxu0 0.0
    %2314 = vmatpush1.msra.mxu0 0.0
    %2315 = vmatprep.subr.mxu0 0.0
    %2316 = vmatpush1.msra.mxu0 0.0
    %2317 = vmatprep.subr.mxu0 0.0
    %2318 = vmatpush1.msra.mxu0 0.0
    %2319 = vmatprep.subr.mxu0 0.0
    %2320 = vmatpush1.msra.mxu0 0.0
    %2321 = vmatprep.subr.mxu0 0.0
    %2322 = vmatpush1.msra.mxu0 0.0
    %2323 = vmatprep.subr.mxu0 0.0
    %2324 = vmatpush1.msra.mxu0 0.0
    %2325 = vmatprep.subr.mxu0 0.0
    %2326 = vmatpush1.msra.mxu0 0.0
    %2327 = vmatprep.subr.mxu0 0.0
    %2328 = vmatpush1.msra.mxu0 0.0
    %2329 = vmatprep.subr.mxu0 0.0
    %2330 = vmatpush1.msra.mxu0 0.0
    %2331 = vmatprep.subr.mxu0 0.0
    %2332 = vmatpush1.msra.mxu0 0.0
    %2333 = vmatprep.subr.mxu0 0.0
    %2334 = vmatpush1.msra.mxu0 0.0
    %2335 = vmatprep.subr.mxu0 0.0
    %2336 = vmatpush1.msra.mxu0 0.0
    %2337 = vmatprep.subr.mxu0 0.0
    %2338 = vmatpush1.msra.mxu0 0.0
    %2339 = vmatprep.subr.mxu0 0.0
    %2340 = vmatpush1.msra.mxu0 0.0
    %2341 = vmatprep.subr.mxu0 0.0
    %2342 = vmatpush1.msra.mxu0 0.0
    %2343 = vmatprep.subr.mxu0 0.0
    %2344 = vmatpush1.msra.mxu0 0.0
    %2345 = vmatprep.subr.mxu0 0.0
    %2346 = vmatpush1.msra.mxu0 0.0
    %2347 = vmatprep.subr.mxu0 0.0
    %2348 = vmatpush1.msra.mxu0 0.0
    %2349 = vmatprep.subr.mxu0 0.0
    %2350 = vmatpush1.msra.mxu0 0.0
    %2351 = vmatprep.subr.mxu0 0.0
    %2352 = vmatpush1.msra.mxu0 0.0
    %2353 = vmatprep.subr.mxu0 0.0
    %2354 = vmatpush1.msra.mxu0 0.0
    %2355 = vmatprep.subr.mxu0 0.0
    %2356 = vmatpush1.msra.mxu0 0.0
    %2357 = vmatprep.subr.mxu0 0.0
    %2358 = vmatpush1.msra.mxu0 0.0
    %2359 = vmatprep.subr.mxu0 0.0
    %2360 = vmatpush1.msra.mxu0 0.0
    %2361 = vmatprep.subr.mxu0 0.0
    %2362 = vmatpush1.msra.mxu0 0.0
    %2363 = vmatprep.subr.mxu0 0.0
    %2364 = vmatpush1.msra.mxu0 0.0
    %2365 = vmatprep.subr.mxu0 0.0
    %2366 = vmatpush1.msra.mxu0 0.0
    %2367 = vmatprep.subr.mxu0 0.0
    %2368 = vmatpush1.msra.mxu0 0.0
    %2369 = vmatprep.subr.mxu0 0.0
    %2370 = vmatpush1.msra.mxu0 0.0
    %2371 = vmatprep.subr.mxu0 0.0
    %2372 = vmatpush1.msra.mxu0 0.0
    %2373 = vmatprep.mubr.f32.mxu0 0.0
    %2374 = vmatmul.mubr.f32.gmra.mrb[0].mxu0 %v2307
    %v2375 = vpop.f32.mrb[0].mxu0
    %v2376 = vadd.f32 0.0, %v2375
    %v2377 = vpop.f32.mrb[0].mxu0
    %2378 = vdwg.mxu0
    %v2379 = vmul.f32 %v2214, %v2376
    %2381 = vrot.lane.b32.xlu0 %v2376, 96
    %v2382 = vpop.permute.xlu0 %2381
    %v2385 = vsel %vm248, %v2379, 0
    %2387 = vmatprep.subr.mxu0 0.0
    %2388 = vmatpush1.msra.mxu0 %v422
    %2389 = vmatprep.subr.mxu0 0.0
    %2390 = vmatpush1.msra.mxu0 %v423
    %2391 = vmatprep.subr.mxu0 0.0
    %2392 = vmatpush1.msra.mxu0 %v424
    %2393 = vmatprep.subr.mxu0 0.0
    %2394 = vmatpush1.msra.mxu0 %v425
    %2395 = vmatprep.subr.mxu0 0.0
    %2396 = vmatpush1.msra.mxu0 0.0
    %2397 = vmatprep.subr.mxu0 0.0
    %2398 = vmatpush1.msra.mxu0 0.0
    %2399 = vmatprep.subr.mxu0 0.0
    %2400 = vmatpush1.msra.mxu0 0.0
    %2401 = vmatprep.subr.mxu0 0.0
    %2402 = vmatpush1.msra.mxu0 0.0
    %2403 = vmatprep.subr.mxu0 0.0
    %2404 = vmatpush1.msra.mxu0 0.0
    %2405 = vmatprep.subr.mxu0 0.0
    %2406 = vmatpush1.msra.mxu0 0.0
    %2407 = vmatprep.subr.mxu0 0.0
    %2408 = vmatpush1.msra.mxu0 0.0
    %2409 = vmatprep.subr.mxu0 0.0
    %2410 = vmatpush1.msra.mxu0 0.0
    %2411 = vmatprep.subr.mxu0 0.0
    %2412 = vmatpush1.msra.mxu0 0.0
    %2413 = vmatprep.subr.mxu0 0.0
    %2414 = vmatpush1.msra.mxu0 0.0
    %2415 = vmatprep.subr.mxu0 0.0
    %2416 = vmatpush1.msra.mxu0 0.0
    %2417 = vmatprep.subr.mxu0 0.0
    %2418 = vmatpush1.msra.mxu0 0.0
    %2419 = vmatprep.subr.mxu0 0.0
    %2420 = vmatpush1.msra.mxu0 0.0
    %2421 = vmatprep.subr.mxu0 0.0
    %2422 = vmatpush1.msra.mxu0 0.0
    %2423 = vmatprep.subr.mxu0 0.0
    %2424 = vmatpush1.msra.mxu0 0.0
    %2425 = vmatprep.subr.mxu0 0.0
    %2426 = vmatpush1.msra.mxu0 0.0
    %2427 = vmatprep.subr.mxu0 0.0
    %2428 = vmatpush1.msra.mxu0 0.0
    %2429 = vmatprep.subr.mxu0 0.0
    %2430 = vmatpush1.msra.mxu0 0.0
    %2431 = vmatprep.subr.mxu0 0.0
    %2432 = vmatpush1.msra.mxu0 0.0
    %2433 = vmatprep.subr.mxu0 0.0
    %2434 = vmatpush1.msra.mxu0 0.0
    %2435 = vmatprep.subr.mxu0 0.0
    %2436 = vmatpush1.msra.mxu0 0.0
    %2437 = vmatprep.subr.mxu0 0.0
    %2438 = vmatpush1.msra.mxu0 0.0
    %2439 = vmatprep.subr.mxu0 0.0
    %2440 = vmatpush1.msra.mxu0 0.0
    %2441 = vmatprep.subr.mxu0 0.0
    %2442 = vmatpush1.msra.mxu0 0.0
    %2443 = vmatprep.subr.mxu0 0.0
    %2444 = vmatpush1.msra.mxu0 0.0
    %2445 = vmatprep.subr.mxu0 0.0
    %2446 = vmatpush1.msra.mxu0 0.0
    %2447 = vmatprep.subr.mxu0 0.0
    %2448 = vmatpush1.msra.mxu0 0.0
    %2449 = vmatprep.subr.mxu0 0.0
    %2450 = vmatpush1.msra.mxu0 0.0
    %2451 = vmatprep.mubr.f32.mxu0 0.0
    %2452 = vmatmul.mubr.f32.gmra.mrb[0].mxu0 %v2385
    %v2453 = vpop.f32.mrb[0].mxu0
    %v2454 = vadd.f32 %v2382, %v2453
    %v2455 = vpop.f32.mrb[0].mxu0
    %2456 = vdwg.mxu0
    %v2457 = vmax.f32 %v2454, 0.0
    %v2458 = vmul.f32 %v2297, %v2205
    %v2459 = vmul.f32 %v2296, %v2457
    %v2460 = vadd.f32 %v2458, %v2459
    %vm2461 = vcmp.eq.s32.totalorder %v426, 8
    %v2462 = vsel %vm2461, 1, 0
    %2463 = vset.pattern.permute.xlu0 0
    %2464 = vperm.xlu0 %2463, %v2462
    %v2465 = vpop.permute.xlu0 %2464
    %vm2466 = vcmp.eq.s32.totalorder %v2465, 1
    %v2467 = vsel %vm2466, %v2460, %v2212
    %v2468 = vmax.f32 %v2467, 0.0
    %v2469 = vmin.f32 %v2468, 1.0
    %v2470 = vld [vmem:[%s12] sm:$0xff]
    %v2471 = vld [vmem:[%s12 + $0x8] sm:$0xff]
    %v2472 = vld [vmem:[%s13] sm:$0x1]
    %v2474 = vlaneseq
    %v2475 = vshrl.u32 %v2474, 7
    %v2476 = vsub.s32 0, %v2475
    %v2477 = vrot.slane %v2472, %v2476
    %v2480 = vsel %vm429, %v2469, 0
    %2482 = vmatprep.subr.mxu0 0.0
    %2483 = vmatpush1.msra.mxu0 %v2470
    %2484 = vmatprep.subr.mxu0 0.0
    %2485 = vmatpush1.msra.mxu0 %v2471
    %2486 = vmatprep.subr.mxu0 0.0
    %2487 = vmatpush1.msra.mxu0 0.0
    %2488 = vmatprep.subr.mxu0 0.0
    %2489 = vmatpush1.msra.mxu0 0.0
    %2490 = vmatprep.subr.mxu0 0.0
    %2491 = vmatpush1.msra.mxu0 0.0
    %2492 = vmatprep.subr.mxu0 0.0
    %2493 = vmatpush1.msra.mxu0 0.0
    %2494 = vmatprep.subr.mxu0 0.0
    %2495 = vmatpush1.msra.mxu0 0.0
    %2496 = vmatprep.subr.mxu0 0.0
    %2497 = vmatpush1.msra.mxu0 0.0
    %2498 = vmatprep.subr.mxu0 0.0
    %2499 = vmatpush1.msra.mxu0 0.0
    %2500 = vmatprep.subr.mxu0 0.0
    %2501 = vmatpush1.msra.mxu0 0.0
    %2502 = vmatprep.subr.mxu0 0.0
    %2503 = vmatpush1.msra.mxu0 0.0
    %2504 = vmatprep.subr.mxu0 0.0
    %2505 = vmatpush1.msra.mxu0 0.0
    %2506 = vmatprep.subr.mxu0 0.0
    %2507 = vmatpush1.msra.mxu0 0.0
    %2508 = vmatprep.subr.mxu0 0.0
    %2509 = vmatpush1.msra.mxu0 0.0
    %2510 = vmatprep.subr.mxu0 0.0
    %2511 = vmatpush1.msra.mxu0 0.0
    %2512 = vmatprep.subr.mxu0 0.0
    %2513 = vmatpush1.msra.mxu0 0.0
    %2514 = vmatprep.subr.mxu0 0.0
    %2515 = vmatpush1.msra.mxu0 0.0
    %2516 = vmatprep.subr.mxu0 0.0
    %2517 = vmatpush1.msra.mxu0 0.0
    %2518 = vmatprep.subr.mxu0 0.0
    %2519 = vmatpush1.msra.mxu0 0.0
    %2520 = vmatprep.subr.mxu0 0.0
    %2521 = vmatpush1.msra.mxu0 0.0
    %2522 = vmatprep.subr.mxu0 0.0
    %2523 = vmatpush1.msra.mxu0 0.0
    %2524 = vmatprep.subr.mxu0 0.0
    %2525 = vmatpush1.msra.mxu0 0.0
    %2526 = vmatprep.subr.mxu0 0.0
    %2527 = vmatpush1.msra.mxu0 0.0
    %2528 = vmatprep.subr.mxu0 0.0
    %2529 = vmatpush1.msra.mxu0 0.0
    %2530 = vmatprep.subr.mxu0 0.0
    %2531 = vmatpush1.msra.mxu0 0.0
    %2532 = vmatprep.subr.mxu0 0.0
    %2533 = vmatpush1.msra.mxu0 0.0
    %2534 = vmatprep.subr.mxu0 0.0
    %2535 = vmatpush1.msra.mxu0 0.0
    %2536 = vmatprep.subr.mxu0 0.0
    %2537 = vmatpush1.msra.mxu0 0.0
    %2538 = vmatprep.subr.mxu0 0.0
    %2539 = vmatpush1.msra.mxu0 0.0
    %2540 = vmatprep.subr.mxu0 0.0
    %2541 = vmatpush1.msra.mxu0 0.0
    %2542 = vmatprep.subr.mxu0 0.0
    %2543 = vmatpush1.msra.mxu0 0.0
    %2544 = vmatprep.subr.mxu0 0.0
    %2545 = vmatpush1.msra.mxu0 0.0
    %2546 = vmatprep.mubr.f32.mxu0 0.0
    %2547 = vmatmul.mubr.f32.gmra.mrb[0].mxu0 %v2480
    %v2548 = vpop.f32.mrb[0].mxu0
    %v2549 = vadd.f32 %v2477, %v2548
    %v2550 = vpop.f32.mrb[0].mxu0
    %2551 = vdwg.mxu0
    %v2552 = vmax.f32 %v2549, 0.0
    %v2553 = vmin.f32 %v2552, 1.0
    %vm2554 = vcmask 39936
    %2555 = vst.msk [vmem:[#allocation4] sm:$0xff] %vm2554, %v2553
    // Predicated region
    $region58: #{tpu_custom_call.1} parent=1 // pred_check
      _
    $region59: #{tpu_custom_call.1} parent=1 // pred_check_branch
      %2557 = sbr.rel (0) target = $region61
    $region60: #{tpu_custom_call.1} parent=1 // pred_region
      %s2559 = ssub.s32 128, 128
      %2560 = vsyncadd [#allocation5], %s2559
      %s2562 = sshll.u32 [#allocation4], 4
      %s2563 = int_to_ptr.vmem [resolvable:$true] %s2562
      %2565 = dma.vmem_to_hbm [thread:$0]  %s2563, 128, %s14, [#allocation5]
    $region61: #{tpu_custom_call.1} parent=1 // pred_fallthru
      _
    // Predicated region
    $region62: #{tpu_custom_call.1} parent=1 // pred_check
      _
    $region63: #{tpu_custom_call.1} parent=1 // pred_check_branch
      %2567 = sbr.rel (0) target = $region65
    $region64: #{tpu_custom_call.1} parent=1 // pred_region
      %2568 = dma.done [#allocation5], 128
    $region65: #{tpu_custom_call.1} parent=1 // pred_fallthru
      _
    %2569 = vsyncpa [#allocation5], 1

</llo_original>
